<compile_context>
chip_gen: v5e
topology: v5e:2x2
jax: 0.10.0
libtpu: 0.0.40
codegen_flags: <defaults>
</compile_context>

<pallas_src>
import jax
import jax.numpy as jnp
import numpy as np
from jax.experimental import pallas as pl
from jax.experimental.pallas import tpu as pltpu

BN_EPS = 1e-5

# Conservative VMEM footprint of the single fused kernel per batch row (f32 activations,
# inputs + intermediates + outputs + a compute-dtype copy of x), used for path selection.
_FUSED_BYTES_PER_ROW = 2048


# ---------------------------------------------------------------------------
# Small helpers
# ---------------------------------------------------------------------------
def _vmem_capacity_bytes():
    try:
        return int(pltpu.get_tpu_info().vmem_capacity_bytes)
    except Exception:
        return 64 * 1024 * 1024  # conservative fallback (v7x-sized)


def _cost(flops, bytes_accessed):
    return pl.CostEstimate(flops=int(flops), transcendentals=0,
                           bytes_accessed=int(bytes_accessed))


def _fold_scale_shift(sum_v, sq_v, gamma, beta, inv_n):
    """Fold per-feature sum / sum-of-squares into BN scale/shift (f32, [1, D])."""
    mean = sum_v * inv_n
    var = jnp.maximum(sq_v * inv_n - mean * mean, 0.0)   # clamp cancellation
    scale = gamma * jax.lax.rsqrt(var + BN_EPS)           # rsqrt -> EUP slot
    shift = beta - mean * scale
    return scale, shift


def _bn_relu_train(h, gamma, beta):
    """Fused training-mode BatchNorm1d + ReLU over a full-batch block (f32)."""
    inv_n = 1.0 / float(h.shape[0])
    s = jnp.sum(h, axis=0, keepdims=True)
    q = jnp.sum(h * h, axis=0, keepdims=True)
    scale, shift = _fold_scale_shift(s, q, gamma, beta, inv_n)
    return jnp.maximum(h * scale + shift, 0.0)


# ---------------------------------------------------------------------------
# Path A: whole batch resident in VMEM (single fused kernel)
# ---------------------------------------------------------------------------
def _make_fused_kernel(cdt):
    def kernel(x_ref, we0_ref, eg0_ref, ebt0_ref, we1_ref, eb1_ref,
               wd0_ref, dg0_ref, dbt0_ref, wd1_ref, dg1_ref, dbt1_ref,
               xhat_ref, latent_ref):
        x = x_ref[...].astype(cdt)                       # cast in-kernel, not in wrapper
        h1 = jnp.dot(x, we0_ref[...], preferred_element_type=jnp.float32)
        a1 = _bn_relu_train(h1, eg0_ref[...], ebt0_ref[...])
        latent = jnp.dot(a1.astype(cdt), we1_ref[...],
                         preferred_element_type=jnp.float32) + eb1_ref[...]
        latent_ref[...] = latent.astype(latent_ref.dtype)

        d1 = jnp.dot(latent.astype(cdt), wd0_ref[...],
                     preferred_element_type=jnp.float32)
        a2 = _bn_relu_train(d1, dg0_ref[...], dbt0_ref[...])
        d2 = jnp.dot(a2.astype(cdt), wd1_ref[...],
                     preferred_element_type=jnp.float32)
        xhat_ref[...] = _bn_relu_train(d2, dg1_ref[...], dbt1_ref[...]).astype(xhat_ref.dtype)

    return kernel


def _forward_single_block(x, params, compute_dtype):
    cdt = compute_dtype
    n, d0 = x.shape
    d1 = params["enc_w0"].shape[1]
    d2 = params["enc_w1"].shape[1]
    isz = jnp.dtype(cdt).itemsize

    operands = (
        x,                                                # NOT pre-cast (see review)
        params["enc_w0"].astype(cdt), params["enc_bn0_g"], params["enc_bn0_b"],
        params["enc_w1"].astype(cdt), params["enc_b1"],
        params["dec_w0"].astype(cdt), params["dec_bn0_g"], params["dec_bn0_b"],
        params["dec_w1"].astype(cdt), params["dec_bn1_g"], params["dec_bn1_b"],
    )
    vmem = pl.BlockSpec(memory_space=pltpu.MemorySpace.VMEM)

    flops = 2 * n * (d0 * d1 + d1 * d2 + d2 * d1 + d1 * d0)
    bytes_acc = n * (d0 * 4 + d0 * 4 + d2 * 4) + (2 * d0 * d1 + 2 * d1 * d2) * isz

    # Generation-aware scoped-VMEM limit (v5e default is only 16 MiB, v7x physical 64 MiB).
    cap = _vmem_capacity_bytes()
    needed = n * _FUSED_BYTES_PER_ROW + (4 << 20)
    vmem_limit = int(min(0.75 * cap, max(needed, 32 << 20)))

    xhat, latent = pl.pallas_call(
        _make_fused_kernel(cdt),
        out_shape=(
            jax.ShapeDtypeStruct((n, d0), jnp.float32),
            jax.ShapeDtypeStruct((n, d2), jnp.float32),
        ),
        in_specs=[vmem] * len(operands),
        out_specs=(vmem, vmem),
        compiler_params=pltpu.CompilerParams(vmem_limit_bytes=vmem_limit),
        cost_estimate=_cost(flops, bytes_acc),
    )(*operands)
    return xhat, latent


# ---------------------------------------------------------------------------
# Path B: batch-tiled, BlockSpec-pipelined 3-pass pipeline (+ tiny XLA epilogue)
# ---------------------------------------------------------------------------
def _make_stats1_kernel(cdt, block_rows, n_true, needs_mask):
    """Pass 1: accumulate per-feature sum / sum-of-squares of h1 = x @ We0."""
    def kernel(x_ref, w_ref, sum_ref, sq_ref):
        i = pl.program_id(0)

        @pl.when(i == 0)
        def _():
            sum_ref[...] = jnp.zeros_like(sum_ref)
            sq_ref[...] = jnp.zeros_like(sq_ref)

        h = jnp.dot(x_ref[...].astype(cdt), w_ref[...],
                    preferred_element_type=jnp.float32)
        if needs_mask:
            # Last tile is partial: mask garbage rows out (where is NaN-safe).
            rows = (jax.lax.broadcasted_iota(jnp.int32, (block_rows, 1), 0)
                    + i * block_rows)
            h = jnp.where(rows < n_true, h, 0.0)
        sum_ref[...] += jnp.sum(h, axis=0, keepdims=True)
        sq_ref[...] += jnp.sum(h * h, axis=0, keepdims=True)

    return kernel


def _make_pass2_kernel(cdt, block_rows, n_true, needs_mask):
    """Pass 2: apply BN1+ReLU, write latent, accumulate stats of d1 = latent @ Wd0."""
    inv_n = 1.0 / float(n_true)

    def kernel(x_ref, we0_ref, h1s_ref, h1q_ref, g1_ref, b1_ref,
               we1_ref, eb1_ref, wd0_ref,
               latent_ref, sum_ref, sq_ref):
        i = pl.program_id(0)

        @pl.when(i == 0)
        def _():
            sum_ref[...] = jnp.zeros_like(sum_ref)
            sq_ref[...] = jnp.zeros_like(sq_ref)

        # Fold BN1 stats to scale/shift in-kernel (tiny [1,D] VPU work per tile).
        s1, t1 = _fold_scale_shift(h1s_ref[...], h1q_ref[...],
                                   g1_ref[...], b1_ref[...], inv_n)

        x = x_ref[...].astype(cdt)
        h1 = jnp.dot(x, we0_ref[...], preferred_element_type=jnp.float32)
        a1 = jnp.maximum(h1 * s1 + t1, 0.0)
        latent = jnp.dot(a1.astype(cdt), we1_ref[...],
                         preferred_element_type=jnp.float32) + eb1_ref[...]
        latent_ref[...] = latent.astype(latent_ref.dtype)   # partial-block writeback clipped

        d1 = jnp.dot(latent.astype(cdt), wd0_ref[...],
                     preferred_element_type=jnp.float32)
        if needs_mask:
            rows = (jax.lax.broadcasted_iota(jnp.int32, (block_rows, 1), 0)
                    + i * block_rows)
            d1 = jnp.where(rows < n_true, d1, 0.0)
        sum_ref[...] += jnp.sum(d1, axis=0, keepdims=True)
        sq_ref[...] += jnp.sum(d1 * d1, axis=0, keepdims=True)

    return kernel


def _make_pass3_kernel(cdt, block_rows, n_true, needs_mask):
    """Pass 3: apply BN2+ReLU, compute + write d2 (pre-BN), accumulate stats of d2."""
    inv_n = 1.0 / float(n_true)

    def kernel(lat_ref, wd0_ref, d1s_ref, d1q_ref, g2_ref, b2_ref, wd1_ref,
               d2_ref, sum_ref, sq_ref):
        i = pl.program_id(0)

        @pl.when(i == 0)
        def _():
            sum_ref[...] = jnp.zeros_like(sum_ref)
            sq_ref[...] = jnp.zeros_like(sq_ref)

        s2, t2 = _fold_scale_shift(d1s_ref[...], d1q_ref[...],
                                   g2_ref[...], b2_ref[...], inv_n)

        lat = lat_ref[...].astype(cdt)
        d1 = jnp.dot(lat, wd0_ref[...], preferred_element_type=jnp.float32)
        a2 = jnp.maximum(d1 * s2 + t2, 0.0)
        d2 = jnp.dot(a2.astype(cdt), wd1_ref[...], preferred_element_type=jnp.float32)
        d2_ref[...] = d2                                    # pre-BN decoder output (f32)

        if needs_mask:
            rows = (jax.lax.broadcasted_iota(jnp.int32, (block_rows, 1), 0)
                    + i * block_rows)
            d2 = jnp.where(rows < n_true, d2, 0.0)
        sum_ref[...] += jnp.sum(d2, axis=0, keepdims=True)
        sq_ref[...] += jnp.sum(d2 * d2, axis=0, keepdims=True)

    return kernel


def _forward_tiled(x, params, block_rows, compute_dtype):
    cdt = compute_dtype
    isz = jnp.dtype(cdt).itemsize
    n, d0 = x.shape
    d1 = params["enc_w0"].shape[1]
    d2 = params["enc_w1"].shape[1]

    assert block_rows % 16 == 0, "block_rows must be a multiple of 16"
    nt = pl.cdiv(n, block_rows)
    needs_mask = (n % block_rows) != 0          # partial last tile -> mask stats

    we0 = params["enc_w0"].astype(cdt)
    we1 = params["enc_w1"].astype(cdt)
    wd0 = params["dec_w0"].astype(cdt)
    wd1 = params["dec_w1"].astype(cdt)
    eb1 = params["enc_b1"].astype(jnp.float32)

    x_spec = pl.BlockSpec((block_rows, d0), lambda i: (i, 0))
    lat_spec = pl.BlockSpec((block_rows, d2), lambda i: (i, 0))
    d2_spec = pl.BlockSpec((block_rows, d0), lambda i: (i, 0))

    def const_spec(shape):
        return pl.BlockSpec(shape, lambda i: (0, 0))

    def stat_spec(d):
        return pl.BlockSpec((1, d), lambda i: (0, 0))       # resident accumulator

    arb = pltpu.CompilerParams(dimension_semantics=("arbitrary",))

    # --- pass 1: stats of h1 = x @ We0 ------------------------------------
    h1_sum, h1_sq = pl.pallas_call(
        _make_stats1_kernel(cdt, block_rows, n, needs_mask),
        grid=(nt,),
        in_specs=[x_spec, const_spec((d0, d1))],
        out_specs=(stat_spec(d1), stat_spec(d1)),
        out_shape=(jax.ShapeDtypeStruct((1, d1), jnp.float32),
                   jax.ShapeDtypeStruct((1, d1), jnp.float32)),
        compiler_params=arb,
        cost_estimate=_cost(2 * n * d0 * d1, n * d0 * 4 + d0 * d1 * isz),
    )(x, we0)

    # --- pass 2: latent out + stats of d1 = latent @ Wd0 -------------------
    latent, d1_sum, d1_sq = pl.pallas_call(
        _make_pass2_kernel(cdt, block_rows, n, needs_mask),
        grid=(nt,),
        in_specs=[x_spec, const_spec((d0, d1)),
                  const_spec((1, d1)), const_spec((1, d1)),
                  const_spec((1, d1)), const_spec((1, d1)),
                  const_spec((d1, d2)), const_spec((1, d2)), const_spec((d2, d1))],
        out_specs=(lat_spec, stat_spec(d1), stat_spec(d1)),
        out_shape=(jax.ShapeDtypeStruct((n, d2), jnp.float32),
                   jax.ShapeDtypeStruct((1, d1), jnp.float32),
                   jax.ShapeDtypeStruct((1, d1), jnp.float32)),
        compiler_params=arb,
        cost_estimate=_cost(2 * n * (d0 * d1 + d1 * d2 + d2 * d1),
                            n * (d0 * 4 + d2 * 4)),
    )(x, we0, h1_sum, h1_sq, params["enc_bn0_g"], params["enc_bn0_b"],
      we1, eb1, wd0)

    # --- pass 3: write d2 (pre-BN) + stats of d2 ---------------------------
    d2_raw, d2_sum, d2_sq = pl.pallas_call(
        _make_pass3_kernel(cdt, block_rows, n, needs_mask),
        grid=(nt,),
        in_specs=[lat_spec, const_spec((d2, d1)),
                  const_spec((1, d1)), const_spec((1, d1)),
                  const_spec((1, d1)), const_spec((1, d1)),
                  const_spec((d1, d0))],
        out_specs=(d2_spec, stat_spec(d0), stat_spec(d0)),
        out_shape=(jax.ShapeDtypeStruct((n, d0), jnp.float32),
                   jax.ShapeDtypeStruct((1, d0), jnp.float32),
                   jax.ShapeDtypeStruct((1, d0), jnp.float32)),
        compiler_params=arb,
        cost_estimate=_cost(2 * n * (d2 * d1 + d1 * d0),
                            n * (d2 * 4 + d0 * 4)),
    )(latent, wd0, d1_sum, d1_sq, params["dec_bn0_g"], params["dec_bn0_b"], wd1)

    # --- epilogue: final BN + ReLU (tiny elementwise, fuses under jit) -----
    s3, t3 = _fold_scale_shift(d2_sum, d2_sq,
                               params["dec_bn1_g"], params["dec_bn1_b"], 1.0 / float(n))
    x_hat = jnp.maximum(d2_raw * s3 + t3, 0.0)
    return x_hat, latent


# ---------------------------------------------------------------------------
# Public forward
# ---------------------------------------------------------------------------
def autoencoder_forward(x, params, *, block_rows=2048, compute_dtype=jnp.float32,
                        max_single_block_rows=None):
    """Forward pass of the Autoencoder. Returns (x_hat, latent).

    block_rows: batch-tile size for the tiled path (keep 2048-8192 on all generations).
    compute_dtype: MXU input dtype (jnp.bfloat16 optional on v6e/v7x); BN stats stay f32.
    max_single_block_rows: override the VMEM-derived single-fused-kernel batch ceiling.
    """
    n = x.shape[0]
    if max_single_block_rows is None:
        cap = _vmem_capacity_bytes()
        budget = 0.7 * cap - (4 << 20)
        max_single_block_rows = max(int(budget // _FUSED_BYTES_PER_ROW), 1024)
    if n <= max_single_block_rows:
        return _forward_single_block(x, params, compute_dtype)
    return _forward_tiled(x, params, block_rows, compute_dtype)


# ---------------------------------------------------------------------------
# Params + pure-JAX reference (full PyTorch train-mode semantics, incl. all biases)
# ---------------------------------------------------------------------------
def init_params(key, encoder_dim):
    """Deterministic init. Linear weights stored pre-transposed as [in, out]."""
    dims_enc = encoder_dim
    dims_dec = list(reversed(encoder_dim))
    keys = jax.random.split(key, 8)
    p = {}
    p["enc_w0"] = 0.1 * jax.random.normal(keys[0], (dims_enc[0], dims_enc[1]), jnp.float32)
    p["enc_b0"] = 0.01 * jax.random.normal(keys[1], (1, dims_enc[1]), jnp.float32)
    p["enc_bn0_g"] = jnp.ones((1, dims_enc[1]), jnp.float32)
    p["enc_bn0_b"] = jnp.zeros((1, dims_enc[1]), jnp.float32)
    p["enc_w1"] = 0.1 * jax.random.normal(keys[2], (dims_enc[1], dims_enc[2]), jnp.float32)
    p["enc_b1"] = 0.01 * jax.random.normal(keys[3], (1, dims_enc[2]), jnp.float32)
    p["dec_w0"] = 0.1 * jax.random.normal(keys[4], (dims_dec[0], dims_dec[1]), jnp.float32)
    p["dec_b0"] = 0.01 * jax.random.normal(keys[5], (1, dims_dec[1]), jnp.float32)
    p["dec_bn0_g"] = jnp.ones((1, dims_dec[1]), jnp.float32)
    p["dec_bn0_b"] = jnp.zeros((1, dims_dec[1]), jnp.float32)
    p["dec_w1"] = 0.1 * jax.random.normal(keys[6], (dims_dec[1], dims_dec[2]), jnp.float32)
    p["dec_b1"] = 0.01 * jax.random.normal(keys[7], (1, dims_dec[2]), jnp.float32)
    p["dec_bn1_g"] = jnp.ones((1, dims_dec[2]), jnp.float32)
    p["dec_bn1_b"] = jnp.zeros((1, dims_dec[2]), jnp.float32)
    return p


def reference_forward(x, p, compute_dtype=jnp.float32):
    """Pure-JAX reference mirroring PyTorch train-mode forward (keeps ALL biases)."""
    hp = jax.lax.Precision.HIGHEST

    def mm(a, b):
        return jnp.dot(a.astype(compute_dtype), b.astype(compute_dtype),
                       precision=hp, preferred_element_type=jnp.float32)

    def bn_relu(h, g, b_):
        m = jnp.mean(h, axis=0, keepdims=True)
        v = jnp.mean((h - m) ** 2, axis=0, keepdims=True)
        return jnp.maximum((h - m) / jnp.sqrt(v + BN_EPS) * g + b_, 0.0)

    h = mm(x, p["enc_w0"]) + p["enc_b0"]
    h = bn_relu(h, p["enc_bn0_g"], p["enc_bn0_b"])
    latent = mm(h, p["enc_w1"]) + p["enc_b1"]
    d = mm(latent, p["dec_w0"]) + p["dec_b0"]
    d = bn_relu(d, p["dec_bn0_g"], p["dec_bn0_b"])
    d = mm(d, p["dec_w1"]) + p["dec_b1"]
    d = bn_relu(d, p["dec_bn1_g"], p["dec_bn1_b"])
    return d, latent


if __name__ == "__main__":
    encoder_dim = [64, 32, 16]
    key = jax.random.PRNGKey(0)
    kx1, kx2, kp = jax.random.split(key, 3)
    params = init_params(kp, encoder_dim)

    fwd = jax.jit(autoencoder_forward,
                  static_argnames=("block_rows", "compute_dtype", "max_single_block_rows"))

    # 1) Single fused kernel path (whole batch resident in VMEM, one pallas_call).
    n1 = 512
    x1 = jax.random.normal(kx1, (n1, encoder_dim[0]), jnp.float32)
    xh1, lat1 = fwd(x1, params)
    jax.block_until_ready((xh1, lat1))
    xh1_r, lat1_r = reference_forward(x1, params)
    np.testing.assert_allclose(np.asarray(xh1), np.asarray(xh1_r), rtol=2e-4, atol=2e-4)
    np.testing.assert_allclose(np.asarray(lat1), np.asarray(lat1_r), rtol=2e-4, atol=2e-4)

    # 2) Tiled 3-pass path with a partial last tile (600 = 2*256 + 88), forced by
    #    zeroing the single-block ceiling. Exercises cross-tile BN stats + row masking,
    #    no padding / output slicing anywhere.
    n2 = 600
    x2 = jax.random.normal(kx2, (n2, encoder_dim[0]), jnp.float32)
    xh2, lat2 = fwd(x2, params, block_rows=256, max_single_block_rows=0)
    jax.block_until_ready((xh2, lat2))
    xh2_r, lat2_r = reference_forward(x2, params)
    np.testing.assert_allclose(np.asarray(xh2), np.asarray(xh2_r), rtol=2e-4, atol=2e-4)
    np.testing.assert_allclose(np.asarray(lat2), np.asarray(lat2_r), rtol=2e-4, atol=2e-4)

    # 3) bf16 MXU-input variant on the tiled path (in-kernel cast; BN stats stay f32),
    #    compared against a bf16-cast reference (same rounding of matmul inputs).
    xh3, lat3 = fwd(x2, params, block_rows=256, max_single_block_rows=0,
                    compute_dtype=jnp.bfloat16)
    jax.block_until_ready((xh3, lat3))
    xh3_r, lat3_r = reference_forward(x2, params, compute_dtype=jnp.bfloat16)
    np.testing.assert_allclose(np.asarray(xh3), np.asarray(xh3_r), rtol=1e-2, atol=1e-2)
    np.testing.assert_allclose(np.asarray(lat3), np.asarray(lat3_r), rtol=1e-2, atol=1e-2)

    print("KERNEL_OK")
</pallas_src>

<mosaic_0001>
module attributes {stable_mosaic.version = 11 : i64} {
  func.func @kernel(%arg0: memref<512x64xf32, #tpu.memory_space<vmem>>, %arg1: memref<64x32xf32, #tpu.memory_space<vmem>>, %arg2: memref<1x32xf32, #tpu.memory_space<vmem>>, %arg3: memref<1x32xf32, #tpu.memory_space<vmem>>, %arg4: memref<32x16xf32, #tpu.memory_space<vmem>>, %arg5: memref<1x16xf32, #tpu.memory_space<vmem>>, %arg6: memref<16x32xf32, #tpu.memory_space<vmem>>, %arg7: memref<1x32xf32, #tpu.memory_space<vmem>>, %arg8: memref<1x32xf32, #tpu.memory_space<vmem>>, %arg9: memref<32x64xf32, #tpu.memory_space<vmem>>, %arg10: memref<1x64xf32, #tpu.memory_space<vmem>>, %arg11: memref<1x64xf32, #tpu.memory_space<vmem>>, %arg12: memref<512x64xf32, #tpu.memory_space<vmem>>, %arg13: memref<512x16xf32, #tpu.memory_space<vmem>>) attributes {dimension_semantics = [], scalar_prefetch = 0 : i64, scratch_operands = 0 : i64, tpu.core_type = #tpu.core_type<tc>} {
    %c0 = arith.constant 0 : index
    %c0_0 = arith.constant 0 : index
    %0 = vector.load %arg0[%c0, %c0_0] : memref<512x64xf32, #tpu.memory_space<vmem>>, vector<512x64xf32>
    %c0_1 = arith.constant 0 : index
    %c0_2 = arith.constant 0 : index
    %1 = vector.load %arg1[%c0_1, %c0_2] : memref<64x32xf32, #tpu.memory_space<vmem>>, vector<64x32xf32>
    %cst = arith.constant dense<0.000000e+00> : vector<512x32xf32>
    %2 = tpu.matmul %0, %1, %cst {dimension_numbers = #tpu.dot_dimension_numbers<[1], [0], [0], [1], [0, 0, 1, 1], [], []>} : vector<512x64xf32>, vector<64x32xf32>, vector<512x32xf32> -> vector<512x32xf32>
    %c0_3 = arith.constant 0 : index
    %c0_4 = arith.constant 0 : index
    %3 = vector.load %arg2[%c0_3, %c0_4] : memref<1x32xf32, #tpu.memory_space<vmem>>, vector<1x32xf32>
    %c0_5 = arith.constant 0 : index
    %c0_6 = arith.constant 0 : index
    %4 = vector.load %arg3[%c0_5, %c0_6] : memref<1x32xf32, #tpu.memory_space<vmem>>, vector<1x32xf32>
    %cst_7 = arith.constant dense<0.000000e+00> : vector<32xf32>
    %5 = vector.multi_reduction <add>, %2, %cst_7 [0] : vector<512x32xf32> to vector<32xf32>
    %6 = vector.shape_cast %5 : vector<32xf32> to vector<1x32xf32>
    %7 = arith.mulf %2, %2 : vector<512x32xf32>
    %cst_8 = arith.constant dense<0.000000e+00> : vector<32xf32>
    %8 = vector.multi_reduction <add>, %7, %cst_8 [0] : vector<512x32xf32> to vector<32xf32>
    %9 = vector.shape_cast %8 : vector<32xf32> to vector<1x32xf32>
    %cst_9 = arith.constant 0.001953125 : f32
    %10 = vector.broadcast %cst_9 : f32 to vector<1x32xf32>
    %11 = arith.mulf %6, %10 : vector<1x32xf32>
    %cst_10 = arith.constant 0.001953125 : f32
    %12 = vector.broadcast %cst_10 : f32 to vector<1x32xf32>
    %13 = arith.mulf %9, %12 : vector<1x32xf32>
    %14 = arith.mulf %11, %11 : vector<1x32xf32>
    %15 = arith.subf %13, %14 : vector<1x32xf32>
    %cst_11 = arith.constant 0.000000e+00 : f32
    %16 = vector.broadcast %cst_11 : f32 to vector<1x32xf32>
    %17 = arith.maximumf %15, %16 : vector<1x32xf32>
    %cst_12 = arith.constant 9.99999974E-6 : f32
    %18 = vector.broadcast %cst_12 : f32 to vector<1x32xf32>
    %19 = arith.addf %17, %18 : vector<1x32xf32>
    %20 = math.rsqrt %19 : vector<1x32xf32>
    %21 = arith.mulf %3, %20 : vector<1x32xf32>
    %22 = arith.mulf %11, %21 : vector<1x32xf32>
    %23 = arith.subf %4, %22 : vector<1x32xf32>
    %24 = vector.broadcast %21 : vector<1x32xf32> to vector<512x32xf32>
    %25 = arith.mulf %2, %24 : vector<512x32xf32>
    %26 = vector.broadcast %23 : vector<1x32xf32> to vector<512x32xf32>
    %27 = arith.addf %25, %26 : vector<512x32xf32>
    %cst_13 = arith.constant 0.000000e+00 : f32
    %28 = vector.broadcast %cst_13 : f32 to vector<512x32xf32>
    %29 = arith.maximumf %27, %28 : vector<512x32xf32>
    %c0_14 = arith.constant 0 : index
    %c0_15 = arith.constant 0 : index
    %30 = vector.load %arg4[%c0_14, %c0_15] : memref<32x16xf32, #tpu.memory_space<vmem>>, vector<32x16xf32>
    %cst_16 = arith.constant dense<0.000000e+00> : vector<512x16xf32>
    %31 = tpu.matmul %29, %30, %cst_16 {dimension_numbers = #tpu.dot_dimension_numbers<[1], [0], [0], [1], [0, 0, 1, 1], [], []>} : vector<512x32xf32>, vector<32x16xf32>, vector<512x16xf32> -> vector<512x16xf32>
    %c0_17 = arith.constant 0 : index
    %c0_18 = arith.constant 0 : index
    %32 = vector.load %arg5[%c0_17, %c0_18] : memref<1x16xf32, #tpu.memory_space<vmem>>, vector<1x16xf32>
    %33 = vector.broadcast %32 : vector<1x16xf32> to vector<512x16xf32>
    %34 = arith.addf %31, %33 : vector<512x16xf32>
    %c0_19 = arith.constant 0 : index
    %c0_20 = arith.constant 0 : index
    %35 = vector.load %arg13[%c0_19, %c0_20] : memref<512x16xf32, #tpu.memory_space<vmem>>, vector<512x16xf32>
    tpu.vector_store %arg13[%c0_19, %c0_20], %34 {strides = array<i32>} : memref<512x16xf32, #tpu.memory_space<vmem>>, vector<512x16xf32>,
    %c0_21 = arith.constant 0 : index
    %c0_22 = arith.constant 0 : index
    %36 = vector.load %arg6[%c0_21, %c0_22] : memref<16x32xf32, #tpu.memory_space<vmem>>, vector<16x32xf32>
    %cst_23 = arith.constant dense<0.000000e+00> : vector<512x32xf32>
    %37 = tpu.matmul %34, %36, %cst_23 {dimension_numbers = #tpu.dot_dimension_numbers<[1], [0], [0], [1], [0, 0, 1, 1], [], []>} : vector<512x16xf32>, vector<16x32xf32>, vector<512x32xf32> -> vector<512x32xf32>
    %c0_24 = arith.constant 0 : index
    %c0_25 = arith.constant 0 : index
    %38 = vector.load %arg7[%c0_24, %c0_25] : memref<1x32xf32, #tpu.memory_space<vmem>>, vector<1x32xf32>
    %c0_26 = arith.constant 0 : index
    %c0_27 = arith.constant 0 : index
    %39 = vector.load %arg8[%c0_26, %c0_27] : memref<1x32xf32, #tpu.memory_space<vmem>>, vector<1x32xf32>
    %cst_28 = arith.constant dense<0.000000e+00> : vector<32xf32>
    %40 = vector.multi_reduction <add>, %37, %cst_28 [0] : vector<512x32xf32> to vector<32xf32>
    %41 = vector.shape_cast %40 : vector<32xf32> to vector<1x32xf32>
    %42 = arith.mulf %37, %37 : vector<512x32xf32>
    %cst_29 = arith.constant dense<0.000000e+00> : vector<32xf32>
    %43 = vector.multi_reduction <add>, %42, %cst_29 [0] : vector<512x32xf32> to vector<32xf32>
    %44 = vector.shape_cast %43 : vector<32xf32> to vector<1x32xf32>
    %cst_30 = arith.constant 0.001953125 : f32
    %45 = vector.broadcast %cst_30 : f32 to vector<1x32xf32>
    %46 = arith.mulf %41, %45 : vector<1x32xf32>
    %cst_31 = arith.constant 0.001953125 : f32
    %47 = vector.broadcast %cst_31 : f32 to vector<1x32xf32>
    %48 = arith.mulf %44, %47 : vector<1x32xf32>
    %49 = arith.mulf %46, %46 : vector<1x32xf32>
    %50 = arith.subf %48, %49 : vector<1x32xf32>
    %cst_32 = arith.constant 0.000000e+00 : f32
    %51 = vector.broadcast %cst_32 : f32 to vector<1x32xf32>
    %52 = arith.maximumf %50, %51 : vector<1x32xf32>
    %cst_33 = arith.constant 9.99999974E-6 : f32
    %53 = vector.broadcast %cst_33 : f32 to vector<1x32xf32>
    %54 = arith.addf %52, %53 : vector<1x32xf32>
    %55 = math.rsqrt %54 : vector<1x32xf32>
    %56 = arith.mulf %38, %55 : vector<1x32xf32>
    %57 = arith.mulf %46, %56 : vector<1x32xf32>
    %58 = arith.subf %39, %57 : vector<1x32xf32>
    %59 = vector.broadcast %56 : vector<1x32xf32> to vector<512x32xf32>
    %60 = arith.mulf %37, %59 : vector<512x32xf32>
    %61 = vector.broadcast %58 : vector<1x32xf32> to vector<512x32xf32>
    %62 = arith.addf %60, %61 : vector<512x32xf32>
    %cst_34 = arith.constant 0.000000e+00 : f32
    %63 = vector.broadcast %cst_34 : f32 to vector<512x32xf32>
    %64 = arith.maximumf %62, %63 : vector<512x32xf32>
    %c0_35 = arith.constant 0 : index
    %c0_36 = arith.constant 0 : index
    %65 = vector.load %arg9[%c0_35, %c0_36] : memref<32x64xf32, #tpu.memory_space<vmem>>, vector<32x64xf32>
    %cst_37 = arith.constant dense<0.000000e+00> : vector<512x64xf32>
    %66 = tpu.matmul %64, %65, %cst_37 {dimension_numbers = #tpu.dot_dimension_numbers<[1], [0], [0], [1], [0, 0, 1, 1], [], []>} : vector<512x32xf32>, vector<32x64xf32>, vector<512x64xf32> -> vector<512x64xf32>
    %c0_38 = arith.constant 0 : index
    %c0_39 = arith.constant 0 : index
    %67 = vector.load %arg10[%c0_38, %c0_39] : memref<1x64xf32, #tpu.memory_space<vmem>>, vector<1x64xf32>
    %c0_40 = arith.constant 0 : index
    %c0_41 = arith.constant 0 : index
    %68 = vector.load %arg11[%c0_40, %c0_41] : memref<1x64xf32, #tpu.memory_space<vmem>>, vector<1x64xf32>
    %cst_42 = arith.constant dense<0.000000e+00> : vector<64xf32>
    %69 = vector.multi_reduction <add>, %66, %cst_42 [0] : vector<512x64xf32> to vector<64xf32>
    %70 = vector.shape_cast %69 : vector<64xf32> to vector<1x64xf32>
    %71 = arith.mulf %66, %66 : vector<512x64xf32>
    %cst_43 = arith.constant dense<0.000000e+00> : vector<64xf32>
    %72 = vector.multi_reduction <add>, %71, %cst_43 [0] : vector<512x64xf32> to vector<64xf32>
    %73 = vector.shape_cast %72 : vector<64xf32> to vector<1x64xf32>
    %cst_44 = arith.constant 0.001953125 : f32
    %74 = vector.broadcast %cst_44 : f32 to vector<1x64xf32>
    %75 = arith.mulf %70, %74 : vector<1x64xf32>
    %cst_45 = arith.constant 0.001953125 : f32
    %76 = vector.broadcast %cst_45 : f32 to vector<1x64xf32>
    %77 = arith.mulf %73, %76 : vector<1x64xf32>
    %78 = arith.mulf %75, %75 : vector<1x64xf32>
    %79 = arith.subf %77, %78 : vector<1x64xf32>
    %cst_46 = arith.constant 0.000000e+00 : f32
    %80 = vector.broadcast %cst_46 : f32 to vector<1x64xf32>
    %81 = arith.maximumf %79, %80 : vector<1x64xf32>
    %cst_47 = arith.constant 9.99999974E-6 : f32
    %82 = vector.broadcast %cst_47 : f32 to vector<1x64xf32>
    %83 = arith.addf %81, %82 : vector<1x64xf32>
    %84 = math.rsqrt %83 : vector<1x64xf32>
    %85 = arith.mulf %67, %84 : vector<1x64xf32>
    %86 = arith.mulf %75, %85 : vector<1x64xf32>
    %87 = arith.subf %68, %86 : vector<1x64xf32>
    %88 = vector.broadcast %85 : vector<1x64xf32> to vector<512x64xf32>
    %89 = arith.mulf %66, %88 : vector<512x64xf32>
    %90 = vector.broadcast %87 : vector<1x64xf32> to vector<512x64xf32>
    %91 = arith.addf %89, %90 : vector<512x64xf32>
    %cst_48 = arith.constant 0.000000e+00 : f32
    %92 = vector.broadcast %cst_48 : f32 to vector<512x64xf32>
    %93 = arith.maximumf %91, %92 : vector<512x64xf32>
    %c0_49 = arith.constant 0 : index
    %c0_50 = arith.constant 0 : index
    %94 = vector.load %arg12[%c0_49, %c0_50] : memref<512x64xf32, #tpu.memory_space<vmem>>, vector<512x64xf32>
    tpu.vector_store %arg12[%c0_49, %c0_50], %93 {strides = array<i32>} : memref<512x64xf32, #tpu.memory_space<vmem>>, vector<512x64xf32>,
    return
  }
}

</mosaic_0001>

<llo_original>
// kernel: autoencoder_forward.1
$region0: #{autoencoder_forward.1}
  #allocation0 [shape = 'u32[]', space=smem, size = 0x4, offset = 0x4, fixed_abs, tag = 'smem constant byte address 0x4 - core index']
  #allocation1 [shape = 'u32[72,128]{1,0:T(1,128)}', space=vmem, size = 0x9000, scoped, tag = 'internal scratch']
  %s0 = inlined_call_operand.vmem [shape: f32[512,64], index: 0, kind: input, shape index: {}]
  %s1 = inlined_call_operand.vmem [shape: f32[64,32], index: 1, kind: input, shape index: {}]
  %s2 = inlined_call_operand.vmem [shape: f32[1,32], index: 2, kind: input, shape index: {}]
  %s3 = inlined_call_operand.vmem [shape: f32[1,32], index: 3, kind: input, shape index: {}]
  %s4 = inlined_call_operand.vmem [shape: f32[32,16], index: 4, kind: input, shape index: {}]
  %s5 = inlined_call_operand.vmem [shape: f32[1,16], index: 5, kind: input, shape index: {}]
  %s6 = inlined_call_operand.vmem [shape: f32[16,32], index: 6, kind: input, shape index: {}]
  %s7 = inlined_call_operand.vmem [shape: f32[1,32], index: 7, kind: input, shape index: {}]
  %s8 = inlined_call_operand.vmem [shape: f32[1,32], index: 8, kind: input, shape index: {}]
  %s9 = inlined_call_operand.vmem [shape: f32[32,64], index: 9, kind: input, shape index: {}]
  %s10 = inlined_call_operand.vmem [shape: f32[1,64], index: 10, kind: input, shape index: {}]
  %s11 = inlined_call_operand.vmem [shape: f32[1,64], index: 11, kind: input, shape index: {}]
  %s12 = inlined_call_operand.vmem [shape: f32[512,64], index: 12, kind: output, shape index: {0}]
  %s13 = inlined_call_operand.vmem [shape: f32[512,16], index: 13, kind: output, shape index: {1}]
  %14 = xla_tuple %s12, %s13
  %s15 = sld [smem:[#allocation0]]
  $region66: #{autoencoder_forward.1} parent=0
    _
  %s17 = ssub.s32 1, %s15
  %s18 = scalar_select 0, %s17, %s15
  // Predicated region
  $region2: #{autoencoder_forward.1} parent=0 // pred_check
    _
  $region3: #{autoencoder_forward.1} parent=0 // pred_check_branch
    %20 = sbr.rel (0) target = $region5
  $region4: #{autoencoder_forward.1} parent=0 // pred_region
    _
  $region5: #{autoencoder_forward.1} parent=0 // pred_fallthru
    _
  // Predicated region
  $region6: #{autoencoder_forward.1} parent=0 // pred_check
    _
  $region7: #{autoencoder_forward.1} parent=0 // pred_check_branch
    %22 = sbr.rel (0) target = $region9
  $region8: #{autoencoder_forward.1} parent=0 // pred_region
    _
  $region9: #{autoencoder_forward.1} parent=0 // pred_fallthru
    _
  // Predicated region
  $region10: #{autoencoder_forward.1} parent=0 // pred_check
    _
  $region11: #{autoencoder_forward.1} parent=0 // pred_check_branch
    %24 = sbr.rel (0) target = $region13
  $region12: #{autoencoder_forward.1} parent=0 // pred_region
    _
  $region13: #{autoencoder_forward.1} parent=0 // pred_fallthru
    _
  // Predicated region
  $region14: #{autoencoder_forward.1} parent=0 // pred_check
    _
  $region15: #{autoencoder_forward.1} parent=0 // pred_check_branch
    %26 = sbr.rel (0) target = $region17
  $region16: #{autoencoder_forward.1} parent=0 // pred_region
    _
  $region17: #{autoencoder_forward.1} parent=0 // pred_fallthru
    _
  // Predicated region
  $region18: #{autoencoder_forward.1} parent=0 // pred_check
    _
  $region19: #{autoencoder_forward.1} parent=0 // pred_check_branch
    %28 = sbr.rel (0) target = $region21
  $region20: #{autoencoder_forward.1} parent=0 // pred_region
    _
  $region21: #{autoencoder_forward.1} parent=0 // pred_fallthru
    _
  // Predicated region
  $region22: #{autoencoder_forward.1} parent=0 // pred_check
    _
  $region23: #{autoencoder_forward.1} parent=0 // pred_check_branch
    %30 = sbr.rel (0) target = $region25
  $region24: #{autoencoder_forward.1} parent=0 // pred_region
    _
  $region25: #{autoencoder_forward.1} parent=0 // pred_fallthru
    _
  // Predicated region
  $region26: #{autoencoder_forward.1} parent=0 // pred_check
    _
  $region27: #{autoencoder_forward.1} parent=0 // pred_check_branch
    %32 = sbr.rel (0) target = $region29
  $region28: #{autoencoder_forward.1} parent=0 // pred_region
    _
  $region29: #{autoencoder_forward.1} parent=0 // pred_fallthru
    _
  // Predicated region
  $region30: #{autoencoder_forward.1} parent=0 // pred_check
    _
  $region31: #{autoencoder_forward.1} parent=0 // pred_check_branch
    %34 = sbr.rel (0) target = $region33
  $region32: #{autoencoder_forward.1} parent=0 // pred_region
    _
  $region33: #{autoencoder_forward.1} parent=0 // pred_fallthru
    _
  // Predicated region
  $region34: #{autoencoder_forward.1} parent=0 // pred_check
    _
  $region35: #{autoencoder_forward.1} parent=0 // pred_check_branch
    %36 = sbr.rel (0) target = $region37
  $region36: #{autoencoder_forward.1} parent=0 // pred_region
    _
  $region37: #{autoencoder_forward.1} parent=0 // pred_fallthru
    _
  // Predicated region
  $region38: #{autoencoder_forward.1} parent=0 // pred_check
    _
  $region39: #{autoencoder_forward.1} parent=0 // pred_check_branch
    %38 = sbr.rel (0) target = $region41
  $region40: #{autoencoder_forward.1} parent=0 // pred_region
    _
  $region41: #{autoencoder_forward.1} parent=0 // pred_fallthru
    _
  // Predicated region
  $region42: #{autoencoder_forward.1} parent=0 // pred_check
    _
  $region43: #{autoencoder_forward.1} parent=0 // pred_check_branch
    %40 = sbr.rel (0) target = $region45
  $region44: #{autoencoder_forward.1} parent=0 // pred_region
    _
  $region45: #{autoencoder_forward.1} parent=0 // pred_fallthru
    _
  // Predicated region
  $region46: #{autoencoder_forward.1} parent=0 // pred_check
    _
  $region47: #{autoencoder_forward.1} parent=0 // pred_check_branch
    %42 = sbr.rel (0) target = $region49
  $region48: #{autoencoder_forward.1} parent=0 // pred_region
    _
  $region49: #{autoencoder_forward.1} parent=0 // pred_fallthru
    _
  %v43 = vld [vmem:[%s0] sm:$0xff]
  %v44 = vld [vmem:[%s0 + $0x8] sm:$0xff]
  %v45 = vld [vmem:[%s0 + $0x10] sm:$0xff]
  %v46 = vld [vmem:[%s0 + $0x18] sm:$0xff]
  %v47 = vld [vmem:[%s0 + $0x20] sm:$0xff]
  %v48 = vld [vmem:[%s0 + $0x28] sm:$0xff]
  %v49 = vld [vmem:[%s0 + $0x30] sm:$0xff]
  %v50 = vld [vmem:[%s0 + $0x38] sm:$0xff]
  %v51 = vld [vmem:[%s0 + $0x40] sm:$0xff]
  %v52 = vld [vmem:[%s0 + $0x48] sm:$0xff]
  %v53 = vld [vmem:[%s0 + $0x50] sm:$0xff]
  %v54 = vld [vmem:[%s0 + $0x58] sm:$0xff]
  %v55 = vld [vmem:[%s0 + $0x60] sm:$0xff]
  %v56 = vld [vmem:[%s0 + $0x68] sm:$0xff]
  %v57 = vld [vmem:[%s0 + $0x70] sm:$0xff]
  %v58 = vld [vmem:[%s0 + $0x78] sm:$0xff]
  %v59 = vld [vmem:[%s0 + $0x80] sm:$0xff]
  %v60 = vld [vmem:[%s0 + $0x88] sm:$0xff]
  %v61 = vld [vmem:[%s0 + $0x90] sm:$0xff]
  %v62 = vld [vmem:[%s0 + $0x98] sm:$0xff]
  %v63 = vld [vmem:[%s0 + $0xa0] sm:$0xff]
  %v64 = vld [vmem:[%s0 + $0xa8] sm:$0xff]
  %v65 = vld [vmem:[%s0 + $0xb0] sm:$0xff]
  %v66 = vld [vmem:[%s0 + $0xb8] sm:$0xff]
  %v67 = vld [vmem:[%s0 + $0xc0] sm:$0xff]
  %v68 = vld [vmem:[%s0 + $0xc8] sm:$0xff]
  %v69 = vld [vmem:[%s0 + $0xd0] sm:$0xff]
  %v70 = vld [vmem:[%s0 + $0xd8] sm:$0xff]
  %v71 = vld [vmem:[%s0 + $0xe0] sm:$0xff]
  %v72 = vld [vmem:[%s0 + $0xe8] sm:$0xff]
  %v73 = vld [vmem:[%s0 + $0xf0] sm:$0xff]
  %v74 = vld [vmem:[%s0 + $0xf8] sm:$0xff]
  %v75 = vld [vmem:[%s0 + $0x100] sm:$0xff]
  %v76 = vld [vmem:[%s0 + $0x108] sm:$0xff]
  %v77 = vld [vmem:[%s0 + $0x110] sm:$0xff]
  %v78 = vld [vmem:[%s0 + $0x118] sm:$0xff]
  %v79 = vld [vmem:[%s0 + $0x120] sm:$0xff]
  %v80 = vld [vmem:[%s0 + $0x128] sm:$0xff]
  %v81 = vld [vmem:[%s0 + $0x130] sm:$0xff]
  %v82 = vld [vmem:[%s0 + $0x138] sm:$0xff]
  %v83 = vld [vmem:[%s0 + $0x140] sm:$0xff]
  %v84 = vld [vmem:[%s0 + $0x148] sm:$0xff]
  %v85 = vld [vmem:[%s0 + $0x150] sm:$0xff]
  %v86 = vld [vmem:[%s0 + $0x158] sm:$0xff]
  %v87 = vld [vmem:[%s0 + $0x160] sm:$0xff]
  %v88 = vld [vmem:[%s0 + $0x168] sm:$0xff]
  %v89 = vld [vmem:[%s0 + $0x170] sm:$0xff]
  %v90 = vld [vmem:[%s0 + $0x178] sm:$0xff]
  %v91 = vld [vmem:[%s0 + $0x180] sm:$0xff]
  %v92 = vld [vmem:[%s0 + $0x188] sm:$0xff]
  %v93 = vld [vmem:[%s0 + $0x190] sm:$0xff]
  %v94 = vld [vmem:[%s0 + $0x198] sm:$0xff]
  %v95 = vld [vmem:[%s0 + $0x1a0] sm:$0xff]
  %v96 = vld [vmem:[%s0 + $0x1a8] sm:$0xff]
  %v97 = vld [vmem:[%s0 + $0x1b0] sm:$0xff]
  %v98 = vld [vmem:[%s0 + $0x1b8] sm:$0xff]
  %v99 = vld [vmem:[%s0 + $0x1c0] sm:$0xff]
  %v100 = vld [vmem:[%s0 + $0x1c8] sm:$0xff]
  %v101 = vld [vmem:[%s0 + $0x1d0] sm:$0xff]
  %v102 = vld [vmem:[%s0 + $0x1d8] sm:$0xff]
  %v103 = vld [vmem:[%s0 + $0x1e0] sm:$0xff]
  %v104 = vld [vmem:[%s0 + $0x1e8] sm:$0xff]
  %v105 = vld [vmem:[%s0 + $0x1f0] sm:$0xff]
  %v106 = vld [vmem:[%s0 + $0x1f8] sm:$0xff]
  %v107 = vld [vmem:[%s1] sm:$0xff]
  %v108 = vld [vmem:[%s1 + $0x8] sm:$0xff]
  %v109 = vld [vmem:[%s1 + $0x10] sm:$0xff]
  %v110 = vld [vmem:[%s1 + $0x18] sm:$0xff]
  %v111 = vld [vmem:[%s1 + $0x20] sm:$0xff]
  %v112 = vld [vmem:[%s1 + $0x28] sm:$0xff]
  %v113 = vld [vmem:[%s1 + $0x30] sm:$0xff]
  %v114 = vld [vmem:[%s1 + $0x38] sm:$0xff]
  %vm115 = vcmask 523264
  %v117 = vsel %vm115, %v43, 0
  %v120 = vsel %vm115, %v44, 0
  %v123 = vsel %vm115, %v45, 0
  %v126 = vsel %vm115, %v46, 0
  %v129 = vsel %vm115, %v47, 0
  %v132 = vsel %vm115, %v48, 0
  %v135 = vsel %vm115, %v49, 0
  %v138 = vsel %vm115, %v50, 0
  %v141 = vsel %vm115, %v51, 0
  %v144 = vsel %vm115, %v52, 0
  %v147 = vsel %vm115, %v53, 0
  %v150 = vsel %vm115, %v54, 0
  %v153 = vsel %vm115, %v55, 0
  %v156 = vsel %vm115, %v56, 0
  %v159 = vsel %vm115, %v57, 0
  %v162 = vsel %vm115, %v58, 0
  %v165 = vsel %vm115, %v59, 0
  %v168 = vsel %vm115, %v60, 0
  %v171 = vsel %vm115, %v61, 0
  %v174 = vsel %vm115, %v62, 0
  %v177 = vsel %vm115, %v63, 0
  %v180 = vsel %vm115, %v64, 0
  %v183 = vsel %vm115, %v65, 0
  %v186 = vsel %vm115, %v66, 0
  %v189 = vsel %vm115, %v67, 0
  %v192 = vsel %vm115, %v68, 0
  %v195 = vsel %vm115, %v69, 0
  %v198 = vsel %vm115, %v70, 0
  %v201 = vsel %vm115, %v71, 0
  %v204 = vsel %vm115, %v72, 0
  %v207 = vsel %vm115, %v73, 0
  %v210 = vsel %vm115, %v74, 0
  %v213 = vsel %vm115, %v75, 0
  %v216 = vsel %vm115, %v76, 0
  %v219 = vsel %vm115, %v77, 0
  %v222 = vsel %vm115, %v78, 0
  %v225 = vsel %vm115, %v79, 0
  %v228 = vsel %vm115, %v80, 0
  %v231 = vsel %vm115, %v81, 0
  %v234 = vsel %vm115, %v82, 0
  %v237 = vsel %vm115, %v83, 0
  %v240 = vsel %vm115, %v84, 0
  %v243 = vsel %vm115, %v85, 0
  %v246 = vsel %vm115, %v86, 0
  %v249 = vsel %vm115, %v87, 0
  %v252 = vsel %vm115, %v88, 0
  %v255 = vsel %vm115, %v89, 0
  %v258 = vsel %vm115, %v90, 0
  %v261 = vsel %vm115, %v91, 0
  %v264 = vsel %vm115, %v92, 0
  %v267 = vsel %vm115, %v93, 0
  %v270 = vsel %vm115, %v94, 0
  %v273 = vsel %vm115, %v95, 0
  %v276 = vsel %vm115, %v96, 0
  %v279 = vsel %vm115, %v97, 0
  %v282 = vsel %vm115, %v98, 0
  %v285 = vsel %vm115, %v99, 0
  %v288 = vsel %vm115, %v100, 0
  %v291 = vsel %vm115, %v101, 0
  %v294 = vsel %vm115, %v102, 0
  %v297 = vsel %vm115, %v103, 0
  %v300 = vsel %vm115, %v104, 0
  %v303 = vsel %vm115, %v105, 0
  %v306 = vsel %vm115, %v106, 0
  %308 = vmatpush.msra.mxu0 0.0
  %309 = vmatpush.msra.mxu0 0.0
  %310 = vmatpush.msra.mxu0 0.0
  %311 = vmatpush.msra.mxu0 0.0
  %312 = vmatpush.msra.mxu0 0.0
  %313 = vmatpush.msra.mxu0 0.0
  %314 = vmatpush.msra.mxu0 0.0
  %315 = vmatpush.msra.mxu0 0.0
  %316 = vmatpush.msra.mxu0 %v114
  %317 = vmatpush.msra.mxu0 %v113
  %318 = vmatpush.msra.mxu0 %v112
  %319 = vmatpush.msra.mxu0 %v111
  %320 = vmatpush.msra.mxu0 %v110
  %321 = vmatpush.msra.mxu0 %v109
  %322 = vmatpush.msra.mxu0 %v108
  %323 = vmatpush.msra.mxu0 %v107
  %324 = vmatmul.f32.gmra.mxu0 %v117
  %v325 = vpop.f32.mrf.mxu0
  %v326 = vadd.f32 0.0, %v325
  %327 = vmatmul.f32.gmra.mxu0 %v120
  %v328 = vpop.f32.mrf.mxu0
  %v329 = vadd.f32 0.0, %v328
  %330 = vmatmul.f32.gmra.mxu0 %v123
  %v331 = vpop.f32.mrf.mxu0
  %v332 = vadd.f32 0.0, %v331
  %333 = vmatmul.f32.gmra.mxu0 %v126
  %v334 = vpop.f32.mrf.mxu0
  %v335 = vadd.f32 0.0, %v334
  %336 = vmatmul.f32.gmra.mxu0 %v129
  %v337 = vpop.f32.mrf.mxu0
  %v338 = vadd.f32 0.0, %v337
  %339 = vmatmul.f32.gmra.mxu0 %v132
  %v340 = vpop.f32.mrf.mxu0
  %v341 = vadd.f32 0.0, %v340
  %342 = vmatmul.f32.gmra.mxu0 %v135
  %v343 = vpop.f32.mrf.mxu0
  %v344 = vadd.f32 0.0, %v343
  %345 = vmatmul.f32.gmra.mxu0 %v138
  %v346 = vpop.f32.mrf.mxu0
  %v347 = vadd.f32 0.0, %v346
  %348 = vmatmul.f32.gmra.mxu0 %v141
  %v349 = vpop.f32.mrf.mxu0
  %v350 = vadd.f32 0.0, %v349
  %351 = vmatmul.f32.gmra.mxu0 %v144
  %v352 = vpop.f32.mrf.mxu0
  %v353 = vadd.f32 0.0, %v352
  %354 = vmatmul.f32.gmra.mxu0 %v147
  %v355 = vpop.f32.mrf.mxu0
  %v356 = vadd.f32 0.0, %v355
  %357 = vmatmul.f32.gmra.mxu0 %v150
  %v358 = vpop.f32.mrf.mxu0
  %v359 = vadd.f32 0.0, %v358
  %360 = vmatmul.f32.gmra.mxu0 %v153
  %v361 = vpop.f32.mrf.mxu0
  %v362 = vadd.f32 0.0, %v361
  %363 = vmatmul.f32.gmra.mxu0 %v156
  %v364 = vpop.f32.mrf.mxu0
  %v365 = vadd.f32 0.0, %v364
  %366 = vmatmul.f32.gmra.mxu0 %v159
  %v367 = vpop.f32.mrf.mxu0
  %v368 = vadd.f32 0.0, %v367
  %369 = vmatmul.f32.gmra.mxu0 %v162
  %v370 = vpop.f32.mrf.mxu0
  %v371 = vadd.f32 0.0, %v370
  %372 = vmatmul.f32.gmra.mxu0 %v165
  %v373 = vpop.f32.mrf.mxu0
  %v374 = vadd.f32 0.0, %v373
  %375 = vmatmul.f32.gmra.mxu0 %v168
  %v376 = vpop.f32.mrf.mxu0
  %v377 = vadd.f32 0.0, %v376
  %378 = vmatmul.f32.gmra.mxu0 %v171
  %v379 = vpop.f32.mrf.mxu0
  %v380 = vadd.f32 0.0, %v379
  %381 = vmatmul.f32.gmra.mxu0 %v174
  %v382 = vpop.f32.mrf.mxu0
  %v383 = vadd.f32 0.0, %v382
  %384 = vmatmul.f32.gmra.mxu0 %v177
  %v385 = vpop.f32.mrf.mxu0
  %v386 = vadd.f32 0.0, %v385
  %387 = vmatmul.f32.gmra.mxu0 %v180
  %v388 = vpop.f32.mrf.mxu0
  %v389 = vadd.f32 0.0, %v388
  %390 = vmatmul.f32.gmra.mxu0 %v183
  %v391 = vpop.f32.mrf.mxu0
  %v392 = vadd.f32 0.0, %v391
  %393 = vmatmul.f32.gmra.mxu0 %v186
  %v394 = vpop.f32.mrf.mxu0
  %v395 = vadd.f32 0.0, %v394
  %396 = vmatmul.f32.gmra.mxu0 %v189
  %v397 = vpop.f32.mrf.mxu0
  %v398 = vadd.f32 0.0, %v397
  %399 = vmatmul.f32.gmra.mxu0 %v192
  %v400 = vpop.f32.mrf.mxu0
  %v401 = vadd.f32 0.0, %v400
  %402 = vmatmul.f32.gmra.mxu0 %v195
  %v403 = vpop.f32.mrf.mxu0
  %v404 = vadd.f32 0.0, %v403
  %405 = vmatmul.f32.gmra.mxu0 %v198
  %v406 = vpop.f32.mrf.mxu0
  %v407 = vadd.f32 0.0, %v406
  %408 = vmatmul.f32.gmra.mxu0 %v201
  %v409 = vpop.f32.mrf.mxu0
  %v410 = vadd.f32 0.0, %v409
  %411 = vmatmul.f32.gmra.mxu0 %v204
  %v412 = vpop.f32.mrf.mxu0
  %v413 = vadd.f32 0.0, %v412
  %414 = vmatmul.f32.gmra.mxu0 %v207
  %v415 = vpop.f32.mrf.mxu0
  %v416 = vadd.f32 0.0, %v415
  %417 = vmatmul.f32.gmra.mxu0 %v210
  %v418 = vpop.f32.mrf.mxu0
  %v419 = vadd.f32 0.0, %v418
  %420 = vmatmul.f32.gmra.mxu0 %v213
  %v421 = vpop.f32.mrf.mxu0
  %v422 = vadd.f32 0.0, %v421
  %423 = vmatmul.f32.gmra.mxu0 %v216
  %v424 = vpop.f32.mrf.mxu0
  %v425 = vadd.f32 0.0, %v424
  %426 = vmatmul.f32.gmra.mxu0 %v219
  %v427 = vpop.f32.mrf.mxu0
  %v428 = vadd.f32 0.0, %v427
  %429 = vmatmul.f32.gmra.mxu0 %v222
  %v430 = vpop.f32.mrf.mxu0
  %v431 = vadd.f32 0.0, %v430
  %432 = vmatmul.f32.gmra.mxu0 %v225
  %v433 = vpop.f32.mrf.mxu0
  %v434 = vadd.f32 0.0, %v433
  %435 = vmatmul.f32.gmra.mxu0 %v228
  %v436 = vpop.f32.mrf.mxu0
  %v437 = vadd.f32 0.0, %v436
  %438 = vmatmul.f32.gmra.mxu0 %v231
  %v439 = vpop.f32.mrf.mxu0
  %v440 = vadd.f32 0.0, %v439
  %441 = vmatmul.f32.gmra.mxu0 %v234
  %v442 = vpop.f32.mrf.mxu0
  %v443 = vadd.f32 0.0, %v442
  %444 = vmatmul.f32.gmra.mxu0 %v237
  %v445 = vpop.f32.mrf.mxu0
  %v446 = vadd.f32 0.0, %v445
  %447 = vmatmul.f32.gmra.mxu0 %v240
  %v448 = vpop.f32.mrf.mxu0
  %v449 = vadd.f32 0.0, %v448
  %450 = vmatmul.f32.gmra.mxu0 %v243
  %v451 = vpop.f32.mrf.mxu0
  %v452 = vadd.f32 0.0, %v451
  %453 = vmatmul.f32.gmra.mxu0 %v246
  %v454 = vpop.f32.mrf.mxu0
  %v455 = vadd.f32 0.0, %v454
  %456 = vmatmul.f32.gmra.mxu0 %v249
  %v457 = vpop.f32.mrf.mxu0
  %v458 = vadd.f32 0.0, %v457
  %459 = vmatmul.f32.gmra.mxu0 %v252
  %v460 = vpop.f32.mrf.mxu0
  %v461 = vadd.f32 0.0, %v460
  %462 = vmatmul.f32.gmra.mxu0 %v255
  %v463 = vpop.f32.mrf.mxu0
  %v464 = vadd.f32 0.0, %v463
  %465 = vmatmul.f32.gmra.mxu0 %v258
  %v466 = vpop.f32.mrf.mxu0
  %v467 = vadd.f32 0.0, %v466
  %468 = vmatmul.f32.gmra.mxu0 %v261
  %v469 = vpop.f32.mrf.mxu0
  %v470 = vadd.f32 0.0, %v469
  %471 = vmatmul.f32.gmra.mxu0 %v264
  %v472 = vpop.f32.mrf.mxu0
  %v473 = vadd.f32 0.0, %v472
  %474 = vmatmul.f32.gmra.mxu0 %v267
  %v475 = vpop.f32.mrf.mxu0
  %v476 = vadd.f32 0.0, %v475
  %477 = vmatmul.f32.gmra.mxu0 %v270
  %v478 = vpop.f32.mrf.mxu0
  %v479 = vadd.f32 0.0, %v478
  %480 = vmatmul.f32.gmra.mxu0 %v273
  %v481 = vpop.f32.mrf.mxu0
  %v482 = vadd.f32 0.0, %v481
  %483 = vmatmul.f32.gmra.mxu0 %v276
  %v484 = vpop.f32.mrf.mxu0
  %v485 = vadd.f32 0.0, %v484
  %486 = vmatmul.f32.gmra.mxu0 %v279
  %v487 = vpop.f32.mrf.mxu0
  %v488 = vadd.f32 0.0, %v487
  %489 = vmatmul.f32.gmra.mxu0 %v282
  %v490 = vpop.f32.mrf.mxu0
  %v491 = vadd.f32 0.0, %v490
  %492 = vmatmul.f32.gmra.mxu0 %v285
  %v493 = vpop.f32.mrf.mxu0
  %v494 = vadd.f32 0.0, %v493
  %495 = vmatmul.f32.gmra.mxu0 %v288
  %v496 = vpop.f32.mrf.mxu0
  %v497 = vadd.f32 0.0, %v496
  %498 = vmatmul.f32.gmra.mxu0 %v291
  %v499 = vpop.f32.mrf.mxu0
  %v500 = vadd.f32 0.0, %v499
  %501 = vmatmul.f32.gmra.mxu0 %v294
  %v502 = vpop.f32.mrf.mxu0
  %v503 = vadd.f32 0.0, %v502
  %504 = vmatmul.f32.gmra.mxu0 %v297
  %v505 = vpop.f32.mrf.mxu0
  %v506 = vadd.f32 0.0, %v505
  %507 = vmatmul.f32.gmra.mxu0 %v300
  %v508 = vpop.f32.mrf.mxu0
  %v509 = vadd.f32 0.0, %v508
  %510 = vmatmul.f32.gmra.mxu0 %v303
  %v511 = vpop.f32.mrf.mxu0
  %v512 = vadd.f32 0.0, %v511
  %513 = vmatmul.f32.gmra.mxu0 %v306
  %v514 = vpop.f32.mrf.mxu0
  %v515 = vadd.f32 0.0, %v514
  %516 = vdwg.mxu0
  %v517 = vld [vmem:[%s2] sm:$0x1]
  %v518 = vld [vmem:[%s3] sm:$0x1]
  %vm519 = vcmask 261120
  %v520 = vsel %vm519, %v326, 0.0
  %v521 = vsel %vm519, %v329, 0.0
  %v522 = vadd.f32 %v520, %v521
  %v523 = vsel %vm519, %v332, 0.0
  %v524 = vadd.f32 %v522, %v523
  %v525 = vsel %vm519, %v335, 0.0
  %v526 = vadd.f32 %v524, %v525
  %v527 = vsel %vm519, %v338, 0.0
  %v528 = vadd.f32 %v526, %v527
  %v529 = vsel %vm519, %v341, 0.0
  %v530 = vadd.f32 %v528, %v529
  %v531 = vsel %vm519, %v344, 0.0
  %v532 = vadd.f32 %v530, %v531
  %v533 = vsel %vm519, %v347, 0.0
  %v534 = vadd.f32 %v532, %v533
  %v535 = vsel %vm519, %v350, 0.0
  %v536 = vadd.f32 %v534, %v535
  %v537 = vsel %vm519, %v353, 0.0
  %v538 = vadd.f32 %v536, %v537
  %v539 = vsel %vm519, %v356, 0.0
  %v540 = vadd.f32 %v538, %v539
  %v541 = vsel %vm519, %v359, 0.0
  %v542 = vadd.f32 %v540, %v541
  %v543 = vsel %vm519, %v362, 0.0
  %v544 = vadd.f32 %v542, %v543
  %v545 = vsel %vm519, %v365, 0.0
  %v546 = vadd.f32 %v544, %v545
  %v547 = vsel %vm519, %v368, 0.0
  %v548 = vadd.f32 %v546, %v547
  %v549 = vsel %vm519, %v371, 0.0
  %v550 = vadd.f32 %v548, %v549
  %v551 = vsel %vm519, %v374, 0.0
  %v552 = vadd.f32 %v550, %v551
  %v553 = vsel %vm519, %v377, 0.0
  %v554 = vadd.f32 %v552, %v553
  %v555 = vsel %vm519, %v380, 0.0
  %v556 = vadd.f32 %v554, %v555
  %v557 = vsel %vm519, %v383, 0.0
  %v558 = vadd.f32 %v556, %v557
  %v559 = vsel %vm519, %v386, 0.0
  %v560 = vadd.f32 %v558, %v559
  %v561 = vsel %vm519, %v389, 0.0
  %v562 = vadd.f32 %v560, %v561
  %v563 = vsel %vm519, %v392, 0.0
  %v564 = vadd.f32 %v562, %v563
  %v565 = vsel %vm519, %v395, 0.0
  %v566 = vadd.f32 %v564, %v565
  %v567 = vsel %vm519, %v398, 0.0
  %v568 = vadd.f32 %v566, %v567
  %v569 = vsel %vm519, %v401, 0.0
  %v570 = vadd.f32 %v568, %v569
  %v571 = vsel %vm519, %v404, 0.0
  %v572 = vadd.f32 %v570, %v571
  %v573 = vsel %vm519, %v407, 0.0
  %v574 = vadd.f32 %v572, %v573
  %v575 = vsel %vm519, %v410, 0.0
  %v576 = vadd.f32 %v574, %v575
  %v577 = vsel %vm519, %v413, 0.0
  %v578 = vadd.f32 %v576, %v577
  %v579 = vsel %vm519, %v416, 0.0
  %v580 = vadd.f32 %v578, %v579
  %v581 = vsel %vm519, %v419, 0.0
  %v582 = vadd.f32 %v580, %v581
  %v583 = vsel %vm519, %v422, 0.0
  %v584 = vadd.f32 %v582, %v583
  %v585 = vsel %vm519, %v425, 0.0
  %v586 = vadd.f32 %v584, %v585
  %v587 = vsel %vm519, %v428, 0.0
  %v588 = vadd.f32 %v586, %v587
  %v589 = vsel %vm519, %v431, 0.0
  %v590 = vadd.f32 %v588, %v589
  %v591 = vsel %vm519, %v434, 0.0
  %v592 = vadd.f32 %v590, %v591
  %v593 = vsel %vm519, %v437, 0.0
  %v594 = vadd.f32 %v592, %v593
  %v595 = vsel %vm519, %v440, 0.0
  %v596 = vadd.f32 %v594, %v595
  %v597 = vsel %vm519, %v443, 0.0
  %v598 = vadd.f32 %v596, %v597
  %v599 = vsel %vm519, %v446, 0.0
  %v600 = vadd.f32 %v598, %v599
  %v601 = vsel %vm519, %v449, 0.0
  %v602 = vadd.f32 %v600, %v601
  %v603 = vsel %vm519, %v452, 0.0
  %v604 = vadd.f32 %v602, %v603
  %v605 = vsel %vm519, %v455, 0.0
  %v606 = vadd.f32 %v604, %v605
  %v607 = vsel %vm519, %v458, 0.0
  %v608 = vadd.f32 %v606, %v607
  %v609 = vsel %vm519, %v461, 0.0
  %v610 = vadd.f32 %v608, %v609
  %v611 = vsel %vm519, %v464, 0.0
  %v612 = vadd.f32 %v610, %v611
  %v613 = vsel %vm519, %v467, 0.0
  %v614 = vadd.f32 %v612, %v613
  %v615 = vsel %vm519, %v470, 0.0
  %v616 = vadd.f32 %v614, %v615
  %v617 = vsel %vm519, %v473, 0.0
  %v618 = vadd.f32 %v616, %v617
  %v619 = vsel %vm519, %v476, 0.0
  %v620 = vadd.f32 %v618, %v619
  %v621 = vsel %vm519, %v479, 0.0
  %v622 = vadd.f32 %v620, %v621
  %v623 = vsel %vm519, %v482, 0.0
  %v624 = vadd.f32 %v622, %v623
  %v625 = vsel %vm519, %v485, 0.0
  %v626 = vadd.f32 %v624, %v625
  %v627 = vsel %vm519, %v488, 0.0
  %v628 = vadd.f32 %v626, %v627
  %v629 = vsel %vm519, %v491, 0.0
  %v630 = vadd.f32 %v628, %v629
  %v631 = vsel %vm519, %v494, 0.0
  %v632 = vadd.f32 %v630, %v631
  %v633 = vsel %vm519, %v497, 0.0
  %v634 = vadd.f32 %v632, %v633
  %v635 = vsel %vm519, %v500, 0.0
  %v636 = vadd.f32 %v634, %v635
  %v637 = vsel %vm519, %v503, 0.0
  %v638 = vadd.f32 %v636, %v637
  %v639 = vsel %vm519, %v506, 0.0
  %v640 = vadd.f32 %v638, %v639
  %v641 = vsel %vm519, %v509, 0.0
  %v642 = vadd.f32 %v640, %v641
  %v643 = vsel %vm519, %v512, 0.0
  %v644 = vadd.f32 %v642, %v643
  %v645 = vsel %vm519, %v515, 0.0
  %v646 = vadd.f32 %v644, %v645
  %v647 = vrot.slane %v646, 4
  %v648 = vadd.f32 %v646, %v647
  %v649 = vrot.slane %v648, 2
  %v650 = vadd.f32 %v648, %v649
  %v651 = vrot.slane %v650, 1
  %v652 = vadd.f32 %v650, %v651
  %v653 = vmul.f32 %v326, %v326
  %v654 = vmul.f32 %v329, %v329
  %v655 = vmul.f32 %v332, %v332
  %v656 = vmul.f32 %v335, %v335
  %v657 = vmul.f32 %v338, %v338
  %v658 = vmul.f32 %v341, %v341
  %v659 = vmul.f32 %v344, %v344
  %v660 = vmul.f32 %v347, %v347
  %v661 = vmul.f32 %v350, %v350
  %v662 = vmul.f32 %v353, %v353
  %v663 = vmul.f32 %v356, %v356
  %v664 = vmul.f32 %v359, %v359
  %v665 = vmul.f32 %v362, %v362
  %v666 = vmul.f32 %v365, %v365
  %v667 = vmul.f32 %v368, %v368
  %v668 = vmul.f32 %v371, %v371
  %v669 = vmul.f32 %v374, %v374
  %v670 = vmul.f32 %v377, %v377
  %v671 = vmul.f32 %v380, %v380
  %v672 = vmul.f32 %v383, %v383
  %v673 = vmul.f32 %v386, %v386
  %v674 = vmul.f32 %v389, %v389
  %v675 = vmul.f32 %v392, %v392
  %v676 = vmul.f32 %v395, %v395
  %v677 = vmul.f32 %v398, %v398
  %v678 = vmul.f32 %v401, %v401
  %v679 = vmul.f32 %v404, %v404
  %v680 = vmul.f32 %v407, %v407
  %v681 = vmul.f32 %v410, %v410
  %v682 = vmul.f32 %v413, %v413
  %v683 = vmul.f32 %v416, %v416
  %v684 = vmul.f32 %v419, %v419
  %v685 = vmul.f32 %v422, %v422
  %v686 = vmul.f32 %v425, %v425
  %v687 = vmul.f32 %v428, %v428
  %v688 = vmul.f32 %v431, %v431
  %v689 = vmul.f32 %v434, %v434
  %v690 = vmul.f32 %v437, %v437
  %v691 = vmul.f32 %v440, %v440
  %v692 = vmul.f32 %v443, %v443
  %v693 = vmul.f32 %v446, %v446
  %v694 = vmul.f32 %v449, %v449
  %v695 = vmul.f32 %v452, %v452
  %v696 = vmul.f32 %v455, %v455
  %v697 = vmul.f32 %v458, %v458
  %v698 = vmul.f32 %v461, %v461
  %v699 = vmul.f32 %v464, %v464
  %v700 = vmul.f32 %v467, %v467
  %v701 = vmul.f32 %v470, %v470
  %v702 = vmul.f32 %v473, %v473
  %v703 = vmul.f32 %v476, %v476
  %v704 = vmul.f32 %v479, %v479
  %v705 = vmul.f32 %v482, %v482
  %v706 = vmul.f32 %v485, %v485
  %v707 = vmul.f32 %v488, %v488
  %v708 = vmul.f32 %v491, %v491
  %v709 = vmul.f32 %v494, %v494
  %v710 = vmul.f32 %v497, %v497
  %v711 = vmul.f32 %v500, %v500
  %v712 = vmul.f32 %v503, %v503
  %v713 = vmul.f32 %v506, %v506
  %v714 = vmul.f32 %v509, %v509
  %v715 = vmul.f32 %v512, %v512
  %v716 = vmul.f32 %v515, %v515
  %v717 = vsel %vm519, %v653, 0.0
  %v718 = vsel %vm519, %v654, 0.0
  %v719 = vadd.f32 %v717, %v718
  %v720 = vsel %vm519, %v655, 0.0
  %v721 = vadd.f32 %v719, %v720
  %v722 = vsel %vm519, %v656, 0.0
  %v723 = vadd.f32 %v721, %v722
  %v724 = vsel %vm519, %v657, 0.0
  %v725 = vadd.f32 %v723, %v724
  %v726 = vsel %vm519, %v658, 0.0
  %v727 = vadd.f32 %v725, %v726
  %v728 = vsel %vm519, %v659, 0.0
  %v729 = vadd.f32 %v727, %v728
  %v730 = vsel %vm519, %v660, 0.0
  %v731 = vadd.f32 %v729, %v730
  %v732 = vsel %vm519, %v661, 0.0
  %v733 = vadd.f32 %v731, %v732
  %v734 = vsel %vm519, %v662, 0.0
  %v735 = vadd.f32 %v733, %v734
  %v736 = vsel %vm519, %v663, 0.0
  %v737 = vadd.f32 %v735, %v736
  %v738 = vsel %vm519, %v664, 0.0
  %v739 = vadd.f32 %v737, %v738
  %v740 = vsel %vm519, %v665, 0.0
  %v741 = vadd.f32 %v739, %v740
  %v742 = vsel %vm519, %v666, 0.0
  %v743 = vadd.f32 %v741, %v742
  %v744 = vsel %vm519, %v667, 0.0
  %v745 = vadd.f32 %v743, %v744
  %v746 = vsel %vm519, %v668, 0.0
  %v747 = vadd.f32 %v745, %v746
  %v748 = vsel %vm519, %v669, 0.0
  %v749 = vadd.f32 %v747, %v748
  %v750 = vsel %vm519, %v670, 0.0
  %v751 = vadd.f32 %v749, %v750
  %v752 = vsel %vm519, %v671, 0.0
  %v753 = vadd.f32 %v751, %v752
  %v754 = vsel %vm519, %v672, 0.0
  %v755 = vadd.f32 %v753, %v754
  %v756 = vsel %vm519, %v673, 0.0
  %v757 = vadd.f32 %v755, %v756
  %v758 = vsel %vm519, %v674, 0.0
  %v759 = vadd.f32 %v757, %v758
  %v760 = vsel %vm519, %v675, 0.0
  %v761 = vadd.f32 %v759, %v760
  %v762 = vsel %vm519, %v676, 0.0
  %v763 = vadd.f32 %v761, %v762
  %v764 = vsel %vm519, %v677, 0.0
  %v765 = vadd.f32 %v763, %v764
  %v766 = vsel %vm519, %v678, 0.0
  %v767 = vadd.f32 %v765, %v766
  %v768 = vsel %vm519, %v679, 0.0
  %v769 = vadd.f32 %v767, %v768
  %v770 = vsel %vm519, %v680, 0.0
  %v771 = vadd.f32 %v769, %v770
  %v772 = vsel %vm519, %v681, 0.0
  %v773 = vadd.f32 %v771, %v772
  %v774 = vsel %vm519, %v682, 0.0
  %v775 = vadd.f32 %v773, %v774
  %v776 = vsel %vm519, %v683, 0.0
  %v777 = vadd.f32 %v775, %v776
  %v778 = vsel %vm519, %v684, 0.0
  %v779 = vadd.f32 %v777, %v778
  %v780 = vsel %vm519, %v685, 0.0
  %v781 = vadd.f32 %v779, %v780
  %v782 = vsel %vm519, %v686, 0.0
  %v783 = vadd.f32 %v781, %v782
  %v784 = vsel %vm519, %v687, 0.0
  %v785 = vadd.f32 %v783, %v784
  %v786 = vsel %vm519, %v688, 0.0
  %v787 = vadd.f32 %v785, %v786
  %v788 = vsel %vm519, %v689, 0.0
  %v789 = vadd.f32 %v787, %v788
  %v790 = vsel %vm519, %v690, 0.0
  %v791 = vadd.f32 %v789, %v790
  %v792 = vsel %vm519, %v691, 0.0
  %v793 = vadd.f32 %v791, %v792
  %v794 = vsel %vm519, %v692, 0.0
  %v795 = vadd.f32 %v793, %v794
  %v796 = vsel %vm519, %v693, 0.0
  %v797 = vadd.f32 %v795, %v796
  %v798 = vsel %vm519, %v694, 0.0
  %v799 = vadd.f32 %v797, %v798
  %v800 = vsel %vm519, %v695, 0.0
  %v801 = vadd.f32 %v799, %v800
  %v802 = vsel %vm519, %v696, 0.0
  %v803 = vadd.f32 %v801, %v802
  %v804 = vsel %vm519, %v697, 0.0
  %v805 = vadd.f32 %v803, %v804
  %v806 = vsel %vm519, %v698, 0.0
  %v807 = vadd.f32 %v805, %v806
  %v808 = vsel %vm519, %v699, 0.0
  %v809 = vadd.f32 %v807, %v808
  %v810 = vsel %vm519, %v700, 0.0
  %v811 = vadd.f32 %v809, %v810
  %v812 = vsel %vm519, %v701, 0.0
  %v813 = vadd.f32 %v811, %v812
  %v814 = vsel %vm519, %v702, 0.0
  %v815 = vadd.f32 %v813, %v814
  %v816 = vsel %vm519, %v703, 0.0
  %v817 = vadd.f32 %v815, %v816
  %v818 = vsel %vm519, %v704, 0.0
  %v819 = vadd.f32 %v817, %v818
  %v820 = vsel %vm519, %v705, 0.0
  %v821 = vadd.f32 %v819, %v820
  %v822 = vsel %vm519, %v706, 0.0
  %v823 = vadd.f32 %v821, %v822
  %v824 = vsel %vm519, %v707, 0.0
  %v825 = vadd.f32 %v823, %v824
  %v826 = vsel %vm519, %v708, 0.0
  %v827 = vadd.f32 %v825, %v826
  %v828 = vsel %vm519, %v709, 0.0
  %v829 = vadd.f32 %v827, %v828
  %v830 = vsel %vm519, %v710, 0.0
  %v831 = vadd.f32 %v829, %v830
  %v832 = vsel %vm519, %v711, 0.0
  %v833 = vadd.f32 %v831, %v832
  %v834 = vsel %vm519, %v712, 0.0
  %v835 = vadd.f32 %v833, %v834
  %v836 = vsel %vm519, %v713, 0.0
  %v837 = vadd.f32 %v835, %v836
  %v838 = vsel %vm519, %v714, 0.0
  %v839 = vadd.f32 %v837, %v838
  %v840 = vsel %vm519, %v715, 0.0
  %v841 = vadd.f32 %v839, %v840
  %v842 = vsel %vm519, %v716, 0.0
  %v843 = vadd.f32 %v841, %v842
  %v844 = vrot.slane %v843, 4
  %v845 = vadd.f32 %v843, %v844
  %v846 = vrot.slane %v845, 2
  %v847 = vadd.f32 %v845, %v846
  %v848 = vrot.slane %v847, 1
  %v849 = vadd.f32 %v847, %v848
  %v850 = vmul.f32 %v652, 0.001953125
  %v851 = vmul.f32 %v849, 0.001953125
  %v852 = vmul.f32 %v850, %v850
  %v853 = vsub.f32 %v851, %v852
  %v854 = vmax.f32 %v853, 0.0
  %v855 = vadd.f32 %v854, 1e-05
  %v856 = vrsqrt.pop %v855
  %v857 = vmul.f32 %v856, %v855
  %v858 = vmul.f32 %v857, %v856
  %v859 = vmul.f32 0.5, %v858
  %v860 = vsub.f32 1.5, %v859
  %v861 = vmul.f32 %v856, %v860
  %vm862 = vweird.f32 %v855
  %vm863 = vweird.f32 %v856
  %vm864 = vmor %vm862, %vm863
  %v865 = vsel %vm864, %v856, %v861
  %v866 = vmul.f32 %v517, %v865
  %v867 = vmul.f32 %v850, %v866
  %v868 = vsub.f32 %v518, %v867
  %v870 = vperm.slane %v866, 0
  %v872 = vmul.f32 %v326, %v870
  %v873 = vmul.f32 %v329, %v870
  %v874 = vmul.f32 %v332, %v870
  %v875 = vmul.f32 %v335, %v870
  %v876 = vmul.f32 %v338, %v870
  %v877 = vmul.f32 %v341, %v870
  %v878 = vmul.f32 %v344, %v870
  %v879 = vmul.f32 %v347, %v870
  %v880 = vmul.f32 %v350, %v870
  %v881 = vmul.f32 %v353, %v870
  %v882 = vmul.f32 %v356, %v870
  %v883 = vmul.f32 %v359, %v870
  %v884 = vmul.f32 %v362, %v870
  %v885 = vmul.f32 %v365, %v870
  %v886 = vmul.f32 %v368, %v870
  %v887 = vmul.f32 %v371, %v870
  %v888 = vmul.f32 %v374, %v870
  %v889 = vmul.f32 %v377, %v870
  %v890 = vmul.f32 %v380, %v870
  %v891 = vmul.f32 %v383, %v870
  %v892 = vmul.f32 %v386, %v870
  %v893 = vmul.f32 %v389, %v870
  %v894 = vmul.f32 %v392, %v870
  %v895 = vmul.f32 %v395, %v870
  %v896 = vmul.f32 %v398, %v870
  %v897 = vmul.f32 %v401, %v870
  %v898 = vmul.f32 %v404, %v870
  %v899 = vmul.f32 %v407, %v870
  %v900 = vmul.f32 %v410, %v870
  %v901 = vmul.f32 %v413, %v870
  %v902 = vmul.f32 %v416, %v870
  %v903 = vmul.f32 %v419, %v870
  %v904 = vmul.f32 %v422, %v870
  %v905 = vmul.f32 %v425, %v870
  %v906 = vmul.f32 %v428, %v870
  %v907 = vmul.f32 %v431, %v870
  %v908 = vmul.f32 %v434, %v870
  %v909 = vmul.f32 %v437, %v870
  %v910 = vmul.f32 %v440, %v870
  %v911 = vmul.f32 %v443, %v870
  %v912 = vmul.f32 %v446, %v870
  %v913 = vmul.f32 %v449, %v870
  %v914 = vmul.f32 %v452, %v870
  %v915 = vmul.f32 %v455, %v870
  %v916 = vmul.f32 %v458, %v870
  %v917 = vmul.f32 %v461, %v870
  %v918 = vmul.f32 %v464, %v870
  %v919 = vmul.f32 %v467, %v870
  %v920 = vmul.f32 %v470, %v870
  %v921 = vmul.f32 %v473, %v870
  %v922 = vmul.f32 %v476, %v870
  %v923 = vmul.f32 %v479, %v870
  %v924 = vmul.f32 %v482, %v870
  %v925 = vmul.f32 %v485, %v870
  %v926 = vmul.f32 %v488, %v870
  %v927 = vmul.f32 %v491, %v870
  %v928 = vmul.f32 %v494, %v870
  %v929 = vmul.f32 %v497, %v870
  %v930 = vmul.f32 %v500, %v870
  %v931 = vmul.f32 %v503, %v870
  %v932 = vmul.f32 %v506, %v870
  %v933 = vmul.f32 %v509, %v870
  %v934 = vmul.f32 %v512, %v870
  %v935 = vmul.f32 %v515, %v870
  %v937 = vperm.slane %v868, 0
  %v939 = vadd.f32 %v872, %v937
  %v940 = vadd.f32 %v873, %v937
  %v941 = vadd.f32 %v874, %v937
  %v942 = vadd.f32 %v875, %v937
  %v943 = vadd.f32 %v876, %v937
  %v944 = vadd.f32 %v877, %v937
  %v945 = vadd.f32 %v878, %v937
  %v946 = vadd.f32 %v879, %v937
  %v947 = vadd.f32 %v880, %v937
  %v948 = vadd.f32 %v881, %v937
  %v949 = vadd.f32 %v882, %v937
  %v950 = vadd.f32 %v883, %v937
  %v951 = vadd.f32 %v884, %v937
  %v952 = vadd.f32 %v885, %v937
  %v953 = vadd.f32 %v886, %v937
  %v954 = vadd.f32 %v887, %v937
  %v955 = vadd.f32 %v888, %v937
  %v956 = vadd.f32 %v889, %v937
  %v957 = vadd.f32 %v890, %v937
  %v958 = vadd.f32 %v891, %v937
  %v959 = vadd.f32 %v892, %v937
  %v960 = vadd.f32 %v893, %v937
  %v961 = vadd.f32 %v894, %v937
  %v962 = vadd.f32 %v895, %v937
  %v963 = vadd.f32 %v896, %v937
  %v964 = vadd.f32 %v897, %v937
  %v965 = vadd.f32 %v898, %v937
  %v966 = vadd.f32 %v899, %v937
  %v967 = vadd.f32 %v900, %v937
  %v968 = vadd.f32 %v901, %v937
  %v969 = vadd.f32 %v902, %v937
  %v970 = vadd.f32 %v903, %v937
  %v971 = vadd.f32 %v904, %v937
  %v972 = vadd.f32 %v905, %v937
  %v973 = vadd.f32 %v906, %v937
  %v974 = vadd.f32 %v907, %v937
  %v975 = vadd.f32 %v908, %v937
  %v976 = vadd.f32 %v909, %v937
  %v977 = vadd.f32 %v910, %v937
  %v978 = vadd.f32 %v911, %v937
  %v979 = vadd.f32 %v912, %v937
  %v980 = vadd.f32 %v913, %v937
  %v981 = vadd.f32 %v914, %v937
  %v982 = vadd.f32 %v915, %v937
  %v983 = vadd.f32 %v916, %v937
  %v984 = vadd.f32 %v917, %v937
  %v985 = vadd.f32 %v918, %v937
  %v986 = vadd.f32 %v919, %v937
  %v987 = vadd.f32 %v920, %v937
  %v988 = vadd.f32 %v921, %v937
  %v989 = vadd.f32 %v922, %v937
  %v990 = vadd.f32 %v923, %v937
  %v991 = vadd.f32 %v924, %v937
  %v992 = vadd.f32 %v925, %v937
  %v993 = vadd.f32 %v926, %v937
  %v994 = vadd.f32 %v927, %v937
  %v995 = vadd.f32 %v928, %v937
  %v996 = vadd.f32 %v929, %v937
  %v997 = vadd.f32 %v930, %v937
  %v998 = vadd.f32 %v931, %v937
  %v999 = vadd.f32 %v932, %v937
  %v1000 = vadd.f32 %v933, %v937
  %v1001 = vadd.f32 %v934, %v937
  %v1002 = vadd.f32 %v935, %v937
  %v1003 = vmax.f32 %v939, 0.0
  %v1004 = vmax.f32 %v940, 0.0
  %v1005 = vmax.f32 %v941, 0.0
  %v1006 = vmax.f32 %v942, 0.0
  %v1007 = vmax.f32 %v943, 0.0
  %v1008 = vmax.f32 %v944, 0.0
  %v1009 = vmax.f32 %v945, 0.0
  %v1010 = vmax.f32 %v946, 0.0
  %v1011 = vmax.f32 %v947, 0.0
  %v1012 = vmax.f32 %v948, 0.0
  %v1013 = vmax.f32 %v949, 0.0
  %v1014 = vmax.f32 %v950, 0.0
  %v1015 = vmax.f32 %v951, 0.0
  %v1016 = vmax.f32 %v952, 0.0
  %v1017 = vmax.f32 %v953, 0.0
  %v1018 = vmax.f32 %v954, 0.0
  %v1019 = vmax.f32 %v955, 0.0
  %v1020 = vmax.f32 %v956, 0.0
  %v1021 = vmax.f32 %v957, 0.0
  %v1022 = vmax.f32 %v958, 0.0
  %v1023 = vmax.f32 %v959, 0.0
  %v1024 = vmax.f32 %v960, 0.0
  %v1025 = vmax.f32 %v961, 0.0
  %v1026 = vmax.f32 %v962, 0.0
  %v1027 = vmax.f32 %v963, 0.0
  %v1028 = vmax.f32 %v964, 0.0
  %v1029 = vmax.f32 %v965, 0.0
  %v1030 = vmax.f32 %v966, 0.0
  %v1031 = vmax.f32 %v967, 0.0
  %v1032 = vmax.f32 %v968, 0.0
  %v1033 = vmax.f32 %v969, 0.0
  %v1034 = vmax.f32 %v970, 0.0
  %v1035 = vmax.f32 %v971, 0.0
  %v1036 = vmax.f32 %v972, 0.0
  %v1037 = vmax.f32 %v973, 0.0
  %v1038 = vmax.f32 %v974, 0.0
  %v1039 = vmax.f32 %v975, 0.0
  %v1040 = vmax.f32 %v976, 0.0
  %v1041 = vmax.f32 %v977, 0.0
  %v1042 = vmax.f32 %v978, 0.0
  %v1043 = vmax.f32 %v979, 0.0
  %v1044 = vmax.f32 %v980, 0.0
  %v1045 = vmax.f32 %v981, 0.0
  %v1046 = vmax.f32 %v982, 0.0
  %v1047 = vmax.f32 %v983, 0.0
  %v1048 = vmax.f32 %v984, 0.0
  %v1049 = vmax.f32 %v985, 0.0
  %v1050 = vmax.f32 %v986, 0.0
  %v1051 = vmax.f32 %v987, 0.0
  %v1052 = vmax.f32 %v988, 0.0
  %v1053 = vmax.f32 %v989, 0.0
  %v1054 = vmax.f32 %v990, 0.0
  %v1055 = vmax.f32 %v991, 0.0
  %v1056 = vmax.f32 %v992, 0.0
  %v1057 = vmax.f32 %v993, 0.0
  %v1058 = vmax.f32 %v994, 0.0
  %v1059 = vmax.f32 %v995, 0.0
  %v1060 = vmax.f32 %v996, 0.0
  %v1061 = vmax.f32 %v997, 0.0
  %v1062 = vmax.f32 %v998, 0.0
  %v1063 = vmax.f32 %v999, 0.0
  %v1064 = vmax.f32 %v1000, 0.0
  %v1065 = vmax.f32 %v1001, 0.0
  %v1066 = vmax.f32 %v1002, 0.0
  %v1067 = vld [vmem:[%s4] sm:$0xff]
  %v1068 = vld [vmem:[%s4 + $0x8] sm:$0xff]
  %v1069 = vld [vmem:[%s4 + $0x10] sm:$0xff]
  %v1070 = vld [vmem:[%s4 + $0x18] sm:$0xff]
  %v1071 = vld [vmem:[%s5] sm:$0x1]
  %v1073 = vperm.slane %v1071, 0
  %v1076 = vsel %vm519, %v1003, 0
  %v1079 = vsel %vm519, %v1004, 0
  %v1082 = vsel %vm519, %v1005, 0
  %v1085 = vsel %vm519, %v1006, 0
  %v1088 = vsel %vm519, %v1007, 0
  %v1091 = vsel %vm519, %v1008, 0
  %v1094 = vsel %vm519, %v1009, 0
  %v1097 = vsel %vm519, %v1010, 0
  %v1100 = vsel %vm519, %v1011, 0
  %v1103 = vsel %vm519, %v1012, 0
  %v1106 = vsel %vm519, %v1013, 0
  %v1109 = vsel %vm519, %v1014, 0
  %v1112 = vsel %vm519, %v1015, 0
  %v1115 = vsel %vm519, %v1016, 0
  %v1118 = vsel %vm519, %v1017, 0
  %v1121 = vsel %vm519, %v1018, 0
  %v1124 = vsel %vm519, %v1019, 0
  %v1127 = vsel %vm519, %v1020, 0
  %v1130 = vsel %vm519, %v1021, 0
  %v1133 = vsel %vm519, %v1022, 0
  %v1136 = vsel %vm519, %v1023, 0
  %v1139 = vsel %vm519, %v1024, 0
  %v1142 = vsel %vm519, %v1025, 0
  %v1145 = vsel %vm519, %v1026, 0
  %v1148 = vsel %vm519, %v1027, 0
  %v1151 = vsel %vm519, %v1028, 0
  %v1154 = vsel %vm519, %v1029, 0
  %v1157 = vsel %vm519, %v1030, 0
  %v1160 = vsel %vm519, %v1031, 0
  %v1163 = vsel %vm519, %v1032, 0
  %v1166 = vsel %vm519, %v1033, 0
  %v1169 = vsel %vm519, %v1034, 0
  %v1172 = vsel %vm519, %v1035, 0
  %v1175 = vsel %vm519, %v1036, 0
  %v1178 = vsel %vm519, %v1037, 0
  %v1181 = vsel %vm519, %v1038, 0
  %v1184 = vsel %vm519, %v1039, 0
  %v1187 = vsel %vm519, %v1040, 0
  %v1190 = vsel %vm519, %v1041, 0
  %v1193 = vsel %vm519, %v1042, 0
  %v1196 = vsel %vm519, %v1043, 0
  %v1199 = vsel %vm519, %v1044, 0
  %v1202 = vsel %vm519, %v1045, 0
  %v1205 = vsel %vm519, %v1046, 0
  %v1208 = vsel %vm519, %v1047, 0
  %v1211 = vsel %vm519, %v1048, 0
  %v1214 = vsel %vm519, %v1049, 0
  %v1217 = vsel %vm519, %v1050, 0
  %v1220 = vsel %vm519, %v1051, 0
  %v1223 = vsel %vm519, %v1052, 0
  %v1226 = vsel %vm519, %v1053, 0
  %v1229 = vsel %vm519, %v1054, 0
  %v1232 = vsel %vm519, %v1055, 0
  %v1235 = vsel %vm519, %v1056, 0
  %v1238 = vsel %vm519, %v1057, 0
  %v1241 = vsel %vm519, %v1058, 0
  %v1244 = vsel %vm519, %v1059, 0
  %v1247 = vsel %vm519, %v1060, 0
  %v1250 = vsel %vm519, %v1061, 0
  %v1253 = vsel %vm519, %v1062, 0
  %v1256 = vsel %vm519, %v1063, 0
  %v1259 = vsel %vm519, %v1064, 0
  %v1262 = vsel %vm519, %v1065, 0
  %v1265 = vsel %vm519, %v1066, 0
  %1267 = vmatpush.msra.mxu0 0.0
  %1268 = vmatpush.msra.mxu0 0.0
  %1269 = vmatpush.msra.mxu0 0.0
  %1270 = vmatpush.msra.mxu0 0.0
  %1271 = vmatpush.msra.mxu0 0.0
  %1272 = vmatpush.msra.mxu0 0.0
  %1273 = vmatpush.msra.mxu0 0.0
  %1274 = vmatpush.msra.mxu0 0.0
  %1275 = vmatpush.msra.mxu0 0.0
  %1276 = vmatpush.msra.mxu0 0.0
  %1277 = vmatpush.msra.mxu0 0.0
  %1278 = vmatpush.msra.mxu0 0.0
  %1279 = vmatpush.msra.mxu0 %v1070
  %1280 = vmatpush.msra.mxu0 %v1069
  %1281 = vmatpush.msra.mxu0 %v1068
  %1282 = vmatpush.msra.mxu0 %v1067
  %1283 = vmatmul.f32.gmra.mxu0 %v1076
  %v1284 = vpop.f32.mrf.mxu0
  %v1285 = vadd.f32 %v1073, %v1284
  %1286 = vmatmul.f32.gmra.mxu0 %v1079
  %v1287 = vpop.f32.mrf.mxu0
  %v1288 = vadd.f32 %v1073, %v1287
  %1289 = vmatmul.f32.gmra.mxu0 %v1082
  %v1290 = vpop.f32.mrf.mxu0
  %v1291 = vadd.f32 %v1073, %v1290
  %1292 = vmatmul.f32.gmra.mxu0 %v1085
  %v1293 = vpop.f32.mrf.mxu0
  %v1294 = vadd.f32 %v1073, %v1293
  %1295 = vmatmul.f32.gmra.mxu0 %v1088
  %v1296 = vpop.f32.mrf.mxu0
  %v1297 = vadd.f32 %v1073, %v1296
  %1298 = vmatmul.f32.gmra.mxu0 %v1091
  %v1299 = vpop.f32.mrf.mxu0
  %v1300 = vadd.f32 %v1073, %v1299
  %1301 = vmatmul.f32.gmra.mxu0 %v1094
  %v1302 = vpop.f32.mrf.mxu0
  %v1303 = vadd.f32 %v1073, %v1302
  %1304 = vmatmul.f32.gmra.mxu0 %v1097
  %v1305 = vpop.f32.mrf.mxu0
  %v1306 = vadd.f32 %v1073, %v1305
  %1307 = vmatmul.f32.gmra.mxu0 %v1100
  %v1308 = vpop.f32.mrf.mxu0
  %v1309 = vadd.f32 %v1073, %v1308
  %1310 = vmatmul.f32.gmra.mxu0 %v1103
  %v1311 = vpop.f32.mrf.mxu0
  %v1312 = vadd.f32 %v1073, %v1311
  %1313 = vmatmul.f32.gmra.mxu0 %v1106
  %v1314 = vpop.f32.mrf.mxu0
  %v1315 = vadd.f32 %v1073, %v1314
  %1316 = vmatmul.f32.gmra.mxu0 %v1109
  %v1317 = vpop.f32.mrf.mxu0
  %v1318 = vadd.f32 %v1073, %v1317
  %1319 = vmatmul.f32.gmra.mxu0 %v1112
  %v1320 = vpop.f32.mrf.mxu0
  %v1321 = vadd.f32 %v1073, %v1320
  %1322 = vmatmul.f32.gmra.mxu0 %v1115
  %v1323 = vpop.f32.mrf.mxu0
  %v1324 = vadd.f32 %v1073, %v1323
  %1325 = vmatmul.f32.gmra.mxu0 %v1118
  %v1326 = vpop.f32.mrf.mxu0
  %v1327 = vadd.f32 %v1073, %v1326
  %1328 = vmatmul.f32.gmra.mxu0 %v1121
  %v1329 = vpop.f32.mrf.mxu0
  %v1330 = vadd.f32 %v1073, %v1329
  %1331 = vmatmul.f32.gmra.mxu0 %v1124
  %v1332 = vpop.f32.mrf.mxu0
  %v1333 = vadd.f32 %v1073, %v1332
  %1334 = vmatmul.f32.gmra.mxu0 %v1127
  %v1335 = vpop.f32.mrf.mxu0
  %v1336 = vadd.f32 %v1073, %v1335
  %1337 = vmatmul.f32.gmra.mxu0 %v1130
  %v1338 = vpop.f32.mrf.mxu0
  %v1339 = vadd.f32 %v1073, %v1338
  %1340 = vmatmul.f32.gmra.mxu0 %v1133
  %v1341 = vpop.f32.mrf.mxu0
  %v1342 = vadd.f32 %v1073, %v1341
  %1343 = vmatmul.f32.gmra.mxu0 %v1136
  %v1344 = vpop.f32.mrf.mxu0
  %v1345 = vadd.f32 %v1073, %v1344
  %1346 = vmatmul.f32.gmra.mxu0 %v1139
  %v1347 = vpop.f32.mrf.mxu0
  %v1348 = vadd.f32 %v1073, %v1347
  %1349 = vmatmul.f32.gmra.mxu0 %v1142
  %v1350 = vpop.f32.mrf.mxu0
  %v1351 = vadd.f32 %v1073, %v1350
  %1352 = vmatmul.f32.gmra.mxu0 %v1145
  %v1353 = vpop.f32.mrf.mxu0
  %v1354 = vadd.f32 %v1073, %v1353
  %1355 = vmatmul.f32.gmra.mxu0 %v1148
  %v1356 = vpop.f32.mrf.mxu0
  %v1357 = vadd.f32 %v1073, %v1356
  %1358 = vmatmul.f32.gmra.mxu0 %v1151
  %v1359 = vpop.f32.mrf.mxu0
  %v1360 = vadd.f32 %v1073, %v1359
  %1361 = vmatmul.f32.gmra.mxu0 %v1154
  %v1362 = vpop.f32.mrf.mxu0
  %v1363 = vadd.f32 %v1073, %v1362
  %1364 = vmatmul.f32.gmra.mxu0 %v1157
  %v1365 = vpop.f32.mrf.mxu0
  %v1366 = vadd.f32 %v1073, %v1365
  %1367 = vmatmul.f32.gmra.mxu0 %v1160
  %v1368 = vpop.f32.mrf.mxu0
  %v1369 = vadd.f32 %v1073, %v1368
  %1370 = vmatmul.f32.gmra.mxu0 %v1163
  %v1371 = vpop.f32.mrf.mxu0
  %v1372 = vadd.f32 %v1073, %v1371
  %1373 = vmatmul.f32.gmra.mxu0 %v1166
  %v1374 = vpop.f32.mrf.mxu0
  %v1375 = vadd.f32 %v1073, %v1374
  %1376 = vmatmul.f32.gmra.mxu0 %v1169
  %v1377 = vpop.f32.mrf.mxu0
  %v1378 = vadd.f32 %v1073, %v1377
  %1379 = vmatmul.f32.gmra.mxu0 %v1172
  %v1380 = vpop.f32.mrf.mxu0
  %v1381 = vadd.f32 %v1073, %v1380
  %1382 = vmatmul.f32.gmra.mxu0 %v1175
  %v1383 = vpop.f32.mrf.mxu0
  %v1384 = vadd.f32 %v1073, %v1383
  %1385 = vmatmul.f32.gmra.mxu0 %v1178
  %v1386 = vpop.f32.mrf.mxu0
  %v1387 = vadd.f32 %v1073, %v1386
  %1388 = vmatmul.f32.gmra.mxu0 %v1181
  %v1389 = vpop.f32.mrf.mxu0
  %v1390 = vadd.f32 %v1073, %v1389
  %1391 = vmatmul.f32.gmra.mxu0 %v1184
  %v1392 = vpop.f32.mrf.mxu0
  %v1393 = vadd.f32 %v1073, %v1392
  %1394 = vmatmul.f32.gmra.mxu0 %v1187
  %v1395 = vpop.f32.mrf.mxu0
  %v1396 = vadd.f32 %v1073, %v1395
  %1397 = vmatmul.f32.gmra.mxu0 %v1190
  %v1398 = vpop.f32.mrf.mxu0
  %v1399 = vadd.f32 %v1073, %v1398
  %1400 = vmatmul.f32.gmra.mxu0 %v1193
  %v1401 = vpop.f32.mrf.mxu0
  %v1402 = vadd.f32 %v1073, %v1401
  %1403 = vmatmul.f32.gmra.mxu0 %v1196
  %v1404 = vpop.f32.mrf.mxu0
  %v1405 = vadd.f32 %v1073, %v1404
  %1406 = vmatmul.f32.gmra.mxu0 %v1199
  %v1407 = vpop.f32.mrf.mxu0
  %v1408 = vadd.f32 %v1073, %v1407
  %1409 = vmatmul.f32.gmra.mxu0 %v1202
  %v1410 = vpop.f32.mrf.mxu0
  %v1411 = vadd.f32 %v1073, %v1410
  %1412 = vmatmul.f32.gmra.mxu0 %v1205
  %v1413 = vpop.f32.mrf.mxu0
  %v1414 = vadd.f32 %v1073, %v1413
  %1415 = vmatmul.f32.gmra.mxu0 %v1208
  %v1416 = vpop.f32.mrf.mxu0
  %v1417 = vadd.f32 %v1073, %v1416
  %1418 = vmatmul.f32.gmra.mxu0 %v1211
  %v1419 = vpop.f32.mrf.mxu0
  %v1420 = vadd.f32 %v1073, %v1419
  %1421 = vmatmul.f32.gmra.mxu0 %v1214
  %v1422 = vpop.f32.mrf.mxu0
  %v1423 = vadd.f32 %v1073, %v1422
  %1424 = vmatmul.f32.gmra.mxu0 %v1217
  %v1425 = vpop.f32.mrf.mxu0
  %v1426 = vadd.f32 %v1073, %v1425
  %1427 = vmatmul.f32.gmra.mxu0 %v1220
  %v1428 = vpop.f32.mrf.mxu0
  %v1429 = vadd.f32 %v1073, %v1428
  %1430 = vmatmul.f32.gmra.mxu0 %v1223
  %v1431 = vpop.f32.mrf.mxu0
  %v1432 = vadd.f32 %v1073, %v1431
  %1433 = vmatmul.f32.gmra.mxu0 %v1226
  %v1434 = vpop.f32.mrf.mxu0
  %v1435 = vadd.f32 %v1073, %v1434
  %1436 = vmatmul.f32.gmra.mxu0 %v1229
  %v1437 = vpop.f32.mrf.mxu0
  %v1438 = vadd.f32 %v1073, %v1437
  %1439 = vmatmul.f32.gmra.mxu0 %v1232
  %v1440 = vpop.f32.mrf.mxu0
  %v1441 = vadd.f32 %v1073, %v1440
  %1442 = vmatmul.f32.gmra.mxu0 %v1235
  %v1443 = vpop.f32.mrf.mxu0
  %v1444 = vadd.f32 %v1073, %v1443
  %1445 = vmatmul.f32.gmra.mxu0 %v1238
  %v1446 = vpop.f32.mrf.mxu0
  %v1447 = vadd.f32 %v1073, %v1446
  %1448 = vmatmul.f32.gmra.mxu0 %v1241
  %v1449 = vpop.f32.mrf.mxu0
  %v1450 = vadd.f32 %v1073, %v1449
  %1451 = vmatmul.f32.gmra.mxu0 %v1244
  %v1452 = vpop.f32.mrf.mxu0
  %v1453 = vadd.f32 %v1073, %v1452
  %1454 = vmatmul.f32.gmra.mxu0 %v1247
  %v1455 = vpop.f32.mrf.mxu0
  %v1456 = vadd.f32 %v1073, %v1455
  %1457 = vmatmul.f32.gmra.mxu0 %v1250
  %v1458 = vpop.f32.mrf.mxu0
  %v1459 = vadd.f32 %v1073, %v1458
  %1460 = vmatmul.f32.gmra.mxu0 %v1253
  %v1461 = vpop.f32.mrf.mxu0
  %v1462 = vadd.f32 %v1073, %v1461
  %1463 = vmatmul.f32.gmra.mxu0 %v1256
  %v1464 = vpop.f32.mrf.mxu0
  %v1465 = vadd.f32 %v1073, %v1464
  %1466 = vmatmul.f32.gmra.mxu0 %v1259
  %v1467 = vpop.f32.mrf.mxu0
  %v1468 = vadd.f32 %v1073, %v1467
  %1469 = vmatmul.f32.gmra.mxu0 %v1262
  %v1470 = vpop.f32.mrf.mxu0
  %v1471 = vadd.f32 %v1073, %v1470
  %1472 = vmatmul.f32.gmra.mxu0 %v1265
  %v1473 = vpop.f32.mrf.mxu0
  %v1474 = vadd.f32 %v1073, %v1473
  %1475 = vdwg.mxu0
  %vm1476 = vcmask 130048
  %1477 = vst.msk [vmem:[%s13] sm:$0xff] %vm1476, %v1285
  %1478 = vst.msk [vmem:[%s13 + $0x8] sm:$0xff] %vm1476, %v1288
  %1479 = vst.msk [vmem:[%s13 + $0x10] sm:$0xff] %vm1476, %v1291
  %1480 = vst.msk [vmem:[%s13 + $0x18] sm:$0xff] %vm1476, %v1294
  %1481 = vst.msk [vmem:[%s13 + $0x20] sm:$0xff] %vm1476, %v1297
  %1482 = vst.msk [vmem:[%s13 + $0x28] sm:$0xff] %vm1476, %v1300
  %1483 = vst.msk [vmem:[%s13 + $0x30] sm:$0xff] %vm1476, %v1303
  %1484 = vst.msk [vmem:[%s13 + $0x38] sm:$0xff] %vm1476, %v1306
  %1485 = vst.msk [vmem:[%s13 + $0x40] sm:$0xff] %vm1476, %v1309
  %1486 = vst.msk [vmem:[%s13 + $0x48] sm:$0xff] %vm1476, %v1312
  %1487 = vst.msk [vmem:[%s13 + $0x50] sm:$0xff] %vm1476, %v1315
  %1488 = vst.msk [vmem:[%s13 + $0x58] sm:$0xff] %vm1476, %v1318
  %1489 = vst.msk [vmem:[%s13 + $0x60] sm:$0xff] %vm1476, %v1321
  %1490 = vst.msk [vmem:[%s13 + $0x68] sm:$0xff] %vm1476, %v1324
  %1491 = vst.msk [vmem:[%s13 + $0x70] sm:$0xff] %vm1476, %v1327
  %1492 = vst.msk [vmem:[%s13 + $0x78] sm:$0xff] %vm1476, %v1330
  %1493 = vst.msk [vmem:[%s13 + $0x80] sm:$0xff] %vm1476, %v1333
  %1494 = vst.msk [vmem:[%s13 + $0x88] sm:$0xff] %vm1476, %v1336
  %1495 = vst.msk [vmem:[%s13 + $0x90] sm:$0xff] %vm1476, %v1339
  %1496 = vst.msk [vmem:[%s13 + $0x98] sm:$0xff] %vm1476, %v1342
  %1497 = vst.msk [vmem:[%s13 + $0xa0] sm:$0xff] %vm1476, %v1345
  %1498 = vst.msk [vmem:[%s13 + $0xa8] sm:$0xff] %vm1476, %v1348
  %1499 = vst.msk [vmem:[%s13 + $0xb0] sm:$0xff] %vm1476, %v1351
  %1500 = vst.msk [vmem:[%s13 + $0xb8] sm:$0xff] %vm1476, %v1354
  %1501 = vst.msk [vmem:[%s13 + $0xc0] sm:$0xff] %vm1476, %v1357
  %1502 = vst.msk [vmem:[%s13 + $0xc8] sm:$0xff] %vm1476, %v1360
  %1503 = vst.msk [vmem:[%s13 + $0xd0] sm:$0xff] %vm1476, %v1363
  %1504 = vst.msk [vmem:[%s13 + $0xd8] sm:$0xff] %vm1476, %v1366
  %1505 = vst.msk [vmem:[%s13 + $0xe0] sm:$0xff] %vm1476, %v1369
  %1506 = vst.msk [vmem:[%s13 + $0xe8] sm:$0xff] %vm1476, %v1372
  %1507 = vst.msk [vmem:[%s13 + $0xf0] sm:$0xff] %vm1476, %v1375
  %1508 = vst.msk [vmem:[%s13 + $0xf8] sm:$0xff] %vm1476, %v1378
  %1509 = vst.msk [vmem:[%s13 + $0x100] sm:$0xff] %vm1476, %v1381
  %1510 = vst.msk [vmem:[%s13 + $0x108] sm:$0xff] %vm1476, %v1384
  %1511 = vst.msk [vmem:[%s13 + $0x110] sm:$0xff] %vm1476, %v1387
  %1512 = vst.msk [vmem:[%s13 + $0x118] sm:$0xff] %vm1476, %v1390
  %1513 = vst.msk [vmem:[%s13 + $0x120] sm:$0xff] %vm1476, %v1393
  %1514 = vst.msk [vmem:[%s13 + $0x128] sm:$0xff] %vm1476, %v1396
  %1515 = vst.msk [vmem:[%s13 + $0x130] sm:$0xff] %vm1476, %v1399
  %1516 = vst.msk [vmem:[%s13 + $0x138] sm:$0xff] %vm1476, %v1402
  %1517 = vst.msk [vmem:[%s13 + $0x140] sm:$0xff] %vm1476, %v1405
  %1518 = vst.msk [vmem:[%s13 + $0x148] sm:$0xff] %vm1476, %v1408
  %1519 = vst.msk [vmem:[%s13 + $0x150] sm:$0xff] %vm1476, %v1411
  %1520 = vst.msk [vmem:[%s13 + $0x158] sm:$0xff] %vm1476, %v1414
  %1521 = vst.msk [vmem:[%s13 + $0x160] sm:$0xff] %vm1476, %v1417
  %1522 = vst.msk [vmem:[%s13 + $0x168] sm:$0xff] %vm1476, %v1420
  %1523 = vst.msk [vmem:[%s13 + $0x170] sm:$0xff] %vm1476, %v1423
  %1524 = vst.msk [vmem:[%s13 + $0x178] sm:$0xff] %vm1476, %v1426
  %1525 = vst.msk [vmem:[%s13 + $0x180] sm:$0xff] %vm1476, %v1429
  %1526 = vst.msk [vmem:[%s13 + $0x188] sm:$0xff] %vm1476, %v1432
  %1527 = vst.msk [vmem:[%s13 + $0x190] sm:$0xff] %vm1476, %v1435
  %1528 = vst.msk [vmem:[%s13 + $0x198] sm:$0xff] %vm1476, %v1438
  %1529 = vst.msk [vmem:[%s13 + $0x1a0] sm:$0xff] %vm1476, %v1441
  %1530 = vst.msk [vmem:[%s13 + $0x1a8] sm:$0xff] %vm1476, %v1444
  %1531 = vst.msk [vmem:[%s13 + $0x1b0] sm:$0xff] %vm1476, %v1447
  %1532 = vst.msk [vmem:[%s13 + $0x1b8] sm:$0xff] %vm1476, %v1450
  %1533 = vst.msk [vmem:[%s13 + $0x1c0] sm:$0xff] %vm1476, %v1453
  %1534 = vst.msk [vmem:[%s13 + $0x1c8] sm:$0xff] %vm1476, %v1456
  %1535 = vst.msk [vmem:[%s13 + $0x1d0] sm:$0xff] %vm1476, %v1459
  %1536 = vst.msk [vmem:[%s13 + $0x1d8] sm:$0xff] %vm1476, %v1462
  %1537 = vst.msk [vmem:[%s13 + $0x1e0] sm:$0xff] %vm1476, %v1465
  %1538 = vst.msk [vmem:[%s13 + $0x1e8] sm:$0xff] %vm1476, %v1468
  %1539 = vst.msk [vmem:[%s13 + $0x1f0] sm:$0xff] %vm1476, %v1471
  %1540 = vst.msk [vmem:[%s13 + $0x1f8] sm:$0xff] %vm1476, %v1474
  %v1541 = vld [vmem:[%s6] sm:$0xff]
  %v1542 = vld [vmem:[%s6 + $0x8] sm:$0xff]
  %v1544 = vsel %vm1476, %v1285, 0
  %v1547 = vsel %vm1476, %v1288, 0
  %v1550 = vsel %vm1476, %v1291, 0
  %v1553 = vsel %vm1476, %v1294, 0
  %v1556 = vsel %vm1476, %v1297, 0
  %v1559 = vsel %vm1476, %v1300, 0
  %v1562 = vsel %vm1476, %v1303, 0
  %v1565 = vsel %vm1476, %v1306, 0
  %v1568 = vsel %vm1476, %v1309, 0
  %v1571 = vsel %vm1476, %v1312, 0
  %v1574 = vsel %vm1476, %v1315, 0
  %v1577 = vsel %vm1476, %v1318, 0
  %v1580 = vsel %vm1476, %v1321, 0
  %v1583 = vsel %vm1476, %v1324, 0
  %v1586 = vsel %vm1476, %v1327, 0
  %v1589 = vsel %vm1476, %v1330, 0
  %v1592 = vsel %vm1476, %v1333, 0
  %v1595 = vsel %vm1476, %v1336, 0
  %v1598 = vsel %vm1476, %v1339, 0
  %v1601 = vsel %vm1476, %v1342, 0
  %v1604 = vsel %vm1476, %v1345, 0
  %v1607 = vsel %vm1476, %v1348, 0
  %v1610 = vsel %vm1476, %v1351, 0
  %v1613 = vsel %vm1476, %v1354, 0
  %v1616 = vsel %vm1476, %v1357, 0
  %v1619 = vsel %vm1476, %v1360, 0
  %v1622 = vsel %vm1476, %v1363, 0
  %v1625 = vsel %vm1476, %v1366, 0
  %v1628 = vsel %vm1476, %v1369, 0
  %v1631 = vsel %vm1476, %v1372, 0
  %v1634 = vsel %vm1476, %v1375, 0
  %v1637 = vsel %vm1476, %v1378, 0
  %v1640 = vsel %vm1476, %v1381, 0
  %v1643 = vsel %vm1476, %v1384, 0
  %v1646 = vsel %vm1476, %v1387, 0
  %v1649 = vsel %vm1476, %v1390, 0
  %v1652 = vsel %vm1476, %v1393, 0
  %v1655 = vsel %vm1476, %v1396, 0
  %v1658 = vsel %vm1476, %v1399, 0
  %v1661 = vsel %vm1476, %v1402, 0
  %v1664 = vsel %vm1476, %v1405, 0
  %v1667 = vsel %vm1476, %v1408, 0
  %v1670 = vsel %vm1476, %v1411, 0
  %v1673 = vsel %vm1476, %v1414, 0
  %v1676 = vsel %vm1476, %v1417, 0
  %v1679 = vsel %vm1476, %v1420, 0
  %v1682 = vsel %vm1476, %v1423, 0
  %v1685 = vsel %vm1476, %v1426, 0
  %v1688 = vsel %vm1476, %v1429, 0
  %v1691 = vsel %vm1476, %v1432, 0
  %v1694 = vsel %vm1476, %v1435, 0
  %v1697 = vsel %vm1476, %v1438, 0
  %v1700 = vsel %vm1476, %v1441, 0
  %v1703 = vsel %vm1476, %v1444, 0
  %v1706 = vsel %vm1476, %v1447, 0
  %v1709 = vsel %vm1476, %v1450, 0
  %v1712 = vsel %vm1476, %v1453, 0
  %v1715 = vsel %vm1476, %v1456, 0
  %v1718 = vsel %vm1476, %v1459, 0
  %v1721 = vsel %vm1476, %v1462, 0
  %v1724 = vsel %vm1476, %v1465, 0
  %v1727 = vsel %vm1476, %v1468, 0
  %v1730 = vsel %vm1476, %v1471, 0
  %v1733 = vsel %vm1476, %v1474, 0
  %1735 = vmatpush.msra.mxu0 0.0
  %1736 = vmatpush.msra.mxu0 0.0
  %1737 = vmatpush.msra.mxu0 0.0
  %1738 = vmatpush.msra.mxu0 0.0
  %1739 = vmatpush.msra.mxu0 0.0
  %1740 = vmatpush.msra.mxu0 0.0
  %1741 = vmatpush.msra.mxu0 0.0
  %1742 = vmatpush.msra.mxu0 0.0
  %1743 = vmatpush.msra.mxu0 0.0
  %1744 = vmatpush.msra.mxu0 0.0
  %1745 = vmatpush.msra.mxu0 0.0
  %1746 = vmatpush.msra.mxu0 0.0
  %1747 = vmatpush.msra.mxu0 0.0
  %1748 = vmatpush.msra.mxu0 0.0
  %1749 = vmatpush.msra.mxu0 %v1542
  %1750 = vmatpush.msra.mxu0 %v1541
  %1751 = vmatmul.f32.gmra.mxu0 %v1544
  %v1752 = vpop.f32.mrf.mxu0
  %v1753 = vadd.f32 0.0, %v1752
  %1754 = vmatmul.f32.gmra.mxu0 %v1547
  %v1755 = vpop.f32.mrf.mxu0
  %v1756 = vadd.f32 0.0, %v1755
  %1757 = vmatmul.f32.gmra.mxu0 %v1550
  %v1758 = vpop.f32.mrf.mxu0
  %v1759 = vadd.f32 0.0, %v1758
  %1760 = vmatmul.f32.gmra.mxu0 %v1553
  %v1761 = vpop.f32.mrf.mxu0
  %v1762 = vadd.f32 0.0, %v1761
  %1763 = vmatmul.f32.gmra.mxu0 %v1556
  %v1764 = vpop.f32.mrf.mxu0
  %v1765 = vadd.f32 0.0, %v1764
  %1766 = vmatmul.f32.gmra.mxu0 %v1559
  %v1767 = vpop.f32.mrf.mxu0
  %v1768 = vadd.f32 0.0, %v1767
  %1769 = vmatmul.f32.gmra.mxu0 %v1562
  %v1770 = vpop.f32.mrf.mxu0
  %v1771 = vadd.f32 0.0, %v1770
  %1772 = vmatmul.f32.gmra.mxu0 %v1565
  %v1773 = vpop.f32.mrf.mxu0
  %v1774 = vadd.f32 0.0, %v1773
  %1775 = vmatmul.f32.gmra.mxu0 %v1568
  %v1776 = vpop.f32.mrf.mxu0
  %v1777 = vadd.f32 0.0, %v1776
  %1778 = vmatmul.f32.gmra.mxu0 %v1571
  %v1779 = vpop.f32.mrf.mxu0
  %v1780 = vadd.f32 0.0, %v1779
  %1781 = vmatmul.f32.gmra.mxu0 %v1574
  %v1782 = vpop.f32.mrf.mxu0
  %v1783 = vadd.f32 0.0, %v1782
  %1784 = vmatmul.f32.gmra.mxu0 %v1577
  %v1785 = vpop.f32.mrf.mxu0
  %v1786 = vadd.f32 0.0, %v1785
  %1787 = vmatmul.f32.gmra.mxu0 %v1580
  %v1788 = vpop.f32.mrf.mxu0
  %v1789 = vadd.f32 0.0, %v1788
  %1790 = vmatmul.f32.gmra.mxu0 %v1583
  %v1791 = vpop.f32.mrf.mxu0
  %v1792 = vadd.f32 0.0, %v1791
  %1793 = vmatmul.f32.gmra.mxu0 %v1586
  %v1794 = vpop.f32.mrf.mxu0
  %v1795 = vadd.f32 0.0, %v1794
  %1796 = vmatmul.f32.gmra.mxu0 %v1589
  %v1797 = vpop.f32.mrf.mxu0
  %v1798 = vadd.f32 0.0, %v1797
  %1799 = vmatmul.f32.gmra.mxu0 %v1592
  %v1800 = vpop.f32.mrf.mxu0
  %v1801 = vadd.f32 0.0, %v1800
  %1802 = vmatmul.f32.gmra.mxu0 %v1595
  %v1803 = vpop.f32.mrf.mxu0
  %v1804 = vadd.f32 0.0, %v1803
  %1805 = vmatmul.f32.gmra.mxu0 %v1598
  %v1806 = vpop.f32.mrf.mxu0
  %v1807 = vadd.f32 0.0, %v1806
  %1808 = vmatmul.f32.gmra.mxu0 %v1601
  %v1809 = vpop.f32.mrf.mxu0
  %v1810 = vadd.f32 0.0, %v1809
  %1811 = vmatmul.f32.gmra.mxu0 %v1604
  %v1812 = vpop.f32.mrf.mxu0
  %v1813 = vadd.f32 0.0, %v1812
  %1814 = vmatmul.f32.gmra.mxu0 %v1607
  %v1815 = vpop.f32.mrf.mxu0
  %v1816 = vadd.f32 0.0, %v1815
  %1817 = vmatmul.f32.gmra.mxu0 %v1610
  %v1818 = vpop.f32.mrf.mxu0
  %v1819 = vadd.f32 0.0, %v1818
  %1820 = vmatmul.f32.gmra.mxu0 %v1613
  %v1821 = vpop.f32.mrf.mxu0
  %v1822 = vadd.f32 0.0, %v1821
  %1823 = vmatmul.f32.gmra.mxu0 %v1616
  %v1824 = vpop.f32.mrf.mxu0
  %v1825 = vadd.f32 0.0, %v1824
  %1826 = vmatmul.f32.gmra.mxu0 %v1619
  %v1827 = vpop.f32.mrf.mxu0
  %v1828 = vadd.f32 0.0, %v1827
  %1829 = vmatmul.f32.gmra.mxu0 %v1622
  %v1830 = vpop.f32.mrf.mxu0
  %v1831 = vadd.f32 0.0, %v1830
  %1832 = vmatmul.f32.gmra.mxu0 %v1625
  %v1833 = vpop.f32.mrf.mxu0
  %v1834 = vadd.f32 0.0, %v1833
  %1835 = vmatmul.f32.gmra.mxu0 %v1628
  %v1836 = vpop.f32.mrf.mxu0
  %v1837 = vadd.f32 0.0, %v1836
  %1838 = vmatmul.f32.gmra.mxu0 %v1631
  %v1839 = vpop.f32.mrf.mxu0
  %v1840 = vadd.f32 0.0, %v1839
  %1841 = vmatmul.f32.gmra.mxu0 %v1634
  %v1842 = vpop.f32.mrf.mxu0
  %v1843 = vadd.f32 0.0, %v1842
  %1844 = vmatmul.f32.gmra.mxu0 %v1637
  %v1845 = vpop.f32.mrf.mxu0
  %v1846 = vadd.f32 0.0, %v1845
  %1847 = vmatmul.f32.gmra.mxu0 %v1640
  %v1848 = vpop.f32.mrf.mxu0
  %v1849 = vadd.f32 0.0, %v1848
  %1850 = vmatmul.f32.gmra.mxu0 %v1643
  %v1851 = vpop.f32.mrf.mxu0
  %v1852 = vadd.f32 0.0, %v1851
  %1853 = vmatmul.f32.gmra.mxu0 %v1646
  %v1854 = vpop.f32.mrf.mxu0
  %v1855 = vadd.f32 0.0, %v1854
  %1856 = vmatmul.f32.gmra.mxu0 %v1649
  %v1857 = vpop.f32.mrf.mxu0
  %v1858 = vadd.f32 0.0, %v1857
  %1859 = vmatmul.f32.gmra.mxu0 %v1652
  %v1860 = vpop.f32.mrf.mxu0
  %v1861 = vadd.f32 0.0, %v1860
  %1862 = vmatmul.f32.gmra.mxu0 %v1655
  %v1863 = vpop.f32.mrf.mxu0
  %v1864 = vadd.f32 0.0, %v1863
  %1865 = vmatmul.f32.gmra.mxu0 %v1658
  %v1866 = vpop.f32.mrf.mxu0
  %v1867 = vadd.f32 0.0, %v1866
  %1868 = vmatmul.f32.gmra.mxu0 %v1661
  %v1869 = vpop.f32.mrf.mxu0
  %v1870 = vadd.f32 0.0, %v1869
  %1871 = vmatmul.f32.gmra.mxu0 %v1664
  %v1872 = vpop.f32.mrf.mxu0
  %v1873 = vadd.f32 0.0, %v1872
  %1874 = vmatmul.f32.gmra.mxu0 %v1667
  %v1875 = vpop.f32.mrf.mxu0
  %v1876 = vadd.f32 0.0, %v1875
  %1877 = vmatmul.f32.gmra.mxu0 %v1670
  %v1878 = vpop.f32.mrf.mxu0
  %v1879 = vadd.f32 0.0, %v1878
  %1880 = vmatmul.f32.gmra.mxu0 %v1673
  %v1881 = vpop.f32.mrf.mxu0
  %v1882 = vadd.f32 0.0, %v1881
  %1883 = vmatmul.f32.gmra.mxu0 %v1676
  %v1884 = vpop.f32.mrf.mxu0
  %v1885 = vadd.f32 0.0, %v1884
  %1886 = vmatmul.f32.gmra.mxu0 %v1679
  %v1887 = vpop.f32.mrf.mxu0
  %v1888 = vadd.f32 0.0, %v1887
  %1889 = vmatmul.f32.gmra.mxu0 %v1682
  %v1890 = vpop.f32.mrf.mxu0
  %v1891 = vadd.f32 0.0, %v1890
  %1892 = vmatmul.f32.gmra.mxu0 %v1685
  %v1893 = vpop.f32.mrf.mxu0
  %v1894 = vadd.f32 0.0, %v1893
  %1895 = vmatmul.f32.gmra.mxu0 %v1688
  %v1896 = vpop.f32.mrf.mxu0
  %v1897 = vadd.f32 0.0, %v1896
  %1898 = vmatmul.f32.gmra.mxu0 %v1691
  %v1899 = vpop.f32.mrf.mxu0
  %v1900 = vadd.f32 0.0, %v1899
  %1901 = vmatmul.f32.gmra.mxu0 %v1694
  %v1902 = vpop.f32.mrf.mxu0
  %v1903 = vadd.f32 0.0, %v1902
  %1904 = vmatmul.f32.gmra.mxu0 %v1697
  %v1905 = vpop.f32.mrf.mxu0
  %v1906 = vadd.f32 0.0, %v1905
  %1907 = vmatmul.f32.gmra.mxu0 %v1700
  %v1908 = vpop.f32.mrf.mxu0
  %v1909 = vadd.f32 0.0, %v1908
  %1910 = vmatmul.f32.gmra.mxu0 %v1703
  %v1911 = vpop.f32.mrf.mxu0
  %v1912 = vadd.f32 0.0, %v1911
  %1913 = vmatmul.f32.gmra.mxu0 %v1706
  %v1914 = vpop.f32.mrf.mxu0
  %v1915 = vadd.f32 0.0, %v1914
  %1916 = vmatmul.f32.gmra.mxu0 %v1709
  %v1917 = vpop.f32.mrf.mxu0
  %v1918 = vadd.f32 0.0, %v1917
  %1919 = vmatmul.f32.gmra.mxu0 %v1712
  %v1920 = vpop.f32.mrf.mxu0
  %v1921 = vadd.f32 0.0, %v1920
  %1922 = vmatmul.f32.gmra.mxu0 %v1715
  %v1923 = vpop.f32.mrf.mxu0
  %v1924 = vadd.f32 0.0, %v1923
  %1925 = vmatmul.f32.gmra.mxu0 %v1718
  %v1926 = vpop.f32.mrf.mxu0
  %v1927 = vadd.f32 0.0, %v1926
  %1928 = vmatmul.f32.gmra.mxu0 %v1721
  %v1929 = vpop.f32.mrf.mxu0
  %v1930 = vadd.f32 0.0, %v1929
  %1931 = vmatmul.f32.gmra.mxu0 %v1724
  %v1932 = vpop.f32.mrf.mxu0
  %v1933 = vadd.f32 0.0, %v1932
  %1934 = vmatmul.f32.gmra.mxu0 %v1727
  %v1935 = vpop.f32.mrf.mxu0
  %v1936 = vadd.f32 0.0, %v1935
  %1937 = vmatmul.f32.gmra.mxu0 %v1730
  %v1938 = vpop.f32.mrf.mxu0
  %v1939 = vadd.f32 0.0, %v1938
  %1940 = vmatmul.f32.gmra.mxu0 %v1733
  %v1941 = vpop.f32.mrf.mxu0
  %v1942 = vadd.f32 0.0, %v1941
  %1943 = vdwg.mxu0
  %v1944 = vld [vmem:[%s7] sm:$0x1]
  %v1945 = vld [vmem:[%s8] sm:$0x1]
  %v1946 = vsel %vm519, %v1753, 0.0
  %v1947 = vsel %vm519, %v1756, 0.0
  %v1948 = vadd.f32 %v1946, %v1947
  %v1949 = vsel %vm519, %v1759, 0.0
  %v1950 = vadd.f32 %v1948, %v1949
  %v1951 = vsel %vm519, %v1762, 0.0
  %v1952 = vadd.f32 %v1950, %v1951
  %v1953 = vsel %vm519, %v1765, 0.0
  %v1954 = vadd.f32 %v1952, %v1953
  %v1955 = vsel %vm519, %v1768, 0.0
  %v1956 = vadd.f32 %v1954, %v1955
  %v1957 = vsel %vm519, %v1771, 0.0
  %v1958 = vadd.f32 %v1956, %v1957
  %v1959 = vsel %vm519, %v1774, 0.0
  %v1960 = vadd.f32 %v1958, %v1959
  %v1961 = vsel %vm519, %v1777, 0.0
  %v1962 = vadd.f32 %v1960, %v1961
  %v1963 = vsel %vm519, %v1780, 0.0
  %v1964 = vadd.f32 %v1962, %v1963
  %v1965 = vsel %vm519, %v1783, 0.0
  %v1966 = vadd.f32 %v1964, %v1965
  %v1967 = vsel %vm519, %v1786, 0.0
  %v1968 = vadd.f32 %v1966, %v1967
  %v1969 = vsel %vm519, %v1789, 0.0
  %v1970 = vadd.f32 %v1968, %v1969
  %v1971 = vsel %vm519, %v1792, 0.0
  %v1972 = vadd.f32 %v1970, %v1971
  %v1973 = vsel %vm519, %v1795, 0.0
  %v1974 = vadd.f32 %v1972, %v1973
  %v1975 = vsel %vm519, %v1798, 0.0
  %v1976 = vadd.f32 %v1974, %v1975
  %v1977 = vsel %vm519, %v1801, 0.0
  %v1978 = vadd.f32 %v1976, %v1977
  %v1979 = vsel %vm519, %v1804, 0.0
  %v1980 = vadd.f32 %v1978, %v1979
  %v1981 = vsel %vm519, %v1807, 0.0
  %v1982 = vadd.f32 %v1980, %v1981
  %v1983 = vsel %vm519, %v1810, 0.0
  %v1984 = vadd.f32 %v1982, %v1983
  %v1985 = vsel %vm519, %v1813, 0.0
  %v1986 = vadd.f32 %v1984, %v1985
  %v1987 = vsel %vm519, %v1816, 0.0
  %v1988 = vadd.f32 %v1986, %v1987
  %v1989 = vsel %vm519, %v1819, 0.0
  %v1990 = vadd.f32 %v1988, %v1989
  %v1991 = vsel %vm519, %v1822, 0.0
  %v1992 = vadd.f32 %v1990, %v1991
  %v1993 = vsel %vm519, %v1825, 0.0
  %v1994 = vadd.f32 %v1992, %v1993
  %v1995 = vsel %vm519, %v1828, 0.0
  %v1996 = vadd.f32 %v1994, %v1995
  %v1997 = vsel %vm519, %v1831, 0.0
  %v1998 = vadd.f32 %v1996, %v1997
  %v1999 = vsel %vm519, %v1834, 0.0
  %v2000 = vadd.f32 %v1998, %v1999
  %v2001 = vsel %vm519, %v1837, 0.0
  %v2002 = vadd.f32 %v2000, %v2001
  %v2003 = vsel %vm519, %v1840, 0.0
  %v2004 = vadd.f32 %v2002, %v2003
  %v2005 = vsel %vm519, %v1843, 0.0
  %v2006 = vadd.f32 %v2004, %v2005
  %v2007 = vsel %vm519, %v1846, 0.0
  %v2008 = vadd.f32 %v2006, %v2007
  %v2009 = vsel %vm519, %v1849, 0.0
  %v2010 = vadd.f32 %v2008, %v2009
  %v2011 = vsel %vm519, %v1852, 0.0
  %v2012 = vadd.f32 %v2010, %v2011
  %v2013 = vsel %vm519, %v1855, 0.0
  %v2014 = vadd.f32 %v2012, %v2013
  %v2015 = vsel %vm519, %v1858, 0.0
  %v2016 = vadd.f32 %v2014, %v2015
  %v2017 = vsel %vm519, %v1861, 0.0
  %v2018 = vadd.f32 %v2016, %v2017
  %v2019 = vsel %vm519, %v1864, 0.0
  %v2020 = vadd.f32 %v2018, %v2019
  %v2021 = vsel %vm519, %v1867, 0.0
  %v2022 = vadd.f32 %v2020, %v2021
  %v2023 = vsel %vm519, %v1870, 0.0
  %v2024 = vadd.f32 %v2022, %v2023
  %v2025 = vsel %vm519, %v1873, 0.0
  %v2026 = vadd.f32 %v2024, %v2025
  %v2027 = vsel %vm519, %v1876, 0.0
  %v2028 = vadd.f32 %v2026, %v2027
  %v2029 = vsel %vm519, %v1879, 0.0
  %v2030 = vadd.f32 %v2028, %v2029
  %v2031 = vsel %vm519, %v1882, 0.0
  %v2032 = vadd.f32 %v2030, %v2031
  %v2033 = vsel %vm519, %v1885, 0.0
  %v2034 = vadd.f32 %v2032, %v2033
  %v2035 = vsel %vm519, %v1888, 0.0
  %v2036 = vadd.f32 %v2034, %v2035
  %v2037 = vsel %vm519, %v1891, 0.0
  %v2038 = vadd.f32 %v2036, %v2037
  %v2039 = vsel %vm519, %v1894, 0.0
  %v2040 = vadd.f32 %v2038, %v2039
  %v2041 = vsel %vm519, %v1897, 0.0
  %v2042 = vadd.f32 %v2040, %v2041
  %v2043 = vsel %vm519, %v1900, 0.0
  %v2044 = vadd.f32 %v2042, %v2043
  %v2045 = vsel %vm519, %v1903, 0.0
  %v2046 = vadd.f32 %v2044, %v2045
  %v2047 = vsel %vm519, %v1906, 0.0
  %v2048 = vadd.f32 %v2046, %v2047
  %v2049 = vsel %vm519, %v1909, 0.0
  %v2050 = vadd.f32 %v2048, %v2049
  %v2051 = vsel %vm519, %v1912, 0.0
  %v2052 = vadd.f32 %v2050, %v2051
  %v2053 = vsel %vm519, %v1915, 0.0
  %v2054 = vadd.f32 %v2052, %v2053
  %v2055 = vsel %vm519, %v1918, 0.0
  %v2056 = vadd.f32 %v2054, %v2055
  %v2057 = vsel %vm519, %v1921, 0.0
  %v2058 = vadd.f32 %v2056, %v2057
  %v2059 = vsel %vm519, %v1924, 0.0
  %v2060 = vadd.f32 %v2058, %v2059
  %v2061 = vsel %vm519, %v1927, 0.0
  %v2062 = vadd.f32 %v2060, %v2061
  %v2063 = vsel %vm519, %v1930, 0.0
  %v2064 = vadd.f32 %v2062, %v2063
  %v2065 = vsel %vm519, %v1933, 0.0
  %v2066 = vadd.f32 %v2064, %v2065
  %v2067 = vsel %vm519, %v1936, 0.0
  %v2068 = vadd.f32 %v2066, %v2067
  %v2069 = vsel %vm519, %v1939, 0.0
  %v2070 = vadd.f32 %v2068, %v2069
  %v2071 = vsel %vm519, %v1942, 0.0
  %v2072 = vadd.f32 %v2070, %v2071
  %v2073 = vrot.slane %v2072, 4
  %v2074 = vadd.f32 %v2072, %v2073
  %v2075 = vrot.slane %v2074, 2
  %v2076 = vadd.f32 %v2074, %v2075
  %v2077 = vrot.slane %v2076, 1
  %v2078 = vadd.f32 %v2076, %v2077
  %v2079 = vmul.f32 %v1753, %v1753
  %v2080 = vmul.f32 %v1756, %v1756
  %v2081 = vmul.f32 %v1759, %v1759
  %v2082 = vmul.f32 %v1762, %v1762
  %v2083 = vmul.f32 %v1765, %v1765
  %v2084 = vmul.f32 %v1768, %v1768
  %v2085 = vmul.f32 %v1771, %v1771
  %v2086 = vmul.f32 %v1774, %v1774
  %v2087 = vmul.f32 %v1777, %v1777
  %v2088 = vmul.f32 %v1780, %v1780
  %v2089 = vmul.f32 %v1783, %v1783
  %v2090 = vmul.f32 %v1786, %v1786
  %v2091 = vmul.f32 %v1789, %v1789
  %v2092 = vmul.f32 %v1792, %v1792
  %v2093 = vmul.f32 %v1795, %v1795
  %v2094 = vmul.f32 %v1798, %v1798
  %v2095 = vmul.f32 %v1801, %v1801
  %v2096 = vmul.f32 %v1804, %v1804
  %v2097 = vmul.f32 %v1807, %v1807
  %v2098 = vmul.f32 %v1810, %v1810
  %v2099 = vmul.f32 %v1813, %v1813
  %v2100 = vmul.f32 %v1816, %v1816
  %v2101 = vmul.f32 %v1819, %v1819
  %v2102 = vmul.f32 %v1822, %v1822
  %v2103 = vmul.f32 %v1825, %v1825
  %v2104 = vmul.f32 %v1828, %v1828
  %v2105 = vmul.f32 %v1831, %v1831
  %v2106 = vmul.f32 %v1834, %v1834
  %v2107 = vmul.f32 %v1837, %v1837
  %v2108 = vmul.f32 %v1840, %v1840
  %v2109 = vmul.f32 %v1843, %v1843
  %v2110 = vmul.f32 %v1846, %v1846
  %v2111 = vmul.f32 %v1849, %v1849
  %v2112 = vmul.f32 %v1852, %v1852
  %v2113 = vmul.f32 %v1855, %v1855
  %v2114 = vmul.f32 %v1858, %v1858
  %v2115 = vmul.f32 %v1861, %v1861
  %v2116 = vmul.f32 %v1864, %v1864
  %v2117 = vmul.f32 %v1867, %v1867
  %v2118 = vmul.f32 %v1870, %v1870
  %v2119 = vmul.f32 %v1873, %v1873
  %v2120 = vmul.f32 %v1876, %v1876
  %v2121 = vmul.f32 %v1879, %v1879
  %v2122 = vmul.f32 %v1882, %v1882
  %v2123 = vmul.f32 %v1885, %v1885
  %v2124 = vmul.f32 %v1888, %v1888
  %v2125 = vmul.f32 %v1891, %v1891
  %v2126 = vmul.f32 %v1894, %v1894
  %v2127 = vmul.f32 %v1897, %v1897
  %v2128 = vmul.f32 %v1900, %v1900
  %v2129 = vmul.f32 %v1903, %v1903
  %v2130 = vmul.f32 %v1906, %v1906
  %v2131 = vmul.f32 %v1909, %v1909
  %v2132 = vmul.f32 %v1912, %v1912
  %v2133 = vmul.f32 %v1915, %v1915
  %v2134 = vmul.f32 %v1918, %v1918
  %v2135 = vmul.f32 %v1921, %v1921
  %v2136 = vmul.f32 %v1924, %v1924
  %v2137 = vmul.f32 %v1927, %v1927
  %v2138 = vmul.f32 %v1930, %v1930
  %v2139 = vmul.f32 %v1933, %v1933
  %v2140 = vmul.f32 %v1936, %v1936
  %v2141 = vmul.f32 %v1939, %v1939
  %v2142 = vmul.f32 %v1942, %v1942
  %v2143 = vsel %vm519, %v2079, 0.0
  %v2144 = vsel %vm519, %v2080, 0.0
  %v2145 = vadd.f32 %v2143, %v2144
  %v2146 = vsel %vm519, %v2081, 0.0
  %v2147 = vadd.f32 %v2145, %v2146
  %v2148 = vsel %vm519, %v2082, 0.0
  %v2149 = vadd.f32 %v2147, %v2148
  %v2150 = vsel %vm519, %v2083, 0.0
  %v2151 = vadd.f32 %v2149, %v2150
  %v2152 = vsel %vm519, %v2084, 0.0
  %v2153 = vadd.f32 %v2151, %v2152
  %v2154 = vsel %vm519, %v2085, 0.0
  %v2155 = vadd.f32 %v2153, %v2154
  %v2156 = vsel %vm519, %v2086, 0.0
  %v2157 = vadd.f32 %v2155, %v2156
  %v2158 = vsel %vm519, %v2087, 0.0
  %v2159 = vadd.f32 %v2157, %v2158
  %v2160 = vsel %vm519, %v2088, 0.0
  %v2161 = vadd.f32 %v2159, %v2160
  %v2162 = vsel %vm519, %v2089, 0.0
  %v2163 = vadd.f32 %v2161, %v2162
  %v2164 = vsel %vm519, %v2090, 0.0
  %v2165 = vadd.f32 %v2163, %v2164
  %v2166 = vsel %vm519, %v2091, 0.0
  %v2167 = vadd.f32 %v2165, %v2166
  %v2168 = vsel %vm519, %v2092, 0.0
  %v2169 = vadd.f32 %v2167, %v2168
  %v2170 = vsel %vm519, %v2093, 0.0
  %v2171 = vadd.f32 %v2169, %v2170
  %v2172 = vsel %vm519, %v2094, 0.0
  %v2173 = vadd.f32 %v2171, %v2172
  %v2174 = vsel %vm519, %v2095, 0.0
  %v2175 = vadd.f32 %v2173, %v2174
  %v2176 = vsel %vm519, %v2096, 0.0
  %v2177 = vadd.f32 %v2175, %v2176
  %v2178 = vsel %vm519, %v2097, 0.0
  %v2179 = vadd.f32 %v2177, %v2178
  %v2180 = vsel %vm519, %v2098, 0.0
  %v2181 = vadd.f32 %v2179, %v2180
  %v2182 = vsel %vm519, %v2099, 0.0
  %v2183 = vadd.f32 %v2181, %v2182
  %v2184 = vsel %vm519, %v2100, 0.0
  %v2185 = vadd.f32 %v2183, %v2184
  %v2186 = vsel %vm519, %v2101, 0.0
  %v2187 = vadd.f32 %v2185, %v2186
  %v2188 = vsel %vm519, %v2102, 0.0
  %v2189 = vadd.f32 %v2187, %v2188
  %v2190 = vsel %vm519, %v2103, 0.0
  %v2191 = vadd.f32 %v2189, %v2190
  %v2192 = vsel %vm519, %v2104, 0.0
  %v2193 = vadd.f32 %v2191, %v2192
  %v2194 = vsel %vm519, %v2105, 0.0
  %v2195 = vadd.f32 %v2193, %v2194
  %v2196 = vsel %vm519, %v2106, 0.0
  %v2197 = vadd.f32 %v2195, %v2196
  %v2198 = vsel %vm519, %v2107, 0.0
  %v2199 = vadd.f32 %v2197, %v2198
  %v2200 = vsel %vm519, %v2108, 0.0
  %v2201 = vadd.f32 %v2199, %v2200
  %v2202 = vsel %vm519, %v2109, 0.0
  %v2203 = vadd.f32 %v2201, %v2202
  %v2204 = vsel %vm519, %v2110, 0.0
  %v2205 = vadd.f32 %v2203, %v2204
  %v2206 = vsel %vm519, %v2111, 0.0
  %v2207 = vadd.f32 %v2205, %v2206
  %v2208 = vsel %vm519, %v2112, 0.0
  %v2209 = vadd.f32 %v2207, %v2208
  %v2210 = vsel %vm519, %v2113, 0.0
  %v2211 = vadd.f32 %v2209, %v2210
  %v2212 = vsel %vm519, %v2114, 0.0
  %v2213 = vadd.f32 %v2211, %v2212
  %v2214 = vsel %vm519, %v2115, 0.0
  %v2215 = vadd.f32 %v2213, %v2214
  %v2216 = vsel %vm519, %v2116, 0.0
  %v2217 = vadd.f32 %v2215, %v2216
  %v2218 = vsel %vm519, %v2117, 0.0
  %v2219 = vadd.f32 %v2217, %v2218
  %v2220 = vsel %vm519, %v2118, 0.0
  %v2221 = vadd.f32 %v2219, %v2220
  %v2222 = vsel %vm519, %v2119, 0.0
  %v2223 = vadd.f32 %v2221, %v2222
  %v2224 = vsel %vm519, %v2120, 0.0
  %v2225 = vadd.f32 %v2223, %v2224
  %v2226 = vsel %vm519, %v2121, 0.0
  %v2227 = vadd.f32 %v2225, %v2226
  %v2228 = vsel %vm519, %v2122, 0.0
  %v2229 = vadd.f32 %v2227, %v2228
  %v2230 = vsel %vm519, %v2123, 0.0
  %v2231 = vadd.f32 %v2229, %v2230
  %v2232 = vsel %vm519, %v2124, 0.0
  %v2233 = vadd.f32 %v2231, %v2232
  %v2234 = vsel %vm519, %v2125, 0.0
  %v2235 = vadd.f32 %v2233, %v2234
  %v2236 = vsel %vm519, %v2126, 0.0
  %v2237 = vadd.f32 %v2235, %v2236
  %v2238 = vsel %vm519, %v2127, 0.0
  %v2239 = vadd.f32 %v2237, %v2238
  %v2240 = vsel %vm519, %v2128, 0.0
  %v2241 = vadd.f32 %v2239, %v2240
  %v2242 = vsel %vm519, %v2129, 0.0
  %v2243 = vadd.f32 %v2241, %v2242
  %v2244 = vsel %vm519, %v2130, 0.0
  %v2245 = vadd.f32 %v2243, %v2244
  %v2246 = vsel %vm519, %v2131, 0.0
  %v2247 = vadd.f32 %v2245, %v2246
  %v2248 = vsel %vm519, %v2132, 0.0
  %v2249 = vadd.f32 %v2247, %v2248
  %v2250 = vsel %vm519, %v2133, 0.0
  %v2251 = vadd.f32 %v2249, %v2250
  %v2252 = vsel %vm519, %v2134, 0.0
  %v2253 = vadd.f32 %v2251, %v2252
  %v2254 = vsel %vm519, %v2135, 0.0
  %v2255 = vadd.f32 %v2253, %v2254
  %v2256 = vsel %vm519, %v2136, 0.0
  %v2257 = vadd.f32 %v2255, %v2256
  %v2258 = vsel %vm519, %v2137, 0.0
  %v2259 = vadd.f32 %v2257, %v2258
  %v2260 = vsel %vm519, %v2138, 0.0
  %v2261 = vadd.f32 %v2259, %v2260
  %v2262 = vsel %vm519, %v2139, 0.0
  %v2263 = vadd.f32 %v2261, %v2262
  %v2264 = vsel %vm519, %v2140, 0.0
  %v2265 = vadd.f32 %v2263, %v2264
  %v2266 = vsel %vm519, %v2141, 0.0
  %v2267 = vadd.f32 %v2265, %v2266
  %v2268 = vsel %vm519, %v2142, 0.0
  %v2269 = vadd.f32 %v2267, %v2268
  %v2270 = vrot.slane %v2269, 4
  %v2271 = vadd.f32 %v2269, %v2270
  %v2272 = vrot.slane %v2271, 2
  %v2273 = vadd.f32 %v2271, %v2272
  %v2274 = vrot.slane %v2273, 1
  %v2275 = vadd.f32 %v2273, %v2274
  %v2276 = vmul.f32 %v2078, 0.001953125
  %v2277 = vmul.f32 %v2275, 0.001953125
  %v2278 = vmul.f32 %v2276, %v2276
  %v2279 = vsub.f32 %v2277, %v2278
  %v2280 = vmax.f32 %v2279, 0.0
  %v2281 = vadd.f32 %v2280, 1e-05
  %v2282 = vrsqrt.pop %v2281
  %v2283 = vmul.f32 %v2282, %v2281
  %v2284 = vmul.f32 %v2283, %v2282
  %v2285 = vmul.f32 0.5, %v2284
  %v2286 = vsub.f32 1.5, %v2285
  %v2287 = vmul.f32 %v2282, %v2286
  %vm2288 = vweird.f32 %v2281
  %vm2289 = vweird.f32 %v2282
  %vm2290 = vmor %vm2288, %vm2289
  %v2291 = vsel %vm2290, %v2282, %v2287
  %v2292 = vmul.f32 %v1944, %v2291
  %v2293 = vmul.f32 %v2276, %v2292
  %v2294 = vsub.f32 %v1945, %v2293
  %v2296 = vperm.slane %v2292, 0
  %v2298 = vmul.f32 %v1753, %v2296
  %v2299 = vmul.f32 %v1756, %v2296
  %v2300 = vmul.f32 %v1759, %v2296
  %v2301 = vmul.f32 %v1762, %v2296
  %v2302 = vmul.f32 %v1765, %v2296
  %v2303 = vmul.f32 %v1768, %v2296
  %v2304 = vmul.f32 %v1771, %v2296
  %v2305 = vmul.f32 %v1774, %v2296
  %v2306 = vmul.f32 %v1777, %v2296
  %v2307 = vmul.f32 %v1780, %v2296
  %v2308 = vmul.f32 %v1783, %v2296
  %v2309 = vmul.f32 %v1786, %v2296
  %v2310 = vmul.f32 %v1789, %v2296
  %v2311 = vmul.f32 %v1792, %v2296
  %v2312 = vmul.f32 %v1795, %v2296
  %v2313 = vmul.f32 %v1798, %v2296
  %v2314 = vmul.f32 %v1801, %v2296
  %v2315 = vmul.f32 %v1804, %v2296
  %v2316 = vmul.f32 %v1807, %v2296
  %v2317 = vmul.f32 %v1810, %v2296
  %v2318 = vmul.f32 %v1813, %v2296
  %v2319 = vmul.f32 %v1816, %v2296
  %v2320 = vmul.f32 %v1819, %v2296
  %v2321 = vmul.f32 %v1822, %v2296
  %v2322 = vmul.f32 %v1825, %v2296
  %v2323 = vmul.f32 %v1828, %v2296
  %v2324 = vmul.f32 %v1831, %v2296
  %v2325 = vmul.f32 %v1834, %v2296
  %v2326 = vmul.f32 %v1837, %v2296
  %v2327 = vmul.f32 %v1840, %v2296
  %v2328 = vmul.f32 %v1843, %v2296
  %v2329 = vmul.f32 %v1846, %v2296
  %v2330 = vmul.f32 %v1849, %v2296
  %v2331 = vmul.f32 %v1852, %v2296
  %v2332 = vmul.f32 %v1855, %v2296
  %v2333 = vmul.f32 %v1858, %v2296
  %v2334 = vmul.f32 %v1861, %v2296
  %v2335 = vmul.f32 %v1864, %v2296
  %v2336 = vmul.f32 %v1867, %v2296
  %v2337 = vmul.f32 %v1870, %v2296
  %v2338 = vmul.f32 %v1873, %v2296
  %v2339 = vmul.f32 %v1876, %v2296
  %v2340 = vmul.f32 %v1879, %v2296
  %v2341 = vmul.f32 %v1882, %v2296
  %v2342 = vmul.f32 %v1885, %v2296
  %v2343 = vmul.f32 %v1888, %v2296
  %v2344 = vmul.f32 %v1891, %v2296
  %v2345 = vmul.f32 %v1894, %v2296
  %v2346 = vmul.f32 %v1897, %v2296
  %v2347 = vmul.f32 %v1900, %v2296
  %v2348 = vmul.f32 %v1903, %v2296
  %v2349 = vmul.f32 %v1906, %v2296
  %v2350 = vmul.f32 %v1909, %v2296
  %v2351 = vmul.f32 %v1912, %v2296
  %v2352 = vmul.f32 %v1915, %v2296
  %v2353 = vmul.f32 %v1918, %v2296
  %v2354 = vmul.f32 %v1921, %v2296
  %v2355 = vmul.f32 %v1924, %v2296
  %v2356 = vmul.f32 %v1927, %v2296
  %v2357 = vmul.f32 %v1930, %v2296
  %v2358 = vmul.f32 %v1933, %v2296
  %v2359 = vmul.f32 %v1936, %v2296
  %v2360 = vmul.f32 %v1939, %v2296
  %v2361 = vmul.f32 %v1942, %v2296
  %v2363 = vperm.slane %v2294, 0
  %v2365 = vadd.f32 %v2298, %v2363
  %v2366 = vadd.f32 %v2299, %v2363
  %v2367 = vadd.f32 %v2300, %v2363
  %v2368 = vadd.f32 %v2301, %v2363
  %v2369 = vadd.f32 %v2302, %v2363
  %v2370 = vadd.f32 %v2303, %v2363
  %v2371 = vadd.f32 %v2304, %v2363
  %v2372 = vadd.f32 %v2305, %v2363
  %v2373 = vadd.f32 %v2306, %v2363
  %v2374 = vadd.f32 %v2307, %v2363
  %v2375 = vadd.f32 %v2308, %v2363
  %v2376 = vadd.f32 %v2309, %v2363
  %v2377 = vadd.f32 %v2310, %v2363
  %v2378 = vadd.f32 %v2311, %v2363
  %v2379 = vadd.f32 %v2312, %v2363
  %v2380 = vadd.f32 %v2313, %v2363
  %v2381 = vadd.f32 %v2314, %v2363
  %v2382 = vadd.f32 %v2315, %v2363
  %v2383 = vadd.f32 %v2316, %v2363
  %v2384 = vadd.f32 %v2317, %v2363
  %v2385 = vadd.f32 %v2318, %v2363
  %v2386 = vadd.f32 %v2319, %v2363
  %v2387 = vadd.f32 %v2320, %v2363
  %v2388 = vadd.f32 %v2321, %v2363
  %v2389 = vadd.f32 %v2322, %v2363
  %v2390 = vadd.f32 %v2323, %v2363
  %v2391 = vadd.f32 %v2324, %v2363
  %v2392 = vadd.f32 %v2325, %v2363
  %v2393 = vadd.f32 %v2326, %v2363
  %v2394 = vadd.f32 %v2327, %v2363
  %v2395 = vadd.f32 %v2328, %v2363
  %v2396 = vadd.f32 %v2329, %v2363
  %v2397 = vadd.f32 %v2330, %v2363
  %v2398 = vadd.f32 %v2331, %v2363
  %v2399 = vadd.f32 %v2332, %v2363
  %v2400 = vadd.f32 %v2333, %v2363
  %v2401 = vadd.f32 %v2334, %v2363
  %v2402 = vadd.f32 %v2335, %v2363
  %v2403 = vadd.f32 %v2336, %v2363
  %v2404 = vadd.f32 %v2337, %v2363
  %v2405 = vadd.f32 %v2338, %v2363
  %v2406 = vadd.f32 %v2339, %v2363
  %v2407 = vadd.f32 %v2340, %v2363
  %v2408 = vadd.f32 %v2341, %v2363
  %v2409 = vadd.f32 %v2342, %v2363
  %v2410 = vadd.f32 %v2343, %v2363
  %v2411 = vadd.f32 %v2344, %v2363
  %v2412 = vadd.f32 %v2345, %v2363
  %v2413 = vadd.f32 %v2346, %v2363
  %v2414 = vadd.f32 %v2347, %v2363
  %v2415 = vadd.f32 %v2348, %v2363
  %v2416 = vadd.f32 %v2349, %v2363
  %v2417 = vadd.f32 %v2350, %v2363
  %v2418 = vadd.f32 %v2351, %v2363
  %v2419 = vadd.f32 %v2352, %v2363
  %v2420 = vadd.f32 %v2353, %v2363
  %v2421 = vadd.f32 %v2354, %v2363
  %v2422 = vadd.f32 %v2355, %v2363
  %v2423 = vadd.f32 %v2356, %v2363
  %v2424 = vadd.f32 %v2357, %v2363
  %v2425 = vadd.f32 %v2358, %v2363
  %v2426 = vadd.f32 %v2359, %v2363
  %v2427 = vadd.f32 %v2360, %v2363
  %v2428 = vadd.f32 %v2361, %v2363
  %v2429 = vmax.f32 %v2365, 0.0
  %v2430 = vmax.f32 %v2366, 0.0
  %v2431 = vmax.f32 %v2367, 0.0
  %v2432 = vmax.f32 %v2368, 0.0
  %v2433 = vmax.f32 %v2369, 0.0
  %v2434 = vmax.f32 %v2370, 0.0
  %v2435 = vmax.f32 %v2371, 0.0
  %v2436 = vmax.f32 %v2372, 0.0
  %v2437 = vmax.f32 %v2373, 0.0
  %v2438 = vmax.f32 %v2374, 0.0
  %v2439 = vmax.f32 %v2375, 0.0
  %v2440 = vmax.f32 %v2376, 0.0
  %v2441 = vmax.f32 %v2377, 0.0
  %v2442 = vmax.f32 %v2378, 0.0
  %v2443 = vmax.f32 %v2379, 0.0
  %v2444 = vmax.f32 %v2380, 0.0
  %v2445 = vmax.f32 %v2381, 0.0
  %v2446 = vmax.f32 %v2382, 0.0
  %v2447 = vmax.f32 %v2383, 0.0
  %v2448 = vmax.f32 %v2384, 0.0
  %v2449 = vmax.f32 %v2385, 0.0
  %v2450 = vmax.f32 %v2386, 0.0
  %v2451 = vmax.f32 %v2387, 0.0
  %v2452 = vmax.f32 %v2388, 0.0
  %v2453 = vmax.f32 %v2389, 0.0
  %v2454 = vmax.f32 %v2390, 0.0
  %v2455 = vmax.f32 %v2391, 0.0
  %v2456 = vmax.f32 %v2392, 0.0
  %v2457 = vmax.f32 %v2393, 0.0
  %v2458 = vmax.f32 %v2394, 0.0
  %v2459 = vmax.f32 %v2395, 0.0
  %v2460 = vmax.f32 %v2396, 0.0
  %v2461 = vmax.f32 %v2397, 0.0
  %v2462 = vmax.f32 %v2398, 0.0
  %v2463 = vmax.f32 %v2399, 0.0
  %v2464 = vmax.f32 %v2400, 0.0
  %v2465 = vmax.f32 %v2401, 0.0
  %v2466 = vmax.f32 %v2402, 0.0
  %v2467 = vmax.f32 %v2403, 0.0
  %v2468 = vmax.f32 %v2404, 0.0
  %v2469 = vmax.f32 %v2405, 0.0
  %v2470 = vmax.f32 %v2406, 0.0
  %v2471 = vmax.f32 %v2407, 0.0
  %v2472 = vmax.f32 %v2408, 0.0
  %v2473 = vmax.f32 %v2409, 0.0
  %v2474 = vmax.f32 %v2410, 0.0
  %v2475 = vmax.f32 %v2411, 0.0
  %v2476 = vmax.f32 %v2412, 0.0
  %v2477 = vmax.f32 %v2413, 0.0
  %v2478 = vmax.f32 %v2414, 0.0
  %v2479 = vmax.f32 %v2415, 0.0
  %v2480 = vmax.f32 %v2416, 0.0
  %v2481 = vmax.f32 %v2417, 0.0
  %v2482 = vmax.f32 %v2418, 0.0
  %v2483 = vmax.f32 %v2419, 0.0
  %v2484 = vmax.f32 %v2420, 0.0
  %v2485 = vmax.f32 %v2421, 0.0
  %v2486 = vmax.f32 %v2422, 0.0
  %v2487 = vmax.f32 %v2423, 0.0
  %v2488 = vmax.f32 %v2424, 0.0
  %v2489 = vmax.f32 %v2425, 0.0
  %v2490 = vmax.f32 %v2426, 0.0
  %v2491 = vmax.f32 %v2427, 0.0
  %v2492 = vmax.f32 %v2428, 0.0
  %v2493 = vld [vmem:[%s9] sm:$0xff]
  %v2494 = vld [vmem:[%s9 + $0x8] sm:$0xff]
  %v2495 = vld [vmem:[%s9 + $0x10] sm:$0xff]
  %v2496 = vld [vmem:[%s9 + $0x18] sm:$0xff]
  %v2498 = vsel %vm519, %v2429, 0
  %v2501 = vsel %vm519, %v2430, 0
  %v2504 = vsel %vm519, %v2431, 0
  %v2507 = vsel %vm519, %v2432, 0
  %v2510 = vsel %vm519, %v2433, 0
  %v2513 = vsel %vm519, %v2434, 0
  %v2516 = vsel %vm519, %v2435, 0
  %v2519 = vsel %vm519, %v2436, 0
  %v2522 = vsel %vm519, %v2437, 0
  %v2525 = vsel %vm519, %v2438, 0
  %v2528 = vsel %vm519, %v2439, 0
  %v2531 = vsel %vm519, %v2440, 0
  %v2534 = vsel %vm519, %v2441, 0
  %v2537 = vsel %vm519, %v2442, 0
  %v2540 = vsel %vm519, %v2443, 0
  %v2543 = vsel %vm519, %v2444, 0
  %v2546 = vsel %vm519, %v2445, 0
  %v2549 = vsel %vm519, %v2446, 0
  %v2552 = vsel %vm519, %v2447, 0
  %v2555 = vsel %vm519, %v2448, 0
  %v2558 = vsel %vm519, %v2449, 0
  %v2561 = vsel %vm519, %v2450, 0
  %v2564 = vsel %vm519, %v2451, 0
  %v2567 = vsel %vm519, %v2452, 0
  %v2570 = vsel %vm519, %v2453, 0
  %v2573 = vsel %vm519, %v2454, 0
  %v2576 = vsel %vm519, %v2455, 0
  %v2579 = vsel %vm519, %v2456, 0
  %v2582 = vsel %vm519, %v2457, 0
  %v2585 = vsel %vm519, %v2458, 0
  %v2588 = vsel %vm519, %v2459, 0
  %v2591 = vsel %vm519, %v2460, 0
  %v2594 = vsel %vm519, %v2461, 0
  %v2597 = vsel %vm519, %v2462, 0
  %v2600 = vsel %vm519, %v2463, 0
  %v2603 = vsel %vm519, %v2464, 0
  %v2606 = vsel %vm519, %v2465, 0
  %v2609 = vsel %vm519, %v2466, 0
  %v2612 = vsel %vm519, %v2467, 0
  %v2615 = vsel %vm519, %v2468, 0
  %v2618 = vsel %vm519, %v2469, 0
  %v2621 = vsel %vm519, %v2470, 0
  %v2624 = vsel %vm519, %v2471, 0
  %v2627 = vsel %vm519, %v2472, 0
  %v2630 = vsel %vm519, %v2473, 0
  %v2633 = vsel %vm519, %v2474, 0
  %v2636 = vsel %vm519, %v2475, 0
  %v2639 = vsel %vm519, %v2476, 0
  %v2642 = vsel %vm519, %v2477, 0
  %v2645 = vsel %vm519, %v2478, 0
  %v2648 = vsel %vm519, %v2479, 0
  %v2651 = vsel %vm519, %v2480, 0
  %v2654 = vsel %vm519, %v2481, 0
  %v2657 = vsel %vm519, %v2482, 0
  %v2660 = vsel %vm519, %v2483, 0
  %v2663 = vsel %vm519, %v2484, 0
  %v2666 = vsel %vm519, %v2485, 0
  %v2669 = vsel %vm519, %v2486, 0
  %v2672 = vsel %vm519, %v2487, 0
  %v2675 = vsel %vm519, %v2488, 0
  %v2678 = vsel %vm519, %v2489, 0
  %v2681 = vsel %vm519, %v2490, 0
  %v2684 = vsel %vm519, %v2491, 0
  %v2687 = vsel %vm519, %v2492, 0
  %2689 = vmatpush.msra.mxu0 0.0
  %2690 = vmatpush.msra.mxu0 0.0
  %2691 = vmatpush.msra.mxu0 0.0
  %2692 = vmatpush.msra.mxu0 0.0
  %2693 = vmatpush.msra.mxu0 0.0
  %2694 = vmatpush.msra.mxu0 0.0
  %2695 = vmatpush.msra.mxu0 0.0
  %2696 = vmatpush.msra.mxu0 0.0
  %2697 = vmatpush.msra.mxu0 0.0
  %2698 = vmatpush.msra.mxu0 0.0
  %2699 = vmatpush.msra.mxu0 0.0
  %2700 = vmatpush.msra.mxu0 0.0
  %2701 = vmatpush.msra.mxu0 %v2496
  %2702 = vmatpush.msra.mxu0 %v2495
  %2703 = vmatpush.msra.mxu0 %v2494
  %2704 = vmatpush.msra.mxu0 %v2493
  %2705 = vmatmul.f32.gmra.mxu0 %v2498
  %v2706 = vpop.f32.mrf.mxu0
  %v2707 = vadd.f32 0.0, %v2706
  %2708 = vmatmul.f32.gmra.mxu0 %v2501
  %v2709 = vpop.f32.mrf.mxu0
  %v2710 = vadd.f32 0.0, %v2709
  %2711 = vmatmul.f32.gmra.mxu0 %v2504
  %v2712 = vpop.f32.mrf.mxu0
  %v2713 = vadd.f32 0.0, %v2712
  %2714 = vmatmul.f32.gmra.mxu0 %v2507
  %v2715 = vpop.f32.mrf.mxu0
  %v2716 = vadd.f32 0.0, %v2715
  %2717 = vmatmul.f32.gmra.mxu0 %v2510
  %v2718 = vpop.f32.mrf.mxu0
  %v2719 = vadd.f32 0.0, %v2718
  %2720 = vmatmul.f32.gmra.mxu0 %v2513
  %v2721 = vpop.f32.mrf.mxu0
  %v2722 = vadd.f32 0.0, %v2721
  %2723 = vmatmul.f32.gmra.mxu0 %v2516
  %v2724 = vpop.f32.mrf.mxu0
  %v2725 = vadd.f32 0.0, %v2724
  %2726 = vmatmul.f32.gmra.mxu0 %v2519
  %v2727 = vpop.f32.mrf.mxu0
  %v2728 = vadd.f32 0.0, %v2727
  %2729 = vmatmul.f32.gmra.mxu0 %v2522
  %v2730 = vpop.f32.mrf.mxu0
  %v2731 = vadd.f32 0.0, %v2730
  %2732 = vmatmul.f32.gmra.mxu0 %v2525
  %v2733 = vpop.f32.mrf.mxu0
  %v2734 = vadd.f32 0.0, %v2733
  %2735 = vmatmul.f32.gmra.mxu0 %v2528
  %v2736 = vpop.f32.mrf.mxu0
  %v2737 = vadd.f32 0.0, %v2736
  %2738 = vmatmul.f32.gmra.mxu0 %v2531
  %v2739 = vpop.f32.mrf.mxu0
  %v2740 = vadd.f32 0.0, %v2739
  %2741 = vmatmul.f32.gmra.mxu0 %v2534
  %v2742 = vpop.f32.mrf.mxu0
  %v2743 = vadd.f32 0.0, %v2742
  %2744 = vmatmul.f32.gmra.mxu0 %v2537
  %v2745 = vpop.f32.mrf.mxu0
  %v2746 = vadd.f32 0.0, %v2745
  %2747 = vmatmul.f32.gmra.mxu0 %v2540
  %v2748 = vpop.f32.mrf.mxu0
  %v2749 = vadd.f32 0.0, %v2748
  %2750 = vmatmul.f32.gmra.mxu0 %v2543
  %v2751 = vpop.f32.mrf.mxu0
  %v2752 = vadd.f32 0.0, %v2751
  %2753 = vmatmul.f32.gmra.mxu0 %v2546
  %v2754 = vpop.f32.mrf.mxu0
  %v2755 = vadd.f32 0.0, %v2754
  %2756 = vmatmul.f32.gmra.mxu0 %v2549
  %v2757 = vpop.f32.mrf.mxu0
  %v2758 = vadd.f32 0.0, %v2757
  %2759 = vmatmul.f32.gmra.mxu0 %v2552
  %v2760 = vpop.f32.mrf.mxu0
  %v2761 = vadd.f32 0.0, %v2760
  %2762 = vmatmul.f32.gmra.mxu0 %v2555
  %v2763 = vpop.f32.mrf.mxu0
  %v2764 = vadd.f32 0.0, %v2763
  %2765 = vmatmul.f32.gmra.mxu0 %v2558
  %v2766 = vpop.f32.mrf.mxu0
  %v2767 = vadd.f32 0.0, %v2766
  %2768 = vmatmul.f32.gmra.mxu0 %v2561
  %v2769 = vpop.f32.mrf.mxu0
  %v2770 = vadd.f32 0.0, %v2769
  %2771 = vmatmul.f32.gmra.mxu0 %v2564
  %v2772 = vpop.f32.mrf.mxu0
  %v2773 = vadd.f32 0.0, %v2772
  %2774 = vmatmul.f32.gmra.mxu0 %v2567
  %v2775 = vpop.f32.mrf.mxu0
  %v2776 = vadd.f32 0.0, %v2775
  %2777 = vmatmul.f32.gmra.mxu0 %v2570
  %v2778 = vpop.f32.mrf.mxu0
  %v2779 = vadd.f32 0.0, %v2778
  %2780 = vmatmul.f32.gmra.mxu0 %v2573
  %v2781 = vpop.f32.mrf.mxu0
  %v2782 = vadd.f32 0.0, %v2781
  %2783 = vmatmul.f32.gmra.mxu0 %v2576
  %v2784 = vpop.f32.mrf.mxu0
  %v2785 = vadd.f32 0.0, %v2784
  %2786 = vmatmul.f32.gmra.mxu0 %v2579
  %v2787 = vpop.f32.mrf.mxu0
  %v2788 = vadd.f32 0.0, %v2787
  %2789 = vmatmul.f32.gmra.mxu0 %v2582
  %v2790 = vpop.f32.mrf.mxu0
  %v2791 = vadd.f32 0.0, %v2790
  %2792 = vmatmul.f32.gmra.mxu0 %v2585
  %v2793 = vpop.f32.mrf.mxu0
  %v2794 = vadd.f32 0.0, %v2793
  %2795 = vmatmul.f32.gmra.mxu0 %v2588
  %v2796 = vpop.f32.mrf.mxu0
  %v2797 = vadd.f32 0.0, %v2796
  %2798 = vmatmul.f32.gmra.mxu0 %v2591
  %v2799 = vpop.f32.mrf.mxu0
  %v2800 = vadd.f32 0.0, %v2799
  %2801 = vmatmul.f32.gmra.mxu0 %v2594
  %v2802 = vpop.f32.mrf.mxu0
  %v2803 = vadd.f32 0.0, %v2802
  %2804 = vmatmul.f32.gmra.mxu0 %v2597
  %v2805 = vpop.f32.mrf.mxu0
  %v2806 = vadd.f32 0.0, %v2805
  %2807 = vmatmul.f32.gmra.mxu0 %v2600
  %v2808 = vpop.f32.mrf.mxu0
  %v2809 = vadd.f32 0.0, %v2808
  %2810 = vmatmul.f32.gmra.mxu0 %v2603
  %v2811 = vpop.f32.mrf.mxu0
  %v2812 = vadd.f32 0.0, %v2811
  %2813 = vmatmul.f32.gmra.mxu0 %v2606
  %v2814 = vpop.f32.mrf.mxu0
  %v2815 = vadd.f32 0.0, %v2814
  %2816 = vmatmul.f32.gmra.mxu0 %v2609
  %v2817 = vpop.f32.mrf.mxu0
  %v2818 = vadd.f32 0.0, %v2817
  %2819 = vmatmul.f32.gmra.mxu0 %v2612
  %v2820 = vpop.f32.mrf.mxu0
  %v2821 = vadd.f32 0.0, %v2820
  %2822 = vmatmul.f32.gmra.mxu0 %v2615
  %v2823 = vpop.f32.mrf.mxu0
  %v2824 = vadd.f32 0.0, %v2823
  %2825 = vmatmul.f32.gmra.mxu0 %v2618
  %v2826 = vpop.f32.mrf.mxu0
  %v2827 = vadd.f32 0.0, %v2826
  %2828 = vmatmul.f32.gmra.mxu0 %v2621
  %v2829 = vpop.f32.mrf.mxu0
  %v2830 = vadd.f32 0.0, %v2829
  %2831 = vmatmul.f32.gmra.mxu0 %v2624
  %v2832 = vpop.f32.mrf.mxu0
  %v2833 = vadd.f32 0.0, %v2832
  %2834 = vmatmul.f32.gmra.mxu0 %v2627
  %v2835 = vpop.f32.mrf.mxu0
  %v2836 = vadd.f32 0.0, %v2835
  %2837 = vmatmul.f32.gmra.mxu0 %v2630
  %v2838 = vpop.f32.mrf.mxu0
  %v2839 = vadd.f32 0.0, %v2838
  %2840 = vmatmul.f32.gmra.mxu0 %v2633
  %v2841 = vpop.f32.mrf.mxu0
  %v2842 = vadd.f32 0.0, %v2841
  %2843 = vmatmul.f32.gmra.mxu0 %v2636
  %v2844 = vpop.f32.mrf.mxu0
  %v2845 = vadd.f32 0.0, %v2844
  %2846 = vmatmul.f32.gmra.mxu0 %v2639
  %v2847 = vpop.f32.mrf.mxu0
  %v2848 = vadd.f32 0.0, %v2847
  %2849 = vmatmul.f32.gmra.mxu0 %v2642
  %v2850 = vpop.f32.mrf.mxu0
  %v2851 = vadd.f32 0.0, %v2850
  %2852 = vmatmul.f32.gmra.mxu0 %v2645
  %v2853 = vpop.f32.mrf.mxu0
  %v2854 = vadd.f32 0.0, %v2853
  %2855 = vmatmul.f32.gmra.mxu0 %v2648
  %v2856 = vpop.f32.mrf.mxu0
  %v2857 = vadd.f32 0.0, %v2856
  %2858 = vmatmul.f32.gmra.mxu0 %v2651
  %v2859 = vpop.f32.mrf.mxu0
  %v2860 = vadd.f32 0.0, %v2859
  %2861 = vmatmul.f32.gmra.mxu0 %v2654
  %v2862 = vpop.f32.mrf.mxu0
  %v2863 = vadd.f32 0.0, %v2862
  %2864 = vmatmul.f32.gmra.mxu0 %v2657
  %v2865 = vpop.f32.mrf.mxu0
  %v2866 = vadd.f32 0.0, %v2865
  %2867 = vmatmul.f32.gmra.mxu0 %v2660
  %v2868 = vpop.f32.mrf.mxu0
  %v2869 = vadd.f32 0.0, %v2868
  %2870 = vmatmul.f32.gmra.mxu0 %v2663
  %v2871 = vpop.f32.mrf.mxu0
  %v2872 = vadd.f32 0.0, %v2871
  %2873 = vmatmul.f32.gmra.mxu0 %v2666
  %v2874 = vpop.f32.mrf.mxu0
  %v2875 = vadd.f32 0.0, %v2874
  %2876 = vmatmul.f32.gmra.mxu0 %v2669
  %v2877 = vpop.f32.mrf.mxu0
  %v2878 = vadd.f32 0.0, %v2877
  %2879 = vmatmul.f32.gmra.mxu0 %v2672
  %v2880 = vpop.f32.mrf.mxu0
  %v2881 = vadd.f32 0.0, %v2880
  %2882 = vmatmul.f32.gmra.mxu0 %v2675
  %v2883 = vpop.f32.mrf.mxu0
  %v2884 = vadd.f32 0.0, %v2883
  %2885 = vmatmul.f32.gmra.mxu0 %v2678
  %v2886 = vpop.f32.mrf.mxu0
  %v2887 = vadd.f32 0.0, %v2886
  %2888 = vmatmul.f32.gmra.mxu0 %v2681
  %v2889 = vpop.f32.mrf.mxu0
  %v2890 = vadd.f32 0.0, %v2889
  %2891 = vmatmul.f32.gmra.mxu0 %v2684
  %v2892 = vpop.f32.mrf.mxu0
  %v2893 = vadd.f32 0.0, %v2892
  %2894 = vmatmul.f32.gmra.mxu0 %v2687
  %v2895 = vpop.f32.mrf.mxu0
  %v2896 = vadd.f32 0.0, %v2895
  %2897 = vdwg.mxu0
  %v2898 = vld [vmem:[%s10] sm:$0x1]
  %v2899 = vld [vmem:[%s11] sm:$0x1]
  %v2900 = vsel %vm115, %v2707, 0.0
  %v2901 = vsel %vm115, %v2710, 0.0
  %v2902 = vadd.f32 %v2900, %v2901
  %v2903 = vsel %vm115, %v2713, 0.0
  %v2904 = vadd.f32 %v2902, %v2903
  %v2905 = vsel %vm115, %v2716, 0.0
  %v2906 = vadd.f32 %v2904, %v2905
  %v2907 = vsel %vm115, %v2719, 0.0
  %v2908 = vadd.f32 %v2906, %v2907
  %v2909 = vsel %vm115, %v2722, 0.0
  %v2910 = vadd.f32 %v2908, %v2909
  %v2911 = vsel %vm115, %v2725, 0.0
  %v2912 = vadd.f32 %v2910, %v2911
  %v2913 = vsel %vm115, %v2728, 0.0
  %v2914 = vadd.f32 %v2912, %v2913
  %v2915 = vsel %vm115, %v2731, 0.0
  %v2916 = vadd.f32 %v2914, %v2915
  %v2917 = vsel %vm115, %v2734, 0.0
  %v2918 = vadd.f32 %v2916, %v2917
  %v2919 = vsel %vm115, %v2737, 0.0
  %v2920 = vadd.f32 %v2918, %v2919
  %v2921 = vsel %vm115, %v2740, 0.0
  %v2922 = vadd.f32 %v2920, %v2921
  %v2923 = vsel %vm115, %v2743, 0.0
  %v2924 = vadd.f32 %v2922, %v2923
  %v2925 = vsel %vm115, %v2746, 0.0
  %v2926 = vadd.f32 %v2924, %v2925
  %v2927 = vsel %vm115, %v2749, 0.0
  %v2928 = vadd.f32 %v2926, %v2927
  %v2929 = vsel %vm115, %v2752, 0.0
  %v2930 = vadd.f32 %v2928, %v2929
  %v2931 = vsel %vm115, %v2755, 0.0
  %v2932 = vadd.f32 %v2930, %v2931
  %v2933 = vsel %vm115, %v2758, 0.0
  %v2934 = vadd.f32 %v2932, %v2933
  %v2935 = vsel %vm115, %v2761, 0.0
  %v2936 = vadd.f32 %v2934, %v2935
  %v2937 = vsel %vm115, %v2764, 0.0
  %v2938 = vadd.f32 %v2936, %v2937
  %v2939 = vsel %vm115, %v2767, 0.0
  %v2940 = vadd.f32 %v2938, %v2939
  %v2941 = vsel %vm115, %v2770, 0.0
  %v2942 = vadd.f32 %v2940, %v2941
  %v2943 = vsel %vm115, %v2773, 0.0
  %v2944 = vadd.f32 %v2942, %v2943
  %v2945 = vsel %vm115, %v2776, 0.0
  %v2946 = vadd.f32 %v2944, %v2945
  %v2947 = vsel %vm115, %v2779, 0.0
  %v2948 = vadd.f32 %v2946, %v2947
  %v2949 = vsel %vm115, %v2782, 0.0
  %v2950 = vadd.f32 %v2948, %v2949
  %v2951 = vsel %vm115, %v2785, 0.0
  %v2952 = vadd.f32 %v2950, %v2951
  %v2953 = vsel %vm115, %v2788, 0.0
  %v2954 = vadd.f32 %v2952, %v2953
  %v2955 = vsel %vm115, %v2791, 0.0
  %v2956 = vadd.f32 %v2954, %v2955
  %v2957 = vsel %vm115, %v2794, 0.0
  %v2958 = vadd.f32 %v2956, %v2957
  %v2959 = vsel %vm115, %v2797, 0.0
  %v2960 = vadd.f32 %v2958, %v2959
  %v2961 = vsel %vm115, %v2800, 0.0
  %v2962 = vadd.f32 %v2960, %v2961
  %v2963 = vsel %vm115, %v2803, 0.0
  %v2964 = vadd.f32 %v2962, %v2963
  %v2965 = vsel %vm115, %v2806, 0.0
  %v2966 = vadd.f32 %v2964, %v2965
  %v2967 = vsel %vm115, %v2809, 0.0
  %v2968 = vadd.f32 %v2966, %v2967
  %v2969 = vsel %vm115, %v2812, 0.0
  %v2970 = vadd.f32 %v2968, %v2969
  %v2971 = vsel %vm115, %v2815, 0.0
  %v2972 = vadd.f32 %v2970, %v2971
  %v2973 = vsel %vm115, %v2818, 0.0
  %v2974 = vadd.f32 %v2972, %v2973
  %v2975 = vsel %vm115, %v2821, 0.0
  %v2976 = vadd.f32 %v2974, %v2975
  %v2977 = vsel %vm115, %v2824, 0.0
  %v2978 = vadd.f32 %v2976, %v2977
  %v2979 = vsel %vm115, %v2827, 0.0
  %v2980 = vadd.f32 %v2978, %v2979
  %v2981 = vsel %vm115, %v2830, 0.0
  %v2982 = vadd.f32 %v2980, %v2981
  %v2983 = vsel %vm115, %v2833, 0.0
  %v2984 = vadd.f32 %v2982, %v2983
  %v2985 = vsel %vm115, %v2836, 0.0
  %v2986 = vadd.f32 %v2984, %v2985
  %v2987 = vsel %vm115, %v2839, 0.0
  %v2988 = vadd.f32 %v2986, %v2987
  %v2989 = vsel %vm115, %v2842, 0.0
  %v2990 = vadd.f32 %v2988, %v2989
  %v2991 = vsel %vm115, %v2845, 0.0
  %v2992 = vadd.f32 %v2990, %v2991
  %v2993 = vsel %vm115, %v2848, 0.0
  %v2994 = vadd.f32 %v2992, %v2993
  %v2995 = vsel %vm115, %v2851, 0.0
  %v2996 = vadd.f32 %v2994, %v2995
  %v2997 = vsel %vm115, %v2854, 0.0
  %v2998 = vadd.f32 %v2996, %v2997
  %v2999 = vsel %vm115, %v2857, 0.0
  %v3000 = vadd.f32 %v2998, %v2999
  %v3001 = vsel %vm115, %v2860, 0.0
  %v3002 = vadd.f32 %v3000, %v3001
  %v3003 = vsel %vm115, %v2863, 0.0
  %v3004 = vadd.f32 %v3002, %v3003
  %v3005 = vsel %vm115, %v2866, 0.0
  %v3006 = vadd.f32 %v3004, %v3005
  %v3007 = vsel %vm115, %v2869, 0.0
  %v3008 = vadd.f32 %v3006, %v3007
  %v3009 = vsel %vm115, %v2872, 0.0
  %v3010 = vadd.f32 %v3008, %v3009
  %v3011 = vsel %vm115, %v2875, 0.0
  %v3012 = vadd.f32 %v3010, %v3011
  %v3013 = vsel %vm115, %v2878, 0.0
  %v3014 = vadd.f32 %v3012, %v3013
  %v3015 = vsel %vm115, %v2881, 0.0
  %v3016 = vadd.f32 %v3014, %v3015
  %v3017 = vsel %vm115, %v2884, 0.0
  %v3018 = vadd.f32 %v3016, %v3017
  %v3019 = vsel %vm115, %v2887, 0.0
  %v3020 = vadd.f32 %v3018, %v3019
  %v3021 = vsel %vm115, %v2890, 0.0
  %v3022 = vadd.f32 %v3020, %v3021
  %v3023 = vsel %vm115, %v2893, 0.0
  %v3024 = vadd.f32 %v3022, %v3023
  %v3025 = vsel %vm115, %v2896, 0.0
  %v3026 = vadd.f32 %v3024, %v3025
  %v3027 = vrot.slane %v3026, 4
  %v3028 = vadd.f32 %v3026, %v3027
  %v3029 = vrot.slane %v3028, 2
  %v3030 = vadd.f32 %v3028, %v3029
  %v3031 = vrot.slane %v3030, 1
  %v3032 = vadd.f32 %v3030, %v3031
  %v3033 = vmul.f32 %v2707, %v2707
  %v3034 = vmul.f32 %v2710, %v2710
  %v3035 = vmul.f32 %v2713, %v2713
  %v3036 = vmul.f32 %v2716, %v2716
  %v3037 = vmul.f32 %v2719, %v2719
  %v3038 = vmul.f32 %v2722, %v2722
  %v3039 = vmul.f32 %v2725, %v2725
  %v3040 = vmul.f32 %v2728, %v2728
  %v3041 = vmul.f32 %v2731, %v2731
  %v3042 = vmul.f32 %v2734, %v2734
  %v3043 = vmul.f32 %v2737, %v2737
  %v3044 = vmul.f32 %v2740, %v2740
  %v3045 = vmul.f32 %v2743, %v2743
  %v3046 = vmul.f32 %v2746, %v2746
  %v3047 = vmul.f32 %v2749, %v2749
  %v3048 = vmul.f32 %v2752, %v2752
  %v3049 = vmul.f32 %v2755, %v2755
  %v3050 = vmul.f32 %v2758, %v2758
  %v3051 = vmul.f32 %v2761, %v2761
  %v3052 = vmul.f32 %v2764, %v2764
  %v3053 = vmul.f32 %v2767, %v2767
  %v3054 = vmul.f32 %v2770, %v2770
  %v3055 = vmul.f32 %v2773, %v2773
  %v3056 = vmul.f32 %v2776, %v2776
  %v3057 = vmul.f32 %v2779, %v2779
  %v3058 = vmul.f32 %v2782, %v2782
  %v3059 = vmul.f32 %v2785, %v2785
  %v3060 = vmul.f32 %v2788, %v2788
  %v3061 = vmul.f32 %v2791, %v2791
  %v3062 = vmul.f32 %v2794, %v2794
  %v3063 = vmul.f32 %v2797, %v2797
  %v3064 = vmul.f32 %v2800, %v2800
  %v3065 = vmul.f32 %v2803, %v2803
  %v3066 = vmul.f32 %v2806, %v2806
  %v3067 = vmul.f32 %v2809, %v2809
  %v3068 = vmul.f32 %v2812, %v2812
  %v3069 = vmul.f32 %v2815, %v2815
  %v3070 = vmul.f32 %v2818, %v2818
  %v3071 = vmul.f32 %v2821, %v2821
  %v3072 = vmul.f32 %v2824, %v2824
  %v3073 = vmul.f32 %v2827, %v2827
  %v3074 = vmul.f32 %v2830, %v2830
  %v3075 = vmul.f32 %v2833, %v2833
  %v3076 = vmul.f32 %v2836, %v2836
  %v3077 = vmul.f32 %v2839, %v2839
  %v3078 = vmul.f32 %v2842, %v2842
  %v3079 = vmul.f32 %v2845, %v2845
  %v3080 = vmul.f32 %v2848, %v2848
  %v3081 = vmul.f32 %v2851, %v2851
  %v3082 = vmul.f32 %v2854, %v2854
  %v3083 = vmul.f32 %v2857, %v2857
  %v3084 = vmul.f32 %v2860, %v2860
  %v3085 = vmul.f32 %v2863, %v2863
  %v3086 = vmul.f32 %v2866, %v2866
  %v3087 = vmul.f32 %v2869, %v2869
  %v3088 = vmul.f32 %v2872, %v2872
  %v3089 = vmul.f32 %v2875, %v2875
  %v3090 = vmul.f32 %v2878, %v2878
  %v3091 = vmul.f32 %v2881, %v2881
  %v3092 = vmul.f32 %v2884, %v2884
  %v3093 = vmul.f32 %v2887, %v2887
  %v3094 = vmul.f32 %v2890, %v2890
  %v3095 = vmul.f32 %v2893, %v2893
  %v3096 = vmul.f32 %v2896, %v2896
  %v3097 = vsel %vm115, %v3033, 0.0
  %v3098 = vsel %vm115, %v3034, 0.0
  %v3099 = vadd.f32 %v3097, %v3098
  %v3100 = vsel %vm115, %v3035, 0.0
  %v3101 = vadd.f32 %v3099, %v3100
  %v3102 = vsel %vm115, %v3036, 0.0
  %v3103 = vadd.f32 %v3101, %v3102
  %v3104 = vsel %vm115, %v3037, 0.0
  %v3105 = vadd.f32 %v3103, %v3104
  %v3106 = vsel %vm115, %v3038, 0.0
  %v3107 = vadd.f32 %v3105, %v3106
  %v3108 = vsel %vm115, %v3039, 0.0
  %v3109 = vadd.f32 %v3107, %v3108
  %v3110 = vsel %vm115, %v3040, 0.0
  %v3111 = vadd.f32 %v3109, %v3110
  %v3112 = vsel %vm115, %v3041, 0.0
  %v3113 = vadd.f32 %v3111, %v3112
  %v3114 = vsel %vm115, %v3042, 0.0
  %v3115 = vadd.f32 %v3113, %v3114
  %v3116 = vsel %vm115, %v3043, 0.0
  %v3117 = vadd.f32 %v3115, %v3116
  %v3118 = vsel %vm115, %v3044, 0.0
  %v3119 = vadd.f32 %v3117, %v3118
  %v3120 = vsel %vm115, %v3045, 0.0
  %v3121 = vadd.f32 %v3119, %v3120
  %v3122 = vsel %vm115, %v3046, 0.0
  %v3123 = vadd.f32 %v3121, %v3122
  %v3124 = vsel %vm115, %v3047, 0.0
  %v3125 = vadd.f32 %v3123, %v3124
  %v3126 = vsel %vm115, %v3048, 0.0
  %v3127 = vadd.f32 %v3125, %v3126
  %v3128 = vsel %vm115, %v3049, 0.0
  %v3129 = vadd.f32 %v3127, %v3128
  %v3130 = vsel %vm115, %v3050, 0.0
  %v3131 = vadd.f32 %v3129, %v3130
  %v3132 = vsel %vm115, %v3051, 0.0
  %v3133 = vadd.f32 %v3131, %v3132
  %v3134 = vsel %vm115, %v3052, 0.0
  %v3135 = vadd.f32 %v3133, %v3134
  %v3136 = vsel %vm115, %v3053, 0.0
  %v3137 = vadd.f32 %v3135, %v3136
  %v3138 = vsel %vm115, %v3054, 0.0
  %v3139 = vadd.f32 %v3137, %v3138
  %v3140 = vsel %vm115, %v3055, 0.0
  %v3141 = vadd.f32 %v3139, %v3140
  %v3142 = vsel %vm115, %v3056, 0.0
  %v3143 = vadd.f32 %v3141, %v3142
  %v3144 = vsel %vm115, %v3057, 0.0
  %v3145 = vadd.f32 %v3143, %v3144
  %v3146 = vsel %vm115, %v3058, 0.0
  %v3147 = vadd.f32 %v3145, %v3146
  %v3148 = vsel %vm115, %v3059, 0.0
  %v3149 = vadd.f32 %v3147, %v3148
  %v3150 = vsel %vm115, %v3060, 0.0
  %v3151 = vadd.f32 %v3149, %v3150
  %v3152 = vsel %vm115, %v3061, 0.0
  %v3153 = vadd.f32 %v3151, %v3152
  %v3154 = vsel %vm115, %v3062, 0.0
  %v3155 = vadd.f32 %v3153, %v3154
  %v3156 = vsel %vm115, %v3063, 0.0
  %v3157 = vadd.f32 %v3155, %v3156
  %v3158 = vsel %vm115, %v3064, 0.0
  %v3159 = vadd.f32 %v3157, %v3158
  %v3160 = vsel %vm115, %v3065, 0.0
  %v3161 = vadd.f32 %v3159, %v3160
  %v3162 = vsel %vm115, %v3066, 0.0
  %v3163 = vadd.f32 %v3161, %v3162
  %v3164 = vsel %vm115, %v3067, 0.0
  %v3165 = vadd.f32 %v3163, %v3164
  %v3166 = vsel %vm115, %v3068, 0.0
  %v3167 = vadd.f32 %v3165, %v3166
  %v3168 = vsel %vm115, %v3069, 0.0
  %v3169 = vadd.f32 %v3167, %v3168
  %v3170 = vsel %vm115, %v3070, 0.0
  %v3171 = vadd.f32 %v3169, %v3170
  %v3172 = vsel %vm115, %v3071, 0.0
  %v3173 = vadd.f32 %v3171, %v3172
  %v3174 = vsel %vm115, %v3072, 0.0
  %v3175 = vadd.f32 %v3173, %v3174
  %v3176 = vsel %vm115, %v3073, 0.0
  %v3177 = vadd.f32 %v3175, %v3176
  %v3178 = vsel %vm115, %v3074, 0.0
  %v3179 = vadd.f32 %v3177, %v3178
  %v3180 = vsel %vm115, %v3075, 0.0
  %v3181 = vadd.f32 %v3179, %v3180
  %v3182 = vsel %vm115, %v3076, 0.0
  %v3183 = vadd.f32 %v3181, %v3182
  %v3184 = vsel %vm115, %v3077, 0.0
  %v3185 = vadd.f32 %v3183, %v3184
  %v3186 = vsel %vm115, %v3078, 0.0
  %v3187 = vadd.f32 %v3185, %v3186
  %v3188 = vsel %vm115, %v3079, 0.0
  %v3189 = vadd.f32 %v3187, %v3188
  %v3190 = vsel %vm115, %v3080, 0.0
  %v3191 = vadd.f32 %v3189, %v3190
  %v3192 = vsel %vm115, %v3081, 0.0
  %v3193 = vadd.f32 %v3191, %v3192
  %v3194 = vsel %vm115, %v3082, 0.0
  %v3195 = vadd.f32 %v3193, %v3194
  %v3196 = vsel %vm115, %v3083, 0.0
  %v3197 = vadd.f32 %v3195, %v3196
  %v3198 = vsel %vm115, %v3084, 0.0
  %v3199 = vadd.f32 %v3197, %v3198
  %v3200 = vsel %vm115, %v3085, 0.0
  %v3201 = vadd.f32 %v3199, %v3200
  %v3202 = vsel %vm115, %v3086, 0.0
  %v3203 = vadd.f32 %v3201, %v3202
  %v3204 = vsel %vm115, %v3087, 0.0
  %v3205 = vadd.f32 %v3203, %v3204
  %v3206 = vsel %vm115, %v3088, 0.0
  %v3207 = vadd.f32 %v3205, %v3206
  %v3208 = vsel %vm115, %v3089, 0.0
  %v3209 = vadd.f32 %v3207, %v3208
  %v3210 = vsel %vm115, %v3090, 0.0
  %v3211 = vadd.f32 %v3209, %v3210
  %v3212 = vsel %vm115, %v3091, 0.0
  %v3213 = vadd.f32 %v3211, %v3212
  %v3214 = vsel %vm115, %v3092, 0.0
  %v3215 = vadd.f32 %v3213, %v3214
  %v3216 = vsel %vm115, %v3093, 0.0
  %v3217 = vadd.f32 %v3215, %v3216
  %v3218 = vsel %vm115, %v3094, 0.0
  %v3219 = vadd.f32 %v3217, %v3218
  %v3220 = vsel %vm115, %v3095, 0.0
  %v3221 = vadd.f32 %v3219, %v3220
  %v3222 = vsel %vm115, %v3096, 0.0
  %v3223 = vadd.f32 %v3221, %v3222
  %v3224 = vrot.slane %v3223, 4
  %v3225 = vadd.f32 %v3223, %v3224
  %v3226 = vrot.slane %v3225, 2
  %v3227 = vadd.f32 %v3225, %v3226
  %v3228 = vrot.slane %v3227, 1
  %v3229 = vadd.f32 %v3227, %v3228
  %v3230 = vmul.f32 %v3032, 0.001953125
  %v3231 = vmul.f32 %v3229, 0.001953125
  %v3232 = vmul.f32 %v3230, %v3230
  %v3233 = vsub.f32 %v3231, %v3232
  %v3234 = vmax.f32 %v3233, 0.0
  %v3235 = vadd.f32 %v3234, 1e-05
  %v3236 = vrsqrt.pop %v3235
  %v3237 = vmul.f32 %v3236, %v3235
  %v3238 = vmul.f32 %v3237, %v3236
  %v3239 = vmul.f32 0.5, %v3238
  %v3240 = vsub.f32 1.5, %v3239
  %v3241 = vmul.f32 %v3236, %v3240
  %vm3242 = vweird.f32 %v3235
  %vm3243 = vweird.f32 %v3236
  %vm3244 = vmor %vm3242, %vm3243
  %v3245 = vsel %vm3244, %v3236, %v3241
  %v3246 = vmul.f32 %v2898, %v3245
  %v3247 = vmul.f32 %v3230, %v3246
  %v3248 = vsub.f32 %v2899, %v3247
  %v3250 = vperm.slane %v3246, 0
  %v3252 = vmul.f32 %v2707, %v3250
  %v3253 = vmul.f32 %v2710, %v3250
  %v3254 = vmul.f32 %v2713, %v3250
  %v3255 = vmul.f32 %v2716, %v3250
  %v3256 = vmul.f32 %v2719, %v3250
  %v3257 = vmul.f32 %v2722, %v3250
  %v3258 = vmul.f32 %v2725, %v3250
  %v3259 = vmul.f32 %v2728, %v3250
  %v3260 = vmul.f32 %v2731, %v3250
  %v3261 = vmul.f32 %v2734, %v3250
  %v3262 = vmul.f32 %v2737, %v3250
  %v3263 = vmul.f32 %v2740, %v3250
  %v3264 = vmul.f32 %v2743, %v3250
  %v3265 = vmul.f32 %v2746, %v3250
  %v3266 = vmul.f32 %v2749, %v3250
  %v3267 = vmul.f32 %v2752, %v3250
  %v3268 = vmul.f32 %v2755, %v3250
  %v3269 = vmul.f32 %v2758, %v3250
  %v3270 = vmul.f32 %v2761, %v3250
  %v3271 = vmul.f32 %v2764, %v3250
  %v3272 = vmul.f32 %v2767, %v3250
  %v3273 = vmul.f32 %v2770, %v3250
  %v3274 = vmul.f32 %v2773, %v3250
  %v3275 = vmul.f32 %v2776, %v3250
  %v3276 = vmul.f32 %v2779, %v3250
  %v3277 = vmul.f32 %v2782, %v3250
  %v3278 = vmul.f32 %v2785, %v3250
  %v3279 = vmul.f32 %v2788, %v3250
  %v3280 = vmul.f32 %v2791, %v3250
  %v3281 = vmul.f32 %v2794, %v3250
  %v3282 = vmul.f32 %v2797, %v3250
  %v3283 = vmul.f32 %v2800, %v3250
  %v3284 = vmul.f32 %v2803, %v3250
  %v3285 = vmul.f32 %v2806, %v3250
  %v3286 = vmul.f32 %v2809, %v3250
  %v3287 = vmul.f32 %v2812, %v3250
  %v3288 = vmul.f32 %v2815, %v3250
  %v3289 = vmul.f32 %v2818, %v3250
  %v3290 = vmul.f32 %v2821, %v3250
  %v3291 = vmul.f32 %v2824, %v3250
  %v3292 = vmul.f32 %v2827, %v3250
  %v3293 = vmul.f32 %v2830, %v3250
  %v3294 = vmul.f32 %v2833, %v3250
  %v3295 = vmul.f32 %v2836, %v3250
  %v3296 = vmul.f32 %v2839, %v3250
  %v3297 = vmul.f32 %v2842, %v3250
  %v3298 = vmul.f32 %v2845, %v3250
  %v3299 = vmul.f32 %v2848, %v3250
  %v3300 = vmul.f32 %v2851, %v3250
  %v3301 = vmul.f32 %v2854, %v3250
  %v3302 = vmul.f32 %v2857, %v3250
  %v3303 = vmul.f32 %v2860, %v3250
  %v3304 = vmul.f32 %v2863, %v3250
  %v3305 = vmul.f32 %v2866, %v3250
  %v3306 = vmul.f32 %v2869, %v3250
  %v3307 = vmul.f32 %v2872, %v3250
  %v3308 = vmul.f32 %v2875, %v3250
  %v3309 = vmul.f32 %v2878, %v3250
  %v3310 = vmul.f32 %v2881, %v3250
  %v3311 = vmul.f32 %v2884, %v3250
  %v3312 = vmul.f32 %v2887, %v3250
  %v3313 = vmul.f32 %v2890, %v3250
  %v3314 = vmul.f32 %v2893, %v3250
  %v3315 = vmul.f32 %v2896, %v3250
  %v3317 = vperm.slane %v3248, 0
  %v3319 = vadd.f32 %v3252, %v3317
  %v3320 = vadd.f32 %v3253, %v3317
  %v3321 = vadd.f32 %v3254, %v3317
  %v3322 = vadd.f32 %v3255, %v3317
  %v3323 = vadd.f32 %v3256, %v3317
  %v3324 = vadd.f32 %v3257, %v3317
  %v3325 = vadd.f32 %v3258, %v3317
  %v3326 = vadd.f32 %v3259, %v3317
  %v3327 = vadd.f32 %v3260, %v3317
  %v3328 = vadd.f32 %v3261, %v3317
  %v3329 = vadd.f32 %v3262, %v3317
  %v3330 = vadd.f32 %v3263, %v3317
  %v3331 = vadd.f32 %v3264, %v3317
  %v3332 = vadd.f32 %v3265, %v3317
  %v3333 = vadd.f32 %v3266, %v3317
  %v3334 = vadd.f32 %v3267, %v3317
  %v3335 = vadd.f32 %v3268, %v3317
  %v3336 = vadd.f32 %v3269, %v3317
  %v3337 = vadd.f32 %v3270, %v3317
  %v3338 = vadd.f32 %v3271, %v3317
  %v3339 = vadd.f32 %v3272, %v3317
  %v3340 = vadd.f32 %v3273, %v3317
  %v3341 = vadd.f32 %v3274, %v3317
  %v3342 = vadd.f32 %v3275, %v3317
  %v3343 = vadd.f32 %v3276, %v3317
  %v3344 = vadd.f32 %v3277, %v3317
  %v3345 = vadd.f32 %v3278, %v3317
  %v3346 = vadd.f32 %v3279, %v3317
  %v3347 = vadd.f32 %v3280, %v3317
  %v3348 = vadd.f32 %v3281, %v3317
  %v3349 = vadd.f32 %v3282, %v3317
  %v3350 = vadd.f32 %v3283, %v3317
  %v3351 = vadd.f32 %v3284, %v3317
  %v3352 = vadd.f32 %v3285, %v3317
  %v3353 = vadd.f32 %v3286, %v3317
  %v3354 = vadd.f32 %v3287, %v3317
  %v3355 = vadd.f32 %v3288, %v3317
  %v3356 = vadd.f32 %v3289, %v3317
  %v3357 = vadd.f32 %v3290, %v3317
  %v3358 = vadd.f32 %v3291, %v3317
  %v3359 = vadd.f32 %v3292, %v3317
  %v3360 = vadd.f32 %v3293, %v3317
  %v3361 = vadd.f32 %v3294, %v3317
  %v3362 = vadd.f32 %v3295, %v3317
  %v3363 = vadd.f32 %v3296, %v3317
  %v3364 = vadd.f32 %v3297, %v3317
  %v3365 = vadd.f32 %v3298, %v3317
  %v3366 = vadd.f32 %v3299, %v3317
  %v3367 = vadd.f32 %v3300, %v3317
  %v3368 = vadd.f32 %v3301, %v3317
  %v3369 = vadd.f32 %v3302, %v3317
  %v3370 = vadd.f32 %v3303, %v3317
  %v3371 = vadd.f32 %v3304, %v3317
  %v3372 = vadd.f32 %v3305, %v3317
  %v3373 = vadd.f32 %v3306, %v3317
  %v3374 = vadd.f32 %v3307, %v3317
  %v3375 = vadd.f32 %v3308, %v3317
  %v3376 = vadd.f32 %v3309, %v3317
  %v3377 = vadd.f32 %v3310, %v3317
  %v3378 = vadd.f32 %v3311, %v3317
  %v3379 = vadd.f32 %v3312, %v3317
  %v3380 = vadd.f32 %v3313, %v3317
  %v3381 = vadd.f32 %v3314, %v3317
  %v3382 = vadd.f32 %v3315, %v3317
  %v3383 = vmax.f32 %v3319, 0.0
  %v3384 = vmax.f32 %v3320, 0.0
  %v3385 = vmax.f32 %v3321, 0.0
  %v3386 = vmax.f32 %v3322, 0.0
  %v3387 = vmax.f32 %v3323, 0.0
  %v3388 = vmax.f32 %v3324, 0.0
  %v3389 = vmax.f32 %v3325, 0.0
  %v3390 = vmax.f32 %v3326, 0.0
  %v3391 = vmax.f32 %v3327, 0.0
  %v3392 = vmax.f32 %v3328, 0.0
  %v3393 = vmax.f32 %v3329, 0.0
  %v3394 = vmax.f32 %v3330, 0.0
  %v3395 = vmax.f32 %v3331, 0.0
  %v3396 = vmax.f32 %v3332, 0.0
  %v3397 = vmax.f32 %v3333, 0.0
  %v3398 = vmax.f32 %v3334, 0.0
  %v3399 = vmax.f32 %v3335, 0.0
  %v3400 = vmax.f32 %v3336, 0.0
  %v3401 = vmax.f32 %v3337, 0.0
  %v3402 = vmax.f32 %v3338, 0.0
  %v3403 = vmax.f32 %v3339, 0.0
  %v3404 = vmax.f32 %v3340, 0.0
  %v3405 = vmax.f32 %v3341, 0.0
  %v3406 = vmax.f32 %v3342, 0.0
  %v3407 = vmax.f32 %v3343, 0.0
  %v3408 = vmax.f32 %v3344, 0.0
  %v3409 = vmax.f32 %v3345, 0.0
  %v3410 = vmax.f32 %v3346, 0.0
  %v3411 = vmax.f32 %v3347, 0.0
  %v3412 = vmax.f32 %v3348, 0.0
  %v3413 = vmax.f32 %v3349, 0.0
  %v3414 = vmax.f32 %v3350, 0.0
  %v3415 = vmax.f32 %v3351, 0.0
  %v3416 = vmax.f32 %v3352, 0.0
  %v3417 = vmax.f32 %v3353, 0.0
  %v3418 = vmax.f32 %v3354, 0.0
  %v3419 = vmax.f32 %v3355, 0.0
  %v3420 = vmax.f32 %v3356, 0.0
  %v3421 = vmax.f32 %v3357, 0.0
  %v3422 = vmax.f32 %v3358, 0.0
  %v3423 = vmax.f32 %v3359, 0.0
  %v3424 = vmax.f32 %v3360, 0.0
  %v3425 = vmax.f32 %v3361, 0.0
  %v3426 = vmax.f32 %v3362, 0.0
  %v3427 = vmax.f32 %v3363, 0.0
  %v3428 = vmax.f32 %v3364, 0.0
  %v3429 = vmax.f32 %v3365, 0.0
  %v3430 = vmax.f32 %v3366, 0.0
  %v3431 = vmax.f32 %v3367, 0.0
  %v3432 = vmax.f32 %v3368, 0.0
  %v3433 = vmax.f32 %v3369, 0.0
  %v3434 = vmax.f32 %v3370, 0.0
  %v3435 = vmax.f32 %v3371, 0.0
  %v3436 = vmax.f32 %v3372, 0.0
  %v3437 = vmax.f32 %v3373, 0.0
  %v3438 = vmax.f32 %v3374, 0.0
  %v3439 = vmax.f32 %v3375, 0.0
  %v3440 = vmax.f32 %v3376, 0.0
  %v3441 = vmax.f32 %v3377, 0.0
  %v3442 = vmax.f32 %v3378, 0.0
  %v3443 = vmax.f32 %v3379, 0.0
  %v3444 = vmax.f32 %v3380, 0.0
  %v3445 = vmax.f32 %v3381, 0.0
  %v3446 = vmax.f32 %v3382, 0.0
  %3447 = vst.msk [vmem:[%s12] sm:$0xff] %vm115, %v3383
  %3448 = vst.msk [vmem:[%s12 + $0x8] sm:$0xff] %vm115, %v3384
  %3449 = vst.msk [vmem:[%s12 + $0x10] sm:$0xff] %vm115, %v3385
  %3450 = vst.msk [vmem:[%s12 + $0x18] sm:$0xff] %vm115, %v3386
  %3451 = vst.msk [vmem:[%s12 + $0x20] sm:$0xff] %vm115, %v3387
  %3452 = vst.msk [vmem:[%s12 + $0x28] sm:$0xff] %vm115, %v3388
  %3453 = vst.msk [vmem:[%s12 + $0x30] sm:$0xff] %vm115, %v3389
  %3454 = vst.msk [vmem:[%s12 + $0x38] sm:$0xff] %vm115, %v3390
  %3455 = vst.msk [vmem:[%s12 + $0x40] sm:$0xff] %vm115, %v3391
  %3456 = vst.msk [vmem:[%s12 + $0x48] sm:$0xff] %vm115, %v3392
  %3457 = vst.msk [vmem:[%s12 + $0x50] sm:$0xff] %vm115, %v3393
  %3458 = vst.msk [vmem:[%s12 + $0x58] sm:$0xff] %vm115, %v3394
  %3459 = vst.msk [vmem:[%s12 + $0x60] sm:$0xff] %vm115, %v3395
  %3460 = vst.msk [vmem:[%s12 + $0x68] sm:$0xff] %vm115, %v3396
  %3461 = vst.msk [vmem:[%s12 + $0x70] sm:$0xff] %vm115, %v3397
  %3462 = vst.msk [vmem:[%s12 + $0x78] sm:$0xff] %vm115, %v3398
  %3463 = vst.msk [vmem:[%s12 + $0x80] sm:$0xff] %vm115, %v3399
  %3464 = vst.msk [vmem:[%s12 + $0x88] sm:$0xff] %vm115, %v3400
  %3465 = vst.msk [vmem:[%s12 + $0x90] sm:$0xff] %vm115, %v3401
  %3466 = vst.msk [vmem:[%s12 + $0x98] sm:$0xff] %vm115, %v3402
  %3467 = vst.msk [vmem:[%s12 + $0xa0] sm:$0xff] %vm115, %v3403
  %3468 = vst.msk [vmem:[%s12 + $0xa8] sm:$0xff] %vm115, %v3404
  %3469 = vst.msk [vmem:[%s12 + $0xb0] sm:$0xff] %vm115, %v3405
  %3470 = vst.msk [vmem:[%s12 + $0xb8] sm:$0xff] %vm115, %v3406
  %3471 = vst.msk [vmem:[%s12 + $0xc0] sm:$0xff] %vm115, %v3407
  %3472 = vst.msk [vmem:[%s12 + $0xc8] sm:$0xff] %vm115, %v3408
  %3473 = vst.msk [vmem:[%s12 + $0xd0] sm:$0xff] %vm115, %v3409
  %3474 = vst.msk [vmem:[%s12 + $0xd8] sm:$0xff] %vm115, %v3410
  %3475 = vst.msk [vmem:[%s12 + $0xe0] sm:$0xff] %vm115, %v3411
  %3476 = vst.msk [vmem:[%s12 + $0xe8] sm:$0xff] %vm115, %v3412
  %3477 = vst.msk [vmem:[%s12 + $0xf0] sm:$0xff] %vm115, %v3413
  %3478 = vst.msk [vmem:[%s12 + $0xf8] sm:$0xff] %vm115, %v3414
  %3479 = vst.msk [vmem:[%s12 + $0x100] sm:$0xff] %vm115, %v3415
  %3480 = vst.msk [vmem:[%s12 + $0x108] sm:$0xff] %vm115, %v3416
  %3481 = vst.msk [vmem:[%s12 + $0x110] sm:$0xff] %vm115, %v3417
  %3482 = vst.msk [vmem:[%s12 + $0x118] sm:$0xff] %vm115, %v3418
  %3483 = vst.msk [vmem:[%s12 + $0x120] sm:$0xff] %vm115, %v3419
  %3484 = vst.msk [vmem:[%s12 + $0x128] sm:$0xff] %vm115, %v3420
  %3485 = vst.msk [vmem:[%s12 + $0x130] sm:$0xff] %vm115, %v3421
  %3486 = vst.msk [vmem:[%s12 + $0x138] sm:$0xff] %vm115, %v3422
  %3487 = vst.msk [vmem:[%s12 + $0x140] sm:$0xff] %vm115, %v3423
  %3488 = vst.msk [vmem:[%s12 + $0x148] sm:$0xff] %vm115, %v3424
  %3489 = vst.msk [vmem:[%s12 + $0x150] sm:$0xff] %vm115, %v3425
  %3490 = vst.msk [vmem:[%s12 + $0x158] sm:$0xff] %vm115, %v3426
  %3491 = vst.msk [vmem:[%s12 + $0x160] sm:$0xff] %vm115, %v3427
  %3492 = vst.msk [vmem:[%s12 + $0x168] sm:$0xff] %vm115, %v3428
  %3493 = vst.msk [vmem:[%s12 + $0x170] sm:$0xff] %vm115, %v3429
  %3494 = vst.msk [vmem:[%s12 + $0x178] sm:$0xff] %vm115, %v3430
  %3495 = vst.msk [vmem:[%s12 + $0x180] sm:$0xff] %vm115, %v3431
  %3496 = vst.msk [vmem:[%s12 + $0x188] sm:$0xff] %vm115, %v3432
  %3497 = vst.msk [vmem:[%s12 + $0x190] sm:$0xff] %vm115, %v3433
  %3498 = vst.msk [vmem:[%s12 + $0x198] sm:$0xff] %vm115, %v3434
  %3499 = vst.msk [vmem:[%s12 + $0x1a0] sm:$0xff] %vm115, %v3435
  %3500 = vst.msk [vmem:[%s12 + $0x1a8] sm:$0xff] %vm115, %v3436
  %3501 = vst.msk [vmem:[%s12 + $0x1b0] sm:$0xff] %vm115, %v3437
  %3502 = vst.msk [vmem:[%s12 + $0x1b8] sm:$0xff] %vm115, %v3438
  %3503 = vst.msk [vmem:[%s12 + $0x1c0] sm:$0xff] %vm115, %v3439
  %3504 = vst.msk [vmem:[%s12 + $0x1c8] sm:$0xff] %vm115, %v3440
  %3505 = vst.msk [vmem:[%s12 + $0x1d0] sm:$0xff] %vm115, %v3441
  %3506 = vst.msk [vmem:[%s12 + $0x1d8] sm:$0xff] %vm115, %v3442
  %3507 = vst.msk [vmem:[%s12 + $0x1e0] sm:$0xff] %vm115, %v3443
  %3508 = vst.msk [vmem:[%s12 + $0x1e8] sm:$0xff] %vm115, %v3444
  %3509 = vst.msk [vmem:[%s12 + $0x1f0] sm:$0xff] %vm115, %v3445
  %3510 = vst.msk [vmem:[%s12 + $0x1f8] sm:$0xff] %vm115, %v3446
  // Predicated region
  $region50: #{autoencoder_forward.1} parent=0 // pred_check
    _
  $region51: #{autoencoder_forward.1} parent=0 // pred_check_branch
    %3512 = sbr.rel (0) target = $region53
  $region52: #{autoencoder_forward.1} parent=0 // pred_region
    _
  $region53: #{autoencoder_forward.1} parent=0 // pred_fallthru
    _
  // Predicated region
  $region54: #{autoencoder_forward.1} parent=0 // pred_check
    _
  $region55: #{autoencoder_forward.1} parent=0 // pred_check_branch
    %3514 = sbr.rel (0) target = $region57
  $region56: #{autoencoder_forward.1} parent=0 // pred_region
    _
  $region57: #{autoencoder_forward.1} parent=0 // pred_fallthru
    _
  // Predicated region
  $region58: #{autoencoder_forward.1} parent=0 // pred_check
    _
  $region59: #{autoencoder_forward.1} parent=0 // pred_check_branch
    %3516 = sbr.rel (0) target = $region61
  $region60: #{autoencoder_forward.1} parent=0 // pred_region
    _
  $region61: #{autoencoder_forward.1} parent=0 // pred_fallthru
    _
  // Predicated region
  $region62: #{autoencoder_forward.1} parent=0 // pred_check
    _
  $region63: #{autoencoder_forward.1} parent=0 // pred_check_branch
    %3518 = sbr.rel (0) target = $region65
  $region64: #{autoencoder_forward.1} parent=0 // pred_region
    _
  $region65: #{autoencoder_forward.1} parent=0 // pred_fallthru
    _

</llo_original>
